<compile_context>
chip_gen: v7x
topology: tpu7x:2x2x1
jax: 0.10.0
libtpu: 0.0.40
codegen_flags: <defaults>
</compile_context>

<pallas_src>
import functools

import jax
import jax.numpy as jnp
from jax.experimental import pallas as pl
from jax.experimental.pallas import tpu as pltpu

NEG_SLOPE = 0.2        # GATv2Conv default negative_slope
MASK_NEG = -1e30       # additive mask for non-edges (rows always have a self loop)


def _gatv2_layer(x, w_cat, att_bd, sel_t, bias, neg_mask, *, heads, out_ch):
    """One dense GATv2Conv layer (all heads at once) + bias + ReLU, on VMEM values.

    x:        [N, F_in]
    w_cat:    [F_in, 2*H*C]  columns = [lin_l | lin_r]
    att_bd:   [H*C, H]       block-diagonal attention vectors, att_bd[h*C+c, h] = att[h, c]
    sel_t:    [H, H*C]       ones block-diagonal selector (head -> H*C lanes broadcast)
    bias:     [1, H*C]       GATv2Conv output bias
    neg_mask: [N, N, 1]      0 on edges (incl. self loops), -1e30 elsewhere
    """
    n = x.shape[0]
    hc = heads * out_ch

    # One wide MXU matmul covers both lin_l (source / message) and lin_r (target).
    xlr = jnp.dot(x, w_cat, preferred_element_type=jnp.float32)      # [N, 2*H*C]
    xl = xlr[:, :hc]                                                  # lin_l(x_j)
    xr = xlr[:, hc:]                                                  # lin_r(x_i)

    # GATv2 pre-score, lane-dense over all heads: leaky_relu(x_r[i] + x_l[j]).
    z = xr[:, None, :] + xl[None, :, :]                               # [N_i, N_j, H*C]
    z = jnp.where(z > 0.0, z, NEG_SLOPE * z)                          # leaky ReLU

    # Per-head (att . z) reduction folded into one MXU matmul with the block-diagonal
    # attention matrix -> no per-head lane slices / XLU reductions.
    e = jnp.dot(z.reshape(n * n, hc), att_bd,
                preferred_element_type=jnp.float32).reshape(n, n, heads)
    e = e + neg_mask                                                  # mask non-edges

    # Masked softmax over source nodes j, all heads at once (self loop => finite max).
    m = jnp.max(e, axis=1, keepdims=True)                             # [N, 1, H]
    p = jnp.exp(e - m)                                                # 0 for non-edges
    l = jnp.sum(p, axis=1, keepdims=True)                             # [N, 1, H]

    # Broadcast the per-head attention weights back to the H*C lane width with the
    # ones selector (tiny MXU matmul), then aggregate the lin_l messages.
    p_wide = jnp.dot(p.reshape(n * n, heads), sel_t,
                     preferred_element_type=jnp.float32).reshape(n, n, hc)
    agg = jnp.sum(p_wide * xl[None, :, :], axis=1)                    # [N, H*C]

    # Normalize after aggregation: N*H reciprocals instead of N*N*H divides on alpha.
    inv = 1.0 / l.reshape(n, heads)                                   # [N, H]
    inv_wide = jnp.dot(inv, sel_t, preferred_element_type=jnp.float32)  # [N, H*C]

    return jnp.maximum(agg * inv_wide + bias, 0.0)                    # bias + ReLU


def _gat_fused_kernel(x_ref, adj_ref,
                      w0_ref, a0_ref, s0_ref, b0_ref,
                      w1_ref, a1_ref, s1_ref, b1_ref,
                      w2_ref, a2_ref, s2_ref, b2_ref,
                      lw_ref, lb_ref,
                      out_ref, *, cfgs):
    """Fused forward pass: 3 GATv2 layers + Linear head, all resident in VMEM."""
    adj = adj_ref[...]
    # Additive non-edge mask shared by all three layers -> build it once.
    neg_mask = jnp.where(adj[:, :, None] > 0.0, 0.0, MASK_NEG)        # [N, N, 1]

    h = x_ref[...]
    layers = ((w0_ref, a0_ref, s0_ref, b0_ref),
              (w1_ref, a1_ref, s1_ref, b1_ref),
              (w2_ref, a2_ref, s2_ref, b2_ref))
    for (w_ref, a_ref, s_ref, b_ref), (heads, out_ch) in zip(layers, cfgs):
        h = _gatv2_layer(h, w_ref[...], a_ref[...], s_ref[...], b_ref[...],
                         neg_mask, heads=heads, out_ch=out_ch)

    out_ref[...] = (jnp.dot(h, lw_ref[...], preferred_element_type=jnp.float32)
                    + lb_ref[...])


def _gat_forward_impl(params, x, adj):
    n = x.shape[0]
    # Static layer configs derived from weight SHAPES (concrete under jit).
    cfgs = tuple(p["att"].shape for p in params["gat"])   # ((H, C), ...)

    inputs = [x, adj]
    for p in params["gat"]:
        att = p["att"]                                     # [H, C]
        heads, out_ch = att.shape
        # Ones block-diagonal selector: sel_t[h, h*C + c] = 1.
        sel_t = jnp.repeat(jnp.eye(heads, dtype=jnp.float32), out_ch, axis=1)  # [H, HC]
        # Block-diagonal attention matrix: att_bd[h*C + c, h] = att[h, c].
        att_bd = sel_t.T * att.reshape(-1)[:, None]                             # [HC, H]
        inputs += [p["w"], att_bd, sel_t, p["bias"]]
    inputs += [params["lin_w"], params["lin_b"]]

    kernel = functools.partial(_gat_fused_kernel, cfgs=cfgs)
    return pl.pallas_call(
        kernel,
        out_shape=jax.ShapeDtypeStruct((n, 1), jnp.float32),
        in_specs=[pl.BlockSpec(memory_space=pltpu.MemorySpace.VMEM)] * len(inputs),
        out_specs=pl.BlockSpec(memory_space=pltpu.MemorySpace.VMEM),
        compiler_params=pltpu.CompilerParams(vmem_limit_bytes=32 * 1024 * 1024),
    )(*inputs)


gat_forward = jax.jit(_gat_forward_impl)


def _glorot(key, shape):
    fan_in, fan_out = shape
    lim = (6.0 / (fan_in + fan_out)) ** 0.5
    return jax.random.uniform(key, shape, jnp.float32, -lim, lim)


def init_params(key, num_node_features, heads, width):
    f = num_node_features
    layer_cfgs = [
        dict(f_in=f,             out_ch=f,     heads=heads),   # GATv2Conv(F, F, H)
        dict(f_in=f * heads,     out_ch=4 * f, heads=heads),   # GATv2Conv(F*H, 4F, H)
        dict(f_in=4 * f * heads, out_ch=width, heads=1),       # GATv2Conv(4F*H, W, 1)
    ]
    params = {"gat": []}
    for cfg in layer_cfgs:
        key, k1, k2, k3 = jax.random.split(key, 4)
        h, c, f_in = cfg["heads"], cfg["out_ch"], cfg["f_in"]
        wl = _glorot(k1, (f_in, h * c))
        wr = _glorot(k2, (f_in, h * c))
        params["gat"].append(dict(
            w=jnp.concatenate([wl, wr], axis=1),   # [f_in, 2*h*c] = [lin_l | lin_r]
            att=_glorot(k3, (h, c)),               # [H, C]
            bias=jnp.zeros((1, h * c), jnp.float32),
        ))
    key, k1 = jax.random.split(key)
    params["lin_w"] = _glorot(k1, (width, 1))
    params["lin_b"] = jnp.zeros((1, 1), jnp.float32)
    return params


def build_adj(edge_index, num_nodes):
    """Dense adjacency: adj[dst, src] = 1, plus self loops (glue, plain JAX)."""
    src, dst = edge_index[0], edge_index[1]
    adj = jnp.zeros((num_nodes, num_nodes), jnp.float32).at[dst, src].set(1.0)
    return jnp.maximum(adj, jnp.eye(num_nodes, dtype=jnp.float32))


if __name__ == "__main__":
    # Hyperparameters as the Optuna trial would pick them (representative values).
    NUM_NODE_FEATURES = 8
    HEADS = 4
    WIDTH = 128
    N_NODES = 16
    N_EDGES = 40

    key = jax.random.PRNGKey(0)
    k_x, k_src, k_dst, k_params = jax.random.split(key, 4)

    x = jax.random.normal(k_x, (N_NODES, NUM_NODE_FEATURES), jnp.float32)
    edge_index = jnp.stack([
        jax.random.randint(k_src, (N_EDGES,), 0, N_NODES),
        jax.random.randint(k_dst, (N_EDGES,), 0, N_NODES),
    ])  # [2, E]

    params = init_params(k_params, NUM_NODE_FEATURES, HEADS, WIDTH)
    adj = build_adj(edge_index, N_NODES)

    out = gat_forward(params, x, adj)
    jax.block_until_ready(out)
    assert out.shape == (N_NODES, 1)
    assert bool(jnp.all(jnp.isfinite(out)))
    print("KERNEL_OK")
</pallas_src>

<mosaic_0001>
module attributes {stable_mosaic.version = 11 : i64} {
  func.func @_gat_fused_kernel(%arg0: memref<16x8xf32, #tpu.memory_space<vmem>>, %arg1: memref<16x16xf32, #tpu.memory_space<vmem>>, %arg2: memref<8x64xf32, #tpu.memory_space<vmem>>, %arg3: memref<32x4xf32, #tpu.memory_space<vmem>>, %arg4: memref<4x32xf32, #tpu.memory_space<vmem>>, %arg5: memref<1x32xf32, #tpu.memory_space<vmem>>, %arg6: memref<32x256xf32, #tpu.memory_space<vmem>>, %arg7: memref<128x4xf32, #tpu.memory_space<vmem>>, %arg8: memref<4x128xf32, #tpu.memory_space<vmem>>, %arg9: memref<1x128xf32, #tpu.memory_space<vmem>>, %arg10: memref<128x256xf32, #tpu.memory_space<vmem>>, %arg11: memref<128x1xf32, #tpu.memory_space<vmem>>, %arg12: memref<1x128xf32, #tpu.memory_space<vmem>>, %arg13: memref<1x128xf32, #tpu.memory_space<vmem>>, %arg14: memref<128x1xf32, #tpu.memory_space<vmem>>, %arg15: memref<1x1xf32, #tpu.memory_space<vmem>>, %arg16: memref<16x1xf32, #tpu.memory_space<vmem>>) attributes {dimension_semantics = [], scalar_prefetch = 0 : i64, scratch_operands = 0 : i64, tpu.core_type = #tpu.core_type<tc>} {
    %c0 = arith.constant 0 : index
    %c0_0 = arith.constant 0 : index
    %0 = vector.load %arg1[%c0, %c0_0] : memref<16x16xf32, #tpu.memory_space<vmem>>, vector<16x16xf32>
    %1 = vector.shape_cast %0 : vector<16x16xf32> to vector<16x16x1xf32>
    %cst = arith.constant 0.000000e+00 : f32
    %2 = vector.broadcast %cst : f32 to vector<16x16x1xf32>
    %3 = arith.cmpf ogt, %1, %2 : vector<16x16x1xf32>
    %cst_1 = arith.constant 0.000000e+00 : f32
    %cst_2 = arith.constant -1.000000e+30 : f32
    %4 = vector.broadcast %cst_1 : f32 to vector<16x16x1xf32>
    %5 = vector.broadcast %cst_2 : f32 to vector<16x16x1xf32>
    %6 = arith.select %3, %4, %5 : vector<16x16x1xi1>, vector<16x16x1xf32>
    %c0_3 = arith.constant 0 : index
    %c0_4 = arith.constant 0 : index
    %7 = vector.load %arg0[%c0_3, %c0_4] : memref<16x8xf32, #tpu.memory_space<vmem>>, vector<16x8xf32>
    %c0_5 = arith.constant 0 : index
    %c0_6 = arith.constant 0 : index
    %8 = vector.load %arg2[%c0_5, %c0_6] : memref<8x64xf32, #tpu.memory_space<vmem>>, vector<8x64xf32>
    %c0_7 = arith.constant 0 : index
    %c0_8 = arith.constant 0 : index
    %9 = vector.load %arg3[%c0_7, %c0_8] : memref<32x4xf32, #tpu.memory_space<vmem>>, vector<32x4xf32>
    %c0_9 = arith.constant 0 : index
    %c0_10 = arith.constant 0 : index
    %10 = vector.load %arg4[%c0_9, %c0_10] : memref<4x32xf32, #tpu.memory_space<vmem>>, vector<4x32xf32>
    %c0_11 = arith.constant 0 : index
    %c0_12 = arith.constant 0 : index
    %11 = vector.load %arg5[%c0_11, %c0_12] : memref<1x32xf32, #tpu.memory_space<vmem>>, vector<1x32xf32>
    %cst_13 = arith.constant dense<0.000000e+00> : vector<16x64xf32>
    %12 = tpu.matmul %7, %8, %cst_13 {dimension_numbers = #tpu.dot_dimension_numbers<[1], [0], [0], [1], [0, 0, 1, 1], [], []>} : vector<16x8xf32>, vector<8x64xf32>, vector<16x64xf32> -> vector<16x64xf32>
    %13 = vector.extract_strided_slice %12 {offsets = [0, 0], sizes = [16, 32], strides = [1, 1]} : vector<16x64xf32> to vector<16x32xf32>
    %14 = vector.extract_strided_slice %12 {offsets = [0, 32], sizes = [16, 32], strides = [1, 1]} : vector<16x64xf32> to vector<16x32xf32>
    %15 = vector.shape_cast %14 : vector<16x32xf32> to vector<16x1x32xf32>
    %16 = vector.shape_cast %13 : vector<16x32xf32> to vector<1x16x32xf32>
    %17 = vector.broadcast %15 : vector<16x1x32xf32> to vector<16x16x32xf32>
    %18 = vector.broadcast %16 : vector<1x16x32xf32> to vector<16x16x32xf32>
    %19 = arith.addf %17, %18 : vector<16x16x32xf32>
    %cst_14 = arith.constant 0.000000e+00 : f32
    %20 = vector.broadcast %cst_14 : f32 to vector<16x16x32xf32>
    %21 = arith.cmpf ogt, %19, %20 : vector<16x16x32xf32>
    %cst_15 = arith.constant 2.000000e-01 : f32
    %22 = vector.broadcast %cst_15 : f32 to vector<16x16x32xf32>
    %23 = arith.mulf %22, %19 : vector<16x16x32xf32>
    %24 = arith.select %21, %19, %23 : vector<16x16x32xi1>, vector<16x16x32xf32>
    %25 = vector.shape_cast %24 : vector<16x16x32xf32> to vector<256x32xf32>
    %cst_16 = arith.constant dense<0.000000e+00> : vector<256x4xf32>
    %26 = tpu.matmul %25, %9, %cst_16 {dimension_numbers = #tpu.dot_dimension_numbers<[1], [0], [0], [1], [0, 0, 1, 1], [], []>} : vector<256x32xf32>, vector<32x4xf32>, vector<256x4xf32> -> vector<256x4xf32>
    %27 = vector.shape_cast %26 : vector<256x4xf32> to vector<16x16x4xf32>
    %28 = vector.broadcast %6 : vector<16x16x1xf32> to vector<16x16x4xf32>
    %29 = arith.addf %27, %28 : vector<16x16x4xf32>
    %cst_17 = arith.constant dense<0xFF800000> : vector<16x4xf32>
    %30 = vector.multi_reduction <maximumf>, %29, %cst_17 [1] : vector<16x16x4xf32> to vector<16x4xf32>
    %31 = vector.shape_cast %30 : vector<16x4xf32> to vector<16x1x4xf32>
    %32 = vector.broadcast %31 : vector<16x1x4xf32> to vector<16x16x4xf32>
    %33 = arith.subf %29, %32 : vector<16x16x4xf32>
    %34 = math.exp %33 : vector<16x16x4xf32>
    %cst_18 = arith.constant dense<0.000000e+00> : vector<16x4xf32>
    %35 = vector.multi_reduction <add>, %34, %cst_18 [1] : vector<16x16x4xf32> to vector<16x4xf32>
    %36 = vector.shape_cast %35 : vector<16x4xf32> to vector<16x1x4xf32>
    %37 = vector.shape_cast %34 : vector<16x16x4xf32> to vector<256x4xf32>
    %cst_19 = arith.constant dense<0.000000e+00> : vector<256x32xf32>
    %38 = tpu.matmul %37, %10, %cst_19 {dimension_numbers = #tpu.dot_dimension_numbers<[1], [0], [0], [1], [0, 0, 1, 1], [], []>} : vector<256x4xf32>, vector<4x32xf32>, vector<256x32xf32> -> vector<256x32xf32>
    %39 = vector.shape_cast %38 : vector<256x32xf32> to vector<16x16x32xf32>
    %40 = vector.shape_cast %13 : vector<16x32xf32> to vector<1x16x32xf32>
    %41 = vector.broadcast %40 : vector<1x16x32xf32> to vector<16x16x32xf32>
    %42 = arith.mulf %39, %41 : vector<16x16x32xf32>
    %cst_20 = arith.constant dense<0.000000e+00> : vector<16x32xf32>
    %43 = vector.multi_reduction <add>, %42, %cst_20 [1] : vector<16x16x32xf32> to vector<16x32xf32>
    %44 = vector.shape_cast %36 : vector<16x1x4xf32> to vector<16x4xf32>
    %cst_21 = arith.constant 1.000000e+00 : f32
    %45 = vector.broadcast %cst_21 : f32 to vector<16x4xf32>
    %46 = arith.divf %45, %44 : vector<16x4xf32>
    %cst_22 = arith.constant dense<0.000000e+00> : vector<16x32xf32>
    %47 = tpu.matmul %46, %10, %cst_22 {dimension_numbers = #tpu.dot_dimension_numbers<[1], [0], [0], [1], [0, 0, 1, 1], [], []>} : vector<16x4xf32>, vector<4x32xf32>, vector<16x32xf32> -> vector<16x32xf32>
    %48 = arith.mulf %43, %47 : vector<16x32xf32>
    %49 = vector.broadcast %11 : vector<1x32xf32> to vector<16x32xf32>
    %50 = arith.addf %48, %49 : vector<16x32xf32>
    %cst_23 = arith.constant 0.000000e+00 : f32
    %51 = vector.broadcast %cst_23 : f32 to vector<16x32xf32>
    %52 = arith.maximumf %50, %51 : vector<16x32xf32>
    %c0_24 = arith.constant 0 : index
    %c0_25 = arith.constant 0 : index
    %53 = vector.load %arg6[%c0_24, %c0_25] : memref<32x256xf32, #tpu.memory_space<vmem>>, vector<32x256xf32>
    %c0_26 = arith.constant 0 : index
    %c0_27 = arith.constant 0 : index
    %54 = vector.load %arg7[%c0_26, %c0_27] : memref<128x4xf32, #tpu.memory_space<vmem>>, vector<128x4xf32>
    %c0_28 = arith.constant 0 : index
    %c0_29 = arith.constant 0 : index
    %55 = vector.load %arg8[%c0_28, %c0_29] : memref<4x128xf32, #tpu.memory_space<vmem>>, vector<4x128xf32>
    %c0_30 = arith.constant 0 : index
    %c0_31 = arith.constant 0 : index
    %56 = vector.load %arg9[%c0_30, %c0_31] : memref<1x128xf32, #tpu.memory_space<vmem>>, vector<1x128xf32>
    %cst_32 = arith.constant dense<0.000000e+00> : vector<16x256xf32>
    %57 = tpu.matmul %52, %53, %cst_32 {dimension_numbers = #tpu.dot_dimension_numbers<[1], [0], [0], [1], [0, 0, 1, 1], [], []>} : vector<16x32xf32>, vector<32x256xf32>, vector<16x256xf32> -> vector<16x256xf32>
    %58 = vector.extract_strided_slice %57 {offsets = [0, 0], sizes = [16, 128], strides = [1, 1]} : vector<16x256xf32> to vector<16x128xf32>
    %59 = vector.extract_strided_slice %57 {offsets = [0, 128], sizes = [16, 128], strides = [1, 1]} : vector<16x256xf32> to vector<16x128xf32>
    %60 = vector.shape_cast %59 : vector<16x128xf32> to vector<16x1x128xf32>
    %61 = vector.shape_cast %58 : vector<16x128xf32> to vector<1x16x128xf32>
    %62 = vector.broadcast %60 : vector<16x1x128xf32> to vector<16x16x128xf32>
    %63 = vector.broadcast %61 : vector<1x16x128xf32> to vector<16x16x128xf32>
    %64 = arith.addf %62, %63 : vector<16x16x128xf32>
    %cst_33 = arith.constant 0.000000e+00 : f32
    %65 = vector.broadcast %cst_33 : f32 to vector<16x16x128xf32>
    %66 = arith.cmpf ogt, %64, %65 : vector<16x16x128xf32>
    %cst_34 = arith.constant 2.000000e-01 : f32
    %67 = vector.broadcast %cst_34 : f32 to vector<16x16x128xf32>
    %68 = arith.mulf %67, %64 : vector<16x16x128xf32>
    %69 = arith.select %66, %64, %68 : vector<16x16x128xi1>, vector<16x16x128xf32>
    %70 = vector.shape_cast %69 : vector<16x16x128xf32> to vector<256x128xf32>
    %cst_35 = arith.constant dense<0.000000e+00> : vector<256x4xf32>
    %71 = tpu.matmul %70, %54, %cst_35 {dimension_numbers = #tpu.dot_dimension_numbers<[1], [0], [0], [1], [0, 0, 1, 1], [], []>} : vector<256x128xf32>, vector<128x4xf32>, vector<256x4xf32> -> vector<256x4xf32>
    %72 = vector.shape_cast %71 : vector<256x4xf32> to vector<16x16x4xf32>
    %73 = vector.broadcast %6 : vector<16x16x1xf32> to vector<16x16x4xf32>
    %74 = arith.addf %72, %73 : vector<16x16x4xf32>
    %cst_36 = arith.constant dense<0xFF800000> : vector<16x4xf32>
    %75 = vector.multi_reduction <maximumf>, %74, %cst_36 [1] : vector<16x16x4xf32> to vector<16x4xf32>
    %76 = vector.shape_cast %75 : vector<16x4xf32> to vector<16x1x4xf32>
    %77 = vector.broadcast %76 : vector<16x1x4xf32> to vector<16x16x4xf32>
    %78 = arith.subf %74, %77 : vector<16x16x4xf32>
    %79 = math.exp %78 : vector<16x16x4xf32>
    %cst_37 = arith.constant dense<0.000000e+00> : vector<16x4xf32>
    %80 = vector.multi_reduction <add>, %79, %cst_37 [1] : vector<16x16x4xf32> to vector<16x4xf32>
    %81 = vector.shape_cast %80 : vector<16x4xf32> to vector<16x1x4xf32>
    %82 = vector.shape_cast %79 : vector<16x16x4xf32> to vector<256x4xf32>
    %cst_38 = arith.constant dense<0.000000e+00> : vector<256x128xf32>
    %83 = tpu.matmul %82, %55, %cst_38 {dimension_numbers = #tpu.dot_dimension_numbers<[1], [0], [0], [1], [0, 0, 1, 1], [], []>} : vector<256x4xf32>, vector<4x128xf32>, vector<256x128xf32> -> vector<256x128xf32>
    %84 = vector.shape_cast %83 : vector<256x128xf32> to vector<16x16x128xf32>
    %85 = vector.shape_cast %58 : vector<16x128xf32> to vector<1x16x128xf32>
    %86 = vector.broadcast %85 : vector<1x16x128xf32> to vector<16x16x128xf32>
    %87 = arith.mulf %84, %86 : vector<16x16x128xf32>
    %cst_39 = arith.constant dense<0.000000e+00> : vector<16x128xf32>
    %88 = vector.multi_reduction <add>, %87, %cst_39 [1] : vector<16x16x128xf32> to vector<16x128xf32>
    %89 = vector.shape_cast %81 : vector<16x1x4xf32> to vector<16x4xf32>
    %cst_40 = arith.constant 1.000000e+00 : f32
    %90 = vector.broadcast %cst_40 : f32 to vector<16x4xf32>
    %91 = arith.divf %90, %89 : vector<16x4xf32>
    %cst_41 = arith.constant dense<0.000000e+00> : vector<16x128xf32>
    %92 = tpu.matmul %91, %55, %cst_41 {dimension_numbers = #tpu.dot_dimension_numbers<[1], [0], [0], [1], [0, 0, 1, 1], [], []>} : vector<16x4xf32>, vector<4x128xf32>, vector<16x128xf32> -> vector<16x128xf32>
    %93 = arith.mulf %88, %92 : vector<16x128xf32>
    %94 = vector.broadcast %56 : vector<1x128xf32> to vector<16x128xf32>
    %95 = arith.addf %93, %94 : vector<16x128xf32>
    %cst_42 = arith.constant 0.000000e+00 : f32
    %96 = vector.broadcast %cst_42 : f32 to vector<16x128xf32>
    %97 = arith.maximumf %95, %96 : vector<16x128xf32>
    %c0_43 = arith.constant 0 : index
    %c0_44 = arith.constant 0 : index
    %98 = vector.load %arg10[%c0_43, %c0_44] : memref<128x256xf32, #tpu.memory_space<vmem>>, vector<128x256xf32>
    %c0_45 = arith.constant 0 : index
    %c0_46 = arith.constant 0 : index
    %99 = vector.load %arg11[%c0_45, %c0_46] : memref<128x1xf32, #tpu.memory_space<vmem>>, vector<128x1xf32>
    %c0_47 = arith.constant 0 : index
    %c0_48 = arith.constant 0 : index
    %100 = vector.load %arg12[%c0_47, %c0_48] : memref<1x128xf32, #tpu.memory_space<vmem>>, vector<1x128xf32>
    %c0_49 = arith.constant 0 : index
    %c0_50 = arith.constant 0 : index
    %101 = vector.load %arg13[%c0_49, %c0_50] : memref<1x128xf32, #tpu.memory_space<vmem>>, vector<1x128xf32>
    %cst_51 = arith.constant dense<0.000000e+00> : vector<16x256xf32>
    %102 = tpu.matmul %97, %98, %cst_51 {dimension_numbers = #tpu.dot_dimension_numbers<[1], [0], [0], [1], [0, 0, 1, 1], [], []>} : vector<16x128xf32>, vector<128x256xf32>, vector<16x256xf32> -> vector<16x256xf32>
    %103 = vector.extract_strided_slice %102 {offsets = [0, 0], sizes = [16, 128], strides = [1, 1]} : vector<16x256xf32> to vector<16x128xf32>
    %104 = vector.extract_strided_slice %102 {offsets = [0, 128], sizes = [16, 128], strides = [1, 1]} : vector<16x256xf32> to vector<16x128xf32>
    %105 = vector.shape_cast %104 : vector<16x128xf32> to vector<16x1x128xf32>
    %106 = vector.shape_cast %103 : vector<16x128xf32> to vector<1x16x128xf32>
    %107 = vector.broadcast %105 : vector<16x1x128xf32> to vector<16x16x128xf32>
    %108 = vector.broadcast %106 : vector<1x16x128xf32> to vector<16x16x128xf32>
    %109 = arith.addf %107, %108 : vector<16x16x128xf32>
    %cst_52 = arith.constant 0.000000e+00 : f32
    %110 = vector.broadcast %cst_52 : f32 to vector<16x16x128xf32>
    %111 = arith.cmpf ogt, %109, %110 : vector<16x16x128xf32>
    %cst_53 = arith.constant 2.000000e-01 : f32
    %112 = vector.broadcast %cst_53 : f32 to vector<16x16x128xf32>
    %113 = arith.mulf %112, %109 : vector<16x16x128xf32>
    %114 = arith.select %111, %109, %113 : vector<16x16x128xi1>, vector<16x16x128xf32>
    %115 = vector.shape_cast %114 : vector<16x16x128xf32> to vector<256x128xf32>
    %cst_54 = arith.constant dense<0.000000e+00> : vector<256x1xf32>
    %116 = tpu.matmul %115, %99, %cst_54 {dimension_numbers = #tpu.dot_dimension_numbers<[1], [0], [0], [1], [0, 0, 1, 1], [], []>} : vector<256x128xf32>, vector<128x1xf32>, vector<256x1xf32> -> vector<256x1xf32>
    %117 = vector.shape_cast %116 : vector<256x1xf32> to vector<16x16x1xf32>
    %118 = arith.addf %117, %6 : vector<16x16x1xf32>
    %cst_55 = arith.constant dense<0xFF800000> : vector<16x1xf32>
    %119 = vector.multi_reduction <maximumf>, %118, %cst_55 [1] : vector<16x16x1xf32> to vector<16x1xf32>
    %120 = vector.shape_cast %119 : vector<16x1xf32> to vector<16x1x1xf32>
    %121 = vector.broadcast %120 : vector<16x1x1xf32> to vector<16x16x1xf32>
    %122 = arith.subf %118, %121 : vector<16x16x1xf32>
    %123 = math.exp %122 : vector<16x16x1xf32>
    %cst_56 = arith.constant dense<0.000000e+00> : vector<16x1xf32>
    %124 = vector.multi_reduction <add>, %123, %cst_56 [1] : vector<16x16x1xf32> to vector<16x1xf32>
    %125 = vector.shape_cast %124 : vector<16x1xf32> to vector<16x1x1xf32>
    %126 = vector.shape_cast %123 : vector<16x16x1xf32> to vector<256x1xf32>
    %cst_57 = arith.constant dense<0.000000e+00> : vector<256x128xf32>
    %127 = tpu.matmul %126, %100, %cst_57 {dimension_numbers = #tpu.dot_dimension_numbers<[1], [0], [0], [1], [0, 0, 1, 1], [], []>} : vector<256x1xf32>, vector<1x128xf32>, vector<256x128xf32> -> vector<256x128xf32>
    %128 = vector.shape_cast %127 : vector<256x128xf32> to vector<16x16x128xf32>
    %129 = vector.shape_cast %103 : vector<16x128xf32> to vector<1x16x128xf32>
    %130 = vector.broadcast %129 : vector<1x16x128xf32> to vector<16x16x128xf32>
    %131 = arith.mulf %128, %130 : vector<16x16x128xf32>
    %cst_58 = arith.constant dense<0.000000e+00> : vector<16x128xf32>
    %132 = vector.multi_reduction <add>, %131, %cst_58 [1] : vector<16x16x128xf32> to vector<16x128xf32>
    %133 = vector.shape_cast %125 : vector<16x1x1xf32> to vector<16x1xf32>
    %cst_59 = arith.constant 1.000000e+00 : f32
    %134 = vector.broadcast %cst_59 : f32 to vector<16x1xf32>
    %135 = arith.divf %134, %133 : vector<16x1xf32>
    %cst_60 = arith.constant dense<0.000000e+00> : vector<16x128xf32>
    %136 = tpu.matmul %135, %100, %cst_60 {dimension_numbers = #tpu.dot_dimension_numbers<[1], [0], [0], [1], [0, 0, 1, 1], [], []>} : vector<16x1xf32>, vector<1x128xf32>, vector<16x128xf32> -> vector<16x128xf32>
    %137 = arith.mulf %132, %136 : vector<16x128xf32>
    %138 = vector.broadcast %101 : vector<1x128xf32> to vector<16x128xf32>
    %139 = arith.addf %137, %138 : vector<16x128xf32>
    %cst_61 = arith.constant 0.000000e+00 : f32
    %140 = vector.broadcast %cst_61 : f32 to vector<16x128xf32>
    %141 = arith.maximumf %139, %140 : vector<16x128xf32>
    %c0_62 = arith.constant 0 : index
    %c0_63 = arith.constant 0 : index
    %142 = vector.load %arg14[%c0_62, %c0_63] : memref<128x1xf32, #tpu.memory_space<vmem>>, vector<128x1xf32>
    %cst_64 = arith.constant dense<0.000000e+00> : vector<16x1xf32>
    %143 = tpu.matmul %141, %142, %cst_64 {dimension_numbers = #tpu.dot_dimension_numbers<[1], [0], [0], [1], [0, 0, 1, 1], [], []>} : vector<16x128xf32>, vector<128x1xf32>, vector<16x1xf32> -> vector<16x1xf32>
    %c0_65 = arith.constant 0 : index
    %c0_66 = arith.constant 0 : index
    %144 = vector.load %arg15[%c0_65, %c0_66] : memref<1x1xf32, #tpu.memory_space<vmem>>, vector<1x1xf32>
    %145 = vector.broadcast %144 : vector<1x1xf32> to vector<16x1xf32>
    %146 = arith.addf %143, %145 : vector<16x1xf32>
    %c0_67 = arith.constant 0 : index
    %c0_68 = arith.constant 0 : index
    %147 = vector.load %arg16[%c0_67, %c0_68] : memref<16x1xf32, #tpu.memory_space<vmem>>, vector<16x1xf32>
    tpu.vector_store %arg16[%c0_67, %c0_68], %146 {strides = array<i32>} : memref<16x1xf32, #tpu.memory_space<vmem>>, vector<16x1xf32>,
    return
  }
}

</mosaic_0001>

<llo_original>
// kernel: mul.13
$region0: #{mul.13}
  %s0 = inlined_call_operand.vmem [shape: f32[4,32], index: 0, kind: input, shape index: {}]
  %s1 = inlined_call_operand.vmem [shape: f32[128], index: 1, kind: output, shape index: {}]
  $region1: #{mul.13} parent=0
    #allocation0 [shape = 'u8[4096]{0}', space=vmem, size = 0x1000, scoped, tag = 'scoped mem for output reshape']
    #allocation1 [shape = 'u8[4096]{0}', space=vmem, size = 0x1000, scoped, tag = 'scoped mem for input reshape']
    %s3 = sshllo.u32 0, 4
    %v4 = vld [vmem:[%s0] sm:%s3]
    %5 = vst [vmem:[#allocation1] sm:%s3] %v4
    %v6 = vld [vmem:[#allocation1] sm:$0x1]
    %vm7 = vcmask 261120
    %8 = vst.msk [vmem:[#allocation0] sm:$0x1] %vm7, %v6
    %s9 = scalar_lea.vmem [#allocation1], 3
    %v10 = vld [vmem:[%s9] sm:$0x1]
    %11 = vrot.lane.b32.xlu0 %v10, 96
    %v12 = vpop.permute.xlu0 %11
    %vm13 = vcmask 1048320
    %14 = vst.msk [vmem:[#allocation0] sm:$0x1] %vm13, %v12
    %s15 = scalar_lea.vmem [#allocation1], 2
    %v16 = vld [vmem:[%s15] sm:$0x1]
    %17 = vrot.lane.b32.xlu0 %v16, 64
    %v18 = vpop.permute.xlu0 %17
    %vm19 = vcmask 785920
    %20 = vst.msk [vmem:[#allocation0] sm:$0x1] %vm19, %v18
    %s21 = scalar_lea.vmem [#allocation1], 1
    %v22 = vld [vmem:[%s21] sm:$0x1]
    %23 = vrot.lane.b32.xlu0 %v22, 32
    %v24 = vpop.permute.xlu0 %23
    %vm25 = vcmask 523520
    %26 = vst.msk [vmem:[#allocation0] sm:$0x1] %vm25, %v24
    %s28 = sshllo.u32 0, 1
    %v30 = vld [vmem:[#allocation0] sm:%s28]
    %s31 = sshllo.u32 0, 1
    %32 = vst [vmem:[%s1] sm:%s31] %v30

// kernel: mul.9
$region0: #{mul.9}
  %s0 = inlined_call_operand.vmem [shape: f32[4,8], index: 0, kind: input, shape index: {}]
  %s1 = inlined_call_operand.vmem [shape: f32[32], index: 1, kind: output, shape index: {}]
  $region1: #{mul.9} parent=0
    #allocation0 [shape = 'u8[4096]{0}', space=vmem, size = 0x1000, scoped, tag = 'scoped mem for output reshape']
    #allocation1 [shape = 'u8[4096]{0}', space=vmem, size = 0x1000, scoped, tag = 'scoped mem for input reshape']
    %s3 = sshllo.u32 0, 4
    %v4 = vld [vmem:[%s0] sm:%s3]
    %5 = vst [vmem:[#allocation1] sm:%s3] %v4
    %v6 = vld [vmem:[#allocation1] sm:$0x1]
    %vm7 = vcmask 64512
    %8 = vst.msk [vmem:[#allocation0] sm:$0x1] %vm7, %v6
    %s9 = scalar_lea.vmem [#allocation1], 3
    %v10 = vld [vmem:[%s9] sm:$0x1]
    %11 = vrot.lane.b32.xlu0 %v10, 24
    %v12 = vpop.permute.xlu0 %11
    %vm13 = vcmask 261312
    %14 = vst.msk [vmem:[#allocation0] sm:$0x1] %vm13, %v12
    %s15 = scalar_lea.vmem [#allocation1], 2
    %v16 = vld [vmem:[%s15] sm:$0x1]
    %17 = vrot.lane.b32.xlu0 %v16, 16
    %v18 = vpop.permute.xlu0 %17
    %vm19 = vcmask 195712
    %20 = vst.msk [vmem:[#allocation0] sm:$0x1] %vm19, %v18
    %s21 = scalar_lea.vmem [#allocation1], 1
    %v22 = vld [vmem:[%s21] sm:$0x1]
    %23 = vrot.lane.b32.xlu0 %v22, 8
    %v24 = vpop.permute.xlu0 %23
    %vm25 = vcmask 130112
    %26 = vst.msk [vmem:[#allocation0] sm:$0x1] %vm25, %v24
    %s28 = sshllo.u32 0, 1
    %v30 = vld [vmem:[#allocation0] sm:%s28]
    %s31 = sshllo.u32 0, 1
    %32 = vst [vmem:[%s1] sm:%s31] %v30

// kernel: _gat_forward_impl.1
$region0: #{_gat_forward_impl.1}
  #allocation0 [shape = 'u32[]', space=smem, size = 0x4, offset = 0x4, fixed_abs, tag = 'smem constant byte address 0x4 - core index']
  #allocation1 [shape = 'u32[144,128]{1,0:T(1,128)}', space=vmem, size = 0x12000, scoped, tag = 'internal scratch']
  #allocation2 [shape = 'f32[1,1]{1,0:T(1,128)S(1)}', space=vmem, size = 0x200, scoped, tag = 'scoped memory for _gat_forward_impl.1']
  %s0 = inlined_call_operand.vmem [shape: f32[16,8], index: 0, kind: input, shape index: {}]
  %s1 = inlined_call_operand.vmem [shape: f32[16,16], index: 1, kind: input, shape index: {}]
  %s2 = inlined_call_operand.vmem [shape: f32[8,64], index: 2, kind: input, shape index: {}]
  %s3 = inlined_call_operand.vmem [shape: f32[32,4], index: 3, kind: input, shape index: {}]
  %s4 = inlined_call_operand.vmem [shape: f32[4,32], index: 4, kind: input, shape index: {}]
  %s5 = inlined_call_operand.vmem [shape: f32[1,32], index: 5, kind: input, shape index: {}]
  %s6 = inlined_call_operand.vmem [shape: f32[32,256], index: 6, kind: input, shape index: {}]
  %s7 = inlined_call_operand.vmem [shape: f32[128,4], index: 7, kind: input, shape index: {}]
  %s8 = inlined_call_operand.vmem [shape: f32[4,128], index: 8, kind: input, shape index: {}]
  %s9 = inlined_call_operand.vmem [shape: f32[1,128], index: 9, kind: input, shape index: {}]
  %s10 = inlined_call_operand.vmem [shape: f32[128,256], index: 10, kind: input, shape index: {}]
  %s11 = inlined_call_operand.vmem [shape: f32[128,1], index: 11, kind: input, shape index: {}]
  %s12 = inlined_call_operand.vmem [shape: f32[1,128], index: 12, kind: input, shape index: {}]
  %s13 = inlined_call_operand.vmem [shape: f32[1,128], index: 13, kind: input, shape index: {}]
  %s14 = inlined_call_operand.vmem [shape: f32[128,1], index: 14, kind: input, shape index: {}]
  %s15 = inlined_call_operand.<no memory space> [shape: f32[1,1], index: 15, kind: input, shape index: {}]
  %s16 = inlined_call_operand.vmem [shape: f32[16,1], index: 16, kind: output, shape index: {}]
  %s17 = sld [smem:[#allocation0]]
  $region74: #{_gat_forward_impl.1} parent=0
    _
  %s19 = ssub.s32 1, %s17
  %s20 = scalar_select 0, %s19, %s17
  %v21 = vstv %s15
  %22 = vst [vmem:[#allocation2] sm:$0x1] %v21
  // Predicated region
  $region2: #{_gat_forward_impl.1} parent=0 // pred_check
    _
  $region3: #{_gat_forward_impl.1} parent=0 // pred_check_branch
    %24 = sbr.rel (0) target = $region5
  $region4: #{_gat_forward_impl.1} parent=0 // pred_region
    _
  $region5: #{_gat_forward_impl.1} parent=0 // pred_fallthru
    _
  // Predicated region
  $region6: #{_gat_forward_impl.1} parent=0 // pred_check
    _
  $region7: #{_gat_forward_impl.1} parent=0 // pred_check_branch
    %26 = sbr.rel (0) target = $region9
  $region8: #{_gat_forward_impl.1} parent=0 // pred_region
    _
  $region9: #{_gat_forward_impl.1} parent=0 // pred_fallthru
    _
  // Predicated region
  $region10: #{_gat_forward_impl.1} parent=0 // pred_check
    _
  $region11: #{_gat_forward_impl.1} parent=0 // pred_check_branch
    %28 = sbr.rel (0) target = $region13
  $region12: #{_gat_forward_impl.1} parent=0 // pred_region
    _
  $region13: #{_gat_forward_impl.1} parent=0 // pred_fallthru
    _
  // Predicated region
  $region14: #{_gat_forward_impl.1} parent=0 // pred_check
    _
  $region15: #{_gat_forward_impl.1} parent=0 // pred_check_branch
    %30 = sbr.rel (0) target = $region17
  $region16: #{_gat_forward_impl.1} parent=0 // pred_region
    _
  $region17: #{_gat_forward_impl.1} parent=0 // pred_fallthru
    _
  // Predicated region
  $region18: #{_gat_forward_impl.1} parent=0 // pred_check
    _
  $region19: #{_gat_forward_impl.1} parent=0 // pred_check_branch
    %32 = sbr.rel (0) target = $region21
  $region20: #{_gat_forward_impl.1} parent=0 // pred_region
    _
  $region21: #{_gat_forward_impl.1} parent=0 // pred_fallthru
    _
  // Predicated region
  $region22: #{_gat_forward_impl.1} parent=0 // pred_check
    _
  $region23: #{_gat_forward_impl.1} parent=0 // pred_check_branch
    %34 = sbr.rel (0) target = $region25
  $region24: #{_gat_forward_impl.1} parent=0 // pred_region
    _
  $region25: #{_gat_forward_impl.1} parent=0 // pred_fallthru
    _
  // Predicated region
  $region26: #{_gat_forward_impl.1} parent=0 // pred_check
    _
  $region27: #{_gat_forward_impl.1} parent=0 // pred_check_branch
    %36 = sbr.rel (0) target = $region29
  $region28: #{_gat_forward_impl.1} parent=0 // pred_region
    _
  $region29: #{_gat_forward_impl.1} parent=0 // pred_fallthru
    _
  // Predicated region
  $region30: #{_gat_forward_impl.1} parent=0 // pred_check
    _
  $region31: #{_gat_forward_impl.1} parent=0 // pred_check_branch
    %38 = sbr.rel (0) target = $region33
  $region32: #{_gat_forward_impl.1} parent=0 // pred_region
    _
  $region33: #{_gat_forward_impl.1} parent=0 // pred_fallthru
    _
  // Predicated region
  $region34: #{_gat_forward_impl.1} parent=0 // pred_check
    _
  $region35: #{_gat_forward_impl.1} parent=0 // pred_check_branch
    %40 = sbr.rel (0) target = $region37
  $region36: #{_gat_forward_impl.1} parent=0 // pred_region
    _
  $region37: #{_gat_forward_impl.1} parent=0 // pred_fallthru
    _
  // Predicated region
  $region38: #{_gat_forward_impl.1} parent=0 // pred_check
    _
  $region39: #{_gat_forward_impl.1} parent=0 // pred_check_branch
    %42 = sbr.rel (0) target = $region41
  $region40: #{_gat_forward_impl.1} parent=0 // pred_region
    _
  $region41: #{_gat_forward_impl.1} parent=0 // pred_fallthru
    _
  // Predicated region
  $region42: #{_gat_forward_impl.1} parent=0 // pred_check
    _
  $region43: #{_gat_forward_impl.1} parent=0 // pred_check_branch
    %44 = sbr.rel (0) target = $region45
  $region44: #{_gat_forward_impl.1} parent=0 // pred_region
    _
  $region45: #{_gat_forward_impl.1} parent=0 // pred_fallthru
    _
  // Predicated region
  $region46: #{_gat_forward_impl.1} parent=0 // pred_check
    _
  $region47: #{_gat_forward_impl.1} parent=0 // pred_check_branch
    %46 = sbr.rel (0) target = $region49
  $region48: #{_gat_forward_impl.1} parent=0 // pred_region
    _
  $region49: #{_gat_forward_impl.1} parent=0 // pred_fallthru
    _
  // Predicated region
  $region50: #{_gat_forward_impl.1} parent=0 // pred_check
    _
  $region51: #{_gat_forward_impl.1} parent=0 // pred_check_branch
    %48 = sbr.rel (0) target = $region53
  $region52: #{_gat_forward_impl.1} parent=0 // pred_region
    _
  $region53: #{_gat_forward_impl.1} parent=0 // pred_fallthru
    _
  // Predicated region
  $region54: #{_gat_forward_impl.1} parent=0 // pred_check
    _
  $region55: #{_gat_forward_impl.1} parent=0 // pred_check_branch
    %50 = sbr.rel (0) target = $region57
  $region56: #{_gat_forward_impl.1} parent=0 // pred_region
    _
  $region57: #{_gat_forward_impl.1} parent=0 // pred_fallthru
    _
  // Predicated region
  $region58: #{_gat_forward_impl.1} parent=0 // pred_check
    _
  $region59: #{_gat_forward_impl.1} parent=0 // pred_check_branch
    %52 = sbr.rel (0) target = $region61
  $region60: #{_gat_forward_impl.1} parent=0 // pred_region
    _
  $region61: #{_gat_forward_impl.1} parent=0 // pred_fallthru
    _
  // Predicated region
  $region62: #{_gat_forward_impl.1} parent=0 // pred_check
    _
  $region63: #{_gat_forward_impl.1} parent=0 // pred_check_branch
    %54 = sbr.rel (0) target = $region65
  $region64: #{_gat_forward_impl.1} parent=0 // pred_region
    _
  $region65: #{_gat_forward_impl.1} parent=0 // pred_fallthru
    _
  %v55 = vld [vmem:[%s1] sm:$0xff]
  %v56 = vld [vmem:[%s1 + $0x8] sm:$0xff]
  %v57 = vlaneseq
  %v58 = vshrl.u32 %v57, 7
  %v59 = vsub.s32 0, %v58
  %v60 = vrot.slane %v55, %v59
  %62 = vbcast.lane.b32.xlu0 %v60, 256
  %v63 = vpop.permute.xlu0 %62
  %s65 = sor.u32 256, 8
  %66 = vbcast.lane.b32.xlu0 %v60, %s65
  %v67 = vpop.permute.xlu0 %66
  %v68 = vlaneseq
  %v69 = vshrl.u32 %v68, 7
  %v70 = vsub.s32 1, %v69
  %v71 = vrot.slane %v55, %v70
  %73 = vbcast.lane.b32.xlu0 %v71, 256
  %v74 = vpop.permute.xlu0 %73
  %s76 = sor.u32 256, 8
  %77 = vbcast.lane.b32.xlu0 %v71, %s76
  %v78 = vpop.permute.xlu0 %77
  %v79 = vlaneseq
  %v80 = vshrl.u32 %v79, 7
  %v81 = vsub.s32 2, %v80
  %v82 = vrot.slane %v55, %v81
  %84 = vbcast.lane.b32.xlu0 %v82, 256
  %v85 = vpop.permute.xlu0 %84
  %s87 = sor.u32 256, 8
  %88 = vbcast.lane.b32.xlu0 %v82, %s87
  %v89 = vpop.permute.xlu0 %88
  %v90 = vlaneseq
  %v91 = vshrl.u32 %v90, 7
  %v92 = vsub.s32 3, %v91
  %v93 = vrot.slane %v55, %v92
  %95 = vbcast.lane.b32.xlu0 %v93, 256
  %v96 = vpop.permute.xlu0 %95
  %s98 = sor.u32 256, 8
  %99 = vbcast.lane.b32.xlu0 %v93, %s98
  %v100 = vpop.permute.xlu0 %99
  %v101 = vlaneseq
  %v102 = vshrl.u32 %v101, 7
  %v103 = vsub.s32 4, %v102
  %v104 = vrot.slane %v55, %v103
  %106 = vbcast.lane.b32.xlu0 %v104, 256
  %v107 = vpop.permute.xlu0 %106
  %s109 = sor.u32 256, 8
  %110 = vbcast.lane.b32.xlu0 %v104, %s109
  %v111 = vpop.permute.xlu0 %110
  %v112 = vlaneseq
  %v113 = vshrl.u32 %v112, 7
  %v114 = vsub.s32 5, %v113
  %v115 = vrot.slane %v55, %v114
  %117 = vbcast.lane.b32.xlu0 %v115, 256
  %v118 = vpop.permute.xlu0 %117
  %s120 = sor.u32 256, 8
  %121 = vbcast.lane.b32.xlu0 %v115, %s120
  %v122 = vpop.permute.xlu0 %121
  %v123 = vlaneseq
  %v124 = vshrl.u32 %v123, 7
  %v125 = vsub.s32 6, %v124
  %v126 = vrot.slane %v55, %v125
  %128 = vbcast.lane.b32.xlu0 %v126, 256
  %v129 = vpop.permute.xlu0 %128
  %s131 = sor.u32 256, 8
  %132 = vbcast.lane.b32.xlu0 %v126, %s131
  %v133 = vpop.permute.xlu0 %132
  %v134 = vlaneseq
  %v135 = vshrl.u32 %v134, 7
  %v136 = vsub.s32 7, %v135
  %v137 = vrot.slane %v55, %v136
  %139 = vbcast.lane.b32.xlu0 %v137, 256
  %v140 = vpop.permute.xlu0 %139
  %s142 = sor.u32 256, 8
  %143 = vbcast.lane.b32.xlu0 %v137, %s142
  %v144 = vpop.permute.xlu0 %143
  %v145 = vlaneseq
  %v146 = vshrl.u32 %v145, 7
  %v147 = vsub.s32 0, %v146
  %v148 = vrot.slane %v56, %v147
  %150 = vbcast.lane.b32.xlu0 %v148, 256
  %v151 = vpop.permute.xlu0 %150
  %s153 = sor.u32 256, 8
  %154 = vbcast.lane.b32.xlu0 %v148, %s153
  %v155 = vpop.permute.xlu0 %154
  %v156 = vlaneseq
  %v157 = vshrl.u32 %v156, 7
  %v158 = vsub.s32 1, %v157
  %v159 = vrot.slane %v56, %v158
  %161 = vbcast.lane.b32.xlu0 %v159, 256
  %v162 = vpop.permute.xlu0 %161
  %s164 = sor.u32 256, 8
  %165 = vbcast.lane.b32.xlu0 %v159, %s164
  %v166 = vpop.permute.xlu0 %165
  %v167 = vlaneseq
  %v168 = vshrl.u32 %v167, 7
  %v169 = vsub.s32 2, %v168
  %v170 = vrot.slane %v56, %v169
  %172 = vbcast.lane.b32.xlu0 %v170, 256
  %v173 = vpop.permute.xlu0 %172
  %s175 = sor.u32 256, 8
  %176 = vbcast.lane.b32.xlu0 %v170, %s175
  %v177 = vpop.permute.xlu0 %176
  %v178 = vlaneseq
  %v179 = vshrl.u32 %v178, 7
  %v180 = vsub.s32 3, %v179
  %v181 = vrot.slane %v56, %v180
  %183 = vbcast.lane.b32.xlu0 %v181, 256
  %v184 = vpop.permute.xlu0 %183
  %s186 = sor.u32 256, 8
  %187 = vbcast.lane.b32.xlu0 %v181, %s186
  %v188 = vpop.permute.xlu0 %187
  %v189 = vlaneseq
  %v190 = vshrl.u32 %v189, 7
  %v191 = vsub.s32 4, %v190
  %v192 = vrot.slane %v56, %v191
  %194 = vbcast.lane.b32.xlu0 %v192, 256
  %v195 = vpop.permute.xlu0 %194
  %s197 = sor.u32 256, 8
  %198 = vbcast.lane.b32.xlu0 %v192, %s197
  %v199 = vpop.permute.xlu0 %198
  %v200 = vlaneseq
  %v201 = vshrl.u32 %v200, 7
  %v202 = vsub.s32 5, %v201
  %v203 = vrot.slane %v56, %v202
  %205 = vbcast.lane.b32.xlu0 %v203, 256
  %v206 = vpop.permute.xlu0 %205
  %s208 = sor.u32 256, 8
  %209 = vbcast.lane.b32.xlu0 %v203, %s208
  %v210 = vpop.permute.xlu0 %209
  %v211 = vlaneseq
  %v212 = vshrl.u32 %v211, 7
  %v213 = vsub.s32 6, %v212
  %v214 = vrot.slane %v56, %v213
  %216 = vbcast.lane.b32.xlu0 %v214, 256
  %v217 = vpop.permute.xlu0 %216
  %s219 = sor.u32 256, 8
  %220 = vbcast.lane.b32.xlu0 %v214, %s219
  %v221 = vpop.permute.xlu0 %220
  %v222 = vlaneseq
  %v223 = vshrl.u32 %v222, 7
  %v224 = vsub.s32 7, %v223
  %v225 = vrot.slane %v56, %v224
  %227 = vbcast.lane.b32.xlu0 %v225, 256
  %v228 = vpop.permute.xlu0 %227
  %s230 = sor.u32 256, 8
  %231 = vbcast.lane.b32.xlu0 %v225, %s230
  %v232 = vpop.permute.xlu0 %231
  %vm233 = vcmp.gt.f32.partialorder %v63, 0.0
  %vm234 = vcmp.gt.f32.partialorder %v67, 0.0
  %vm235 = vcmp.gt.f32.partialorder %v74, 0.0
  %vm236 = vcmp.gt.f32.partialorder %v78, 0.0
  %vm237 = vcmp.gt.f32.partialorder %v85, 0.0
  %vm238 = vcmp.gt.f32.partialorder %v89, 0.0
  %vm239 = vcmp.gt.f32.partialorder %v96, 0.0
  %vm240 = vcmp.gt.f32.partialorder %v100, 0.0
  %vm241 = vcmp.gt.f32.partialorder %v107, 0.0
  %vm242 = vcmp.gt.f32.partialorder %v111, 0.0
  %vm243 = vcmp.gt.f32.partialorder %v118, 0.0
  %vm244 = vcmp.gt.f32.partialorder %v122, 0.0
  %vm245 = vcmp.gt.f32.partialorder %v129, 0.0
  %vm246 = vcmp.gt.f32.partialorder %v133, 0.0
  %vm247 = vcmp.gt.f32.partialorder %v140, 0.0
  %vm248 = vcmp.gt.f32.partialorder %v144, 0.0
  %vm249 = vcmp.gt.f32.partialorder %v151, 0.0
  %vm250 = vcmp.gt.f32.partialorder %v155, 0.0
  %vm251 = vcmp.gt.f32.partialorder %v162, 0.0
  %vm252 = vcmp.gt.f32.partialorder %v166, 0.0
  %vm253 = vcmp.gt.f32.partialorder %v173, 0.0
  %vm254 = vcmp.gt.f32.partialorder %v177, 0.0
  %vm255 = vcmp.gt.f32.partialorder %v184, 0.0
  %vm256 = vcmp.gt.f32.partialorder %v188, 0.0
  %vm257 = vcmp.gt.f32.partialorder %v195, 0.0
  %vm258 = vcmp.gt.f32.partialorder %v199, 0.0
  %vm259 = vcmp.gt.f32.partialorder %v206, 0.0
  %vm260 = vcmp.gt.f32.partialorder %v210, 0.0
  %vm261 = vcmp.gt.f32.partialorder %v217, 0.0
  %vm262 = vcmp.gt.f32.partialorder %v221, 0.0
  %vm263 = vcmp.gt.f32.partialorder %v228, 0.0
  %vm264 = vcmp.gt.f32.partialorder %v232, 0.0
  %v265 = vsel %vm233, 0.0, -1e+30
  %v266 = vsel %vm234, 0.0, -1e+30
  %v267 = vsel %vm235, 0.0, -1e+30
  %v268 = vsel %vm236, 0.0, -1e+30
  %v269 = vsel %vm237, 0.0, -1e+30
  %v270 = vsel %vm238, 0.0, -1e+30
  %v271 = vsel %vm239, 0.0, -1e+30
  %v272 = vsel %vm240, 0.0, -1e+30
  %v273 = vsel %vm241, 0.0, -1e+30
  %v274 = vsel %vm242, 0.0, -1e+30
  %v275 = vsel %vm243, 0.0, -1e+30
  %v276 = vsel %vm244, 0.0, -1e+30
  %v277 = vsel %vm245, 0.0, -1e+30
  %v278 = vsel %vm246, 0.0, -1e+30
  %v279 = vsel %vm247, 0.0, -1e+30
  %v280 = vsel %vm248, 0.0, -1e+30
  %v281 = vsel %vm249, 0.0, -1e+30
  %v282 = vsel %vm250, 0.0, -1e+30
  %v283 = vsel %vm251, 0.0, -1e+30
  %v284 = vsel %vm252, 0.0, -1e+30
  %v285 = vsel %vm253, 0.0, -1e+30
  %v286 = vsel %vm254, 0.0, -1e+30
  %v287 = vsel %vm255, 0.0, -1e+30
  %v288 = vsel %vm256, 0.0, -1e+30
  %v289 = vsel %vm257, 0.0, -1e+30
  %v290 = vsel %vm258, 0.0, -1e+30
  %v291 = vsel %vm259, 0.0, -1e+30
  %v292 = vsel %vm260, 0.0, -1e+30
  %v293 = vsel %vm261, 0.0, -1e+30
  %v294 = vsel %vm262, 0.0, -1e+30
  %v295 = vsel %vm263, 0.0, -1e+30
  %v296 = vsel %vm264, 0.0, -1e+30
  %v297 = vld [vmem:[%s0] sm:$0xff]
  %v298 = vld [vmem:[%s0 + $0x8] sm:$0xff]
  %v299 = vld [vmem:[%s2] sm:$0xff]
  %v300 = vld [vmem:[%s3] sm:$0xff]
  %v301 = vld [vmem:[%s3 + $0x8] sm:$0xff]
  %v302 = vld [vmem:[%s3 + $0x10] sm:$0xff]
  %v303 = vld [vmem:[%s3 + $0x18] sm:$0xff]
  %v304 = vld [vmem:[%s4] sm:$0xf]
  %v305 = vld [vmem:[%s5] sm:$0x1]
  %vm306 = vcmask 64512
  %v308 = vsel %vm306, %v297, 0
  %v311 = vsel %vm306, %v298, 0
  %313 = vmatprep.subr.mxu0 0.0
  %314 = vmatpush1.msra.mxu0 %v299
  %315 = vmatprep.subr.mxu0 0.0
  %316 = vmatpush1.msra.mxu0 0.0
  %317 = vmatprep.subr.mxu0 0.0
  %318 = vmatpush1.msra.mxu0 0.0
  %319 = vmatprep.subr.mxu0 0.0
  %320 = vmatpush1.msra.mxu0 0.0
  %321 = vmatprep.subr.mxu0 0.0
  %322 = vmatpush1.msra.mxu0 0.0
  %323 = vmatprep.subr.mxu0 0.0
  %324 = vmatpush1.msra.mxu0 0.0
  %325 = vmatprep.subr.mxu0 0.0
  %326 = vmatpush1.msra.mxu0 0.0
  %327 = vmatprep.subr.mxu0 0.0
  %328 = vmatpush1.msra.mxu0 0.0
  %329 = vmatprep.subr.mxu0 0.0
  %330 = vmatpush1.msra.mxu0 0.0
  %331 = vmatprep.subr.mxu0 0.0
  %332 = vmatpush1.msra.mxu0 0.0
  %333 = vmatprep.subr.mxu0 0.0
  %334 = vmatpush1.msra.mxu0 0.0
  %335 = vmatprep.subr.mxu0 0.0
  %336 = vmatpush1.msra.mxu0 0.0
  %337 = vmatprep.subr.mxu0 0.0
  %338 = vmatpush1.msra.mxu0 0.0
  %339 = vmatprep.subr.mxu0 0.0
  %340 = vmatpush1.msra.mxu0 0.0
  %341 = vmatprep.subr.mxu0 0.0
  %342 = vmatpush1.msra.mxu0 0.0
  %343 = vmatprep.subr.mxu0 0.0
  %344 = vmatpush1.msra.mxu0 0.0
  %345 = vmatprep.subr.mxu0 0.0
  %346 = vmatpush1.msra.mxu0 0.0
  %347 = vmatprep.subr.mxu0 0.0
  %348 = vmatpush1.msra.mxu0 0.0
  %349 = vmatprep.subr.mxu0 0.0
  %350 = vmatpush1.msra.mxu0 0.0
  %351 = vmatprep.subr.mxu0 0.0
  %352 = vmatpush1.msra.mxu0 0.0
  %353 = vmatprep.subr.mxu0 0.0
  %354 = vmatpush1.msra.mxu0 0.0
  %355 = vmatprep.subr.mxu0 0.0
  %356 = vmatpush1.msra.mxu0 0.0
  %357 = vmatprep.subr.mxu0 0.0
  %358 = vmatpush1.msra.mxu0 0.0
  %359 = vmatprep.subr.mxu0 0.0
  %360 = vmatpush1.msra.mxu0 0.0
  %361 = vmatprep.subr.mxu0 0.0
  %362 = vmatpush1.msra.mxu0 0.0
  %363 = vmatprep.subr.mxu0 0.0
  %364 = vmatpush1.msra.mxu0 0.0
  %365 = vmatprep.subr.mxu0 0.0
  %366 = vmatpush1.msra.mxu0 0.0
  %367 = vmatprep.subr.mxu0 0.0
  %368 = vmatpush1.msra.mxu0 0.0
  %369 = vmatprep.subr.mxu0 0.0
  %370 = vmatpush1.msra.mxu0 0.0
  %371 = vmatprep.subr.mxu0 0.0
  %372 = vmatpush1.msra.mxu0 0.0
  %373 = vmatprep.subr.mxu0 0.0
  %374 = vmatpush1.msra.mxu0 0.0
  %375 = vmatprep.subr.mxu0 0.0
  %376 = vmatpush1.msra.mxu0 0.0
  %377 = vmatprep.mubr.f32.mxu0 0.0
  %378 = vmatmul.mubr.f32.gmra.mrb[0].mxu0 %v308
  %v379 = vpop.f32.mrb[0].mxu0
  %v380 = vadd.f32 0.0, %v379
  %v381 = vpop.f32.mrb[0].mxu0
  %382 = vmatprep.mubr.f32.mxu0 0.0
  %383 = vmatmul.mubr.f32.gmra.mrb[0].mxu0 %v311
  %v384 = vpop.f32.mrb[0].mxu0
  %v385 = vadd.f32 0.0, %v384
  %v386 = vpop.f32.mrb[0].mxu0
  %387 = vdwg.mxu0
  %v390 = vcombine.high %v380, %v380
  %v392 = vunpack.c.l.s4 1966171168
  %v393 = vunpack.c.0.s8 %v392
  %v394 = vlaneseq
  %v395 = vshrl.u32 %v394, 7
  %v396 = vsub.s32 %v393, %v395
  %v397 = vrot.slane %v380, %v396
  %v399 = vunpack.c.l.s4 1966171168
  %v400 = vunpack.c.0.s8 %v399
  %v401 = vlaneseq
  %v402 = vshrl.u32 %v401, 7
  %v403 = vsub.s32 %v400, %v402
  %v404 = vrot.slane %v390, %v403
  %v405 = vcombine.high %v397, %v397
  %v406 = vcombine.high %v404, %v404
  %v408 = vunpack.c.l.s4 1966171168
  %v409 = vunpack.c.0.s8 %v408
  %v410 = vlaneseq
  %v411 = vshrl.u32 %v410, 7
  %v412 = vsub.s32 %v409, %v411
  %v413 = vrot.slane %v397, %v412
  %v415 = vunpack.c.l.s4 1966171168
  %v416 = vunpack.c.0.s8 %v415
  %v417 = vlaneseq
  %v418 = vshrl.u32 %v417, 7
  %v419 = vsub.s32 %v416, %v418
  %v420 = vrot.slane %v404, %v419
  %v422 = vunpack.c.l.s4 1966171168
  %v423 = vunpack.c.0.s8 %v422
  %v424 = vlaneseq
  %v425 = vshrl.u32 %v424, 7
  %v426 = vsub.s32 %v423, %v425
  %v427 = vrot.slane %v405, %v426
  %v429 = vunpack.c.l.s4 1966171168
  %v430 = vunpack.c.0.s8 %v429
  %v431 = vlaneseq
  %v432 = vshrl.u32 %v431, 7
  %v433 = vsub.s32 %v430, %v432
  %v434 = vrot.slane %v406, %v433
  %v435 = vcombine.high %v413, %v413
  %v436 = vcombine.high %v420, %v420
  %v437 = vcombine.high %v427, %v427
  %v438 = vcombine.high %v434, %v434
  %v439 = vcombine.high %v385, %v385
  %v441 = vunpack.c.l.s4 1966171168
  %v442 = vunpack.c.0.s8 %v441
  %v443 = vlaneseq
  %v444 = vshrl.u32 %v443, 7
  %v445 = vsub.s32 %v442, %v444
  %v446 = vrot.slane %v385, %v445
  %v448 = vunpack.c.l.s4 1966171168
  %v449 = vunpack.c.0.s8 %v448
  %v450 = vlaneseq
  %v451 = vshrl.u32 %v450, 7
  %v452 = vsub.s32 %v449, %v451
  %v453 = vrot.slane %v439, %v452
  %v454 = vcombine.high %v446, %v446
  %v455 = vcombine.high %v453, %v453
  %v457 = vunpack.c.l.s4 1966171168
  %v458 = vunpack.c.0.s8 %v457
  %v459 = vlaneseq
  %v460 = vshrl.u32 %v459, 7
  %v461 = vsub.s32 %v458, %v460
  %v462 = vrot.slane %v446, %v461
  %v464 = vunpack.c.l.s4 1966171168
  %v465 = vunpack.c.0.s8 %v464
  %v466 = vlaneseq
  %v467 = vshrl.u32 %v466, 7
  %v468 = vsub.s32 %v465, %v467
  %v469 = vrot.slane %v453, %v468
  %v471 = vunpack.c.l.s4 1966171168
  %v472 = vunpack.c.0.s8 %v471
  %v473 = vlaneseq
  %v474 = vshrl.u32 %v473, 7
  %v475 = vsub.s32 %v472, %v474
  %v476 = vrot.slane %v454, %v475
  %v478 = vunpack.c.l.s4 1966171168
  %v479 = vunpack.c.0.s8 %v478
  %v480 = vlaneseq
  %v481 = vshrl.u32 %v480, 7
  %v482 = vsub.s32 %v479, %v481
  %v483 = vrot.slane %v455, %v482
  %v484 = vcombine.high %v462, %v462
  %v485 = vcombine.high %v469, %v469
  %v486 = vcombine.high %v476, %v476
  %v487 = vcombine.high %v483, %v483
  %v488 = vlaneseq
  %v489 = vshrl.u32 %v488, 7
  %v490 = vsub.s32 0, %v489
  %v491 = vrot.slane %v413, %v490
  %v492 = vlaneseq
  %v493 = vshrl.u32 %v492, 7
  %v494 = vsub.s32 0, %v493
  %v495 = vrot.slane %v427, %v494
  %v496 = vlaneseq
  %v497 = vshrl.u32 %v496, 7
  %v498 = vsub.s32 0, %v497
  %v499 = vrot.slane %v435, %v498
  %v500 = vlaneseq
  %v501 = vshrl.u32 %v500, 7
  %v502 = vsub.s32 0, %v501
  %v503 = vrot.slane %v437, %v502
  %v504 = vlaneseq
  %v505 = vshrl.u32 %v504, 7
  %v506 = vsub.s32 0, %v505
  %v507 = vrot.slane %v420, %v506
  %v508 = vlaneseq
  %v509 = vshrl.u32 %v508, 7
  %v510 = vsub.s32 0, %v509
  %v511 = vrot.slane %v434, %v510
  %v512 = vlaneseq
  %v513 = vshrl.u32 %v512, 7
  %v514 = vsub.s32 0, %v513
  %v515 = vrot.slane %v436, %v514
  %v516 = vlaneseq
  %v517 = vshrl.u32 %v516, 7
  %v518 = vsub.s32 0, %v517
  %v519 = vrot.slane %v438, %v518
  %v520 = vlaneseq
  %v521 = vshrl.u32 %v520, 7
  %v522 = vsub.s32 0, %v521
  %v523 = vrot.slane %v462, %v522
  %v524 = vlaneseq
  %v525 = vshrl.u32 %v524, 7
  %v526 = vsub.s32 0, %v525
  %v527 = vrot.slane %v476, %v526
  %v528 = vlaneseq
  %v529 = vshrl.u32 %v528, 7
  %v530 = vsub.s32 0, %v529
  %v531 = vrot.slane %v484, %v530
  %v532 = vlaneseq
  %v533 = vshrl.u32 %v532, 7
  %v534 = vsub.s32 0, %v533
  %v535 = vrot.slane %v486, %v534
  %v536 = vlaneseq
  %v537 = vshrl.u32 %v536, 7
  %v538 = vsub.s32 0, %v537
  %v539 = vrot.slane %v469, %v538
  %v540 = vlaneseq
  %v541 = vshrl.u32 %v540, 7
  %v542 = vsub.s32 0, %v541
  %v543 = vrot.slane %v483, %v542
  %v544 = vlaneseq
  %v545 = vshrl.u32 %v544, 7
  %v546 = vsub.s32 0, %v545
  %v547 = vrot.slane %v485, %v546
  %v548 = vlaneseq
  %v549 = vshrl.u32 %v548, 7
  %v550 = vsub.s32 0, %v549
  %v551 = vrot.slane %v487, %v550
  %568 = vrot.lane.b32.xlu0 %v380, 32
  %v569 = vpop.permute.xlu0 %568
  %570 = vrot.lane.b32.xlu0 %v385, 32
  %v571 = vpop.permute.xlu0 %570
  %v574 = vadd.f32 %v491, %v569
  %v575 = vadd.f32 %v491, %v571
  %v576 = vadd.f32 %v495, %v569
  %v577 = vadd.f32 %v495, %v571
  %v578 = vadd.f32 %v499, %v569
  %v579 = vadd.f32 %v499, %v571
  %v580 = vadd.f32 %v503, %v569
  %v581 = vadd.f32 %v503, %v571
  %v582 = vadd.f32 %v507, %v569
  %v583 = vadd.f32 %v507, %v571
  %v584 = vadd.f32 %v511, %v569
  %v585 = vadd.f32 %v511, %v571
  %v586 = vadd.f32 %v515, %v569
  %v587 = vadd.f32 %v515, %v571
  %v588 = vadd.f32 %v519, %v569
  %v589 = vadd.f32 %v519, %v571
  %v590 = vadd.f32 %v523, %v569
  %v591 = vadd.f32 %v523, %v571
  %v592 = vadd.f32 %v527, %v569
  %v593 = vadd.f32 %v527, %v571
  %v594 = vadd.f32 %v531, %v569
  %v595 = vadd.f32 %v531, %v571
  %v596 = vadd.f32 %v535, %v569
  %v597 = vadd.f32 %v535, %v571
  %v598 = vadd.f32 %v539, %v569
  %v599 = vadd.f32 %v539, %v571
  %v600 = vadd.f32 %v543, %v569
  %v601 = vadd.f32 %v543, %v571
  %v602 = vadd.f32 %v547, %v569
  %v603 = vadd.f32 %v547, %v571
  %v604 = vadd.f32 %v551, %v569
  %v605 = vadd.f32 %v551, %v571
  %vm606 = vcmp.gt.f32.partialorder %v574, 0.0
  %vm607 = vcmp.gt.f32.partialorder %v575, 0.0
  %vm608 = vcmp.gt.f32.partialorder %v576, 0.0
  %vm609 = vcmp.gt.f32.partialorder %v577, 0.0
  %vm610 = vcmp.gt.f32.partialorder %v578, 0.0
  %vm611 = vcmp.gt.f32.partialorder %v579, 0.0
  %vm612 = vcmp.gt.f32.partialorder %v580, 0.0
  %vm613 = vcmp.gt.f32.partialorder %v581, 0.0
  %vm614 = vcmp.gt.f32.partialorder %v582, 0.0
  %vm615 = vcmp.gt.f32.partialorder %v583, 0.0
  %vm616 = vcmp.gt.f32.partialorder %v584, 0.0
  %vm617 = vcmp.gt.f32.partialorder %v585, 0.0
  %vm618 = vcmp.gt.f32.partialorder %v586, 0.0
  %vm619 = vcmp.gt.f32.partialorder %v587, 0.0
  %vm620 = vcmp.gt.f32.partialorder %v588, 0.0
  %vm621 = vcmp.gt.f32.partialorder %v589, 0.0
  %vm622 = vcmp.gt.f32.partialorder %v590, 0.0
  %vm623 = vcmp.gt.f32.partialorder %v591, 0.0
  %vm624 = vcmp.gt.f32.partialorder %v592, 0.0
  %vm625 = vcmp.gt.f32.partialorder %v593, 0.0
  %vm626 = vcmp.gt.f32.partialorder %v594, 0.0
  %vm627 = vcmp.gt.f32.partialorder %v595, 0.0
  %vm628 = vcmp.gt.f32.partialorder %v596, 0.0
  %vm629 = vcmp.gt.f32.partialorder %v597, 0.0
  %vm630 = vcmp.gt.f32.partialorder %v598, 0.0
  %vm631 = vcmp.gt.f32.partialorder %v599, 0.0
  %vm632 = vcmp.gt.f32.partialorder %v600, 0.0
  %vm633 = vcmp.gt.f32.partialorder %v601, 0.0
  %vm634 = vcmp.gt.f32.partialorder %v602, 0.0
  %vm635 = vcmp.gt.f32.partialorder %v603, 0.0
  %vm636 = vcmp.gt.f32.partialorder %v604, 0.0
  %vm637 = vcmp.gt.f32.partialorder %v605, 0.0
  %v638 = vmul.f32 %v574, 0.2
  %v639 = vmul.f32 %v575, 0.2
  %v640 = vmul.f32 %v576, 0.2
  %v641 = vmul.f32 %v577, 0.2
  %v642 = vmul.f32 %v578, 0.2
  %v643 = vmul.f32 %v579, 0.2
  %v644 = vmul.f32 %v580, 0.2
  %v645 = vmul.f32 %v581, 0.2
  %v646 = vmul.f32 %v582, 0.2
  %v647 = vmul.f32 %v583, 0.2
  %v648 = vmul.f32 %v584, 0.2
  %v649 = vmul.f32 %v585, 0.2
  %v650 = vmul.f32 %v586, 0.2
  %v651 = vmul.f32 %v587, 0.2
  %v652 = vmul.f32 %v588, 0.2
  %v653 = vmul.f32 %v589, 0.2
  %v654 = vmul.f32 %v590, 0.2
  %v655 = vmul.f32 %v591, 0.2
  %v656 = vmul.f32 %v592, 0.2
  %v657 = vmul.f32 %v593, 0.2
  %v658 = vmul.f32 %v594, 0.2
  %v659 = vmul.f32 %v595, 0.2
  %v660 = vmul.f32 %v596, 0.2
  %v661 = vmul.f32 %v597, 0.2
  %v662 = vmul.f32 %v598, 0.2
  %v663 = vmul.f32 %v599, 0.2
  %v664 = vmul.f32 %v600, 0.2
  %v665 = vmul.f32 %v601, 0.2
  %v666 = vmul.f32 %v602, 0.2
  %v667 = vmul.f32 %v603, 0.2
  %v668 = vmul.f32 %v604, 0.2
  %v669 = vmul.f32 %v605, 0.2
  %v670 = vsel %vm606, %v574, %v638
  %v671 = vsel %vm607, %v575, %v639
  %v672 = vsel %vm608, %v576, %v640
  %v673 = vsel %vm609, %v577, %v641
  %v674 = vsel %vm610, %v578, %v642
  %v675 = vsel %vm611, %v579, %v643
  %v676 = vsel %vm612, %v580, %v644
  %v677 = vsel %vm613, %v581, %v645
  %v678 = vsel %vm614, %v582, %v646
  %v679 = vsel %vm615, %v583, %v647
  %v680 = vsel %vm616, %v584, %v648
  %v681 = vsel %vm617, %v585, %v649
  %v682 = vsel %vm618, %v586, %v650
  %v683 = vsel %vm619, %v587, %v651
  %v684 = vsel %vm620, %v588, %v652
  %v685 = vsel %vm621, %v589, %v653
  %v686 = vsel %vm622, %v590, %v654
  %v687 = vsel %vm623, %v591, %v655
  %v688 = vsel %vm624, %v592, %v656
  %v689 = vsel %vm625, %v593, %v657
  %v690 = vsel %vm626, %v594, %v658
  %v691 = vsel %vm627, %v595, %v659
  %v692 = vsel %vm628, %v596, %v660
  %v693 = vsel %vm629, %v597, %v661
  %v694 = vsel %vm630, %v598, %v662
  %v695 = vsel %vm631, %v599, %v663
  %v696 = vsel %vm632, %v600, %v664
  %v697 = vsel %vm633, %v601, %v665
  %v698 = vsel %vm634, %v602, %v666
  %v699 = vsel %vm635, %v603, %v667
  %v700 = vsel %vm636, %v604, %v668
  %v701 = vsel %vm637, %v605, %v669
  %734 = vrot.lane.b32.xlu0 %v670, 96
  %v735 = vpop.permute.xlu0 %734
  %736 = vrot.lane.b32.xlu0 %v671, 96
  %v737 = vpop.permute.xlu0 %736
  %738 = vrot.lane.b32.xlu0 %v672, 96
  %v739 = vpop.permute.xlu0 %738
  %740 = vrot.lane.b32.xlu0 %v673, 96
  %v741 = vpop.permute.xlu0 %740
  %742 = vrot.lane.b32.xlu0 %v674, 96
  %v743 = vpop.permute.xlu0 %742
  %744 = vrot.lane.b32.xlu0 %v675, 96
  %v745 = vpop.permute.xlu0 %744
  %746 = vrot.lane.b32.xlu0 %v676, 96
  %v747 = vpop.permute.xlu0 %746
  %748 = vrot.lane.b32.xlu0 %v677, 96
  %v749 = vpop.permute.xlu0 %748
  %750 = vrot.lane.b32.xlu0 %v678, 96
  %v751 = vpop.permute.xlu0 %750
  %752 = vrot.lane.b32.xlu0 %v679, 96
  %v753 = vpop.permute.xlu0 %752
  %754 = vrot.lane.b32.xlu0 %v680, 96
  %v755 = vpop.permute.xlu0 %754
  %756 = vrot.lane.b32.xlu0 %v681, 96
  %v757 = vpop.permute.xlu0 %756
  %758 = vrot.lane.b32.xlu0 %v682, 96
  %v759 = vpop.permute.xlu0 %758
  %760 = vrot.lane.b32.xlu0 %v683, 96
  %v761 = vpop.permute.xlu0 %760
  %762 = vrot.lane.b32.xlu0 %v684, 96
  %v763 = vpop.permute.xlu0 %762
  %764 = vrot.lane.b32.xlu0 %v685, 96
  %v765 = vpop.permute.xlu0 %764
  %766 = vrot.lane.b32.xlu0 %v686, 96
  %v767 = vpop.permute.xlu0 %766
  %768 = vrot.lane.b32.xlu0 %v687, 96
  %v769 = vpop.permute.xlu0 %768
  %770 = vrot.lane.b32.xlu0 %v688, 96
  %v771 = vpop.permute.xlu0 %770
  %772 = vrot.lane.b32.xlu0 %v689, 96
  %v773 = vpop.permute.xlu0 %772
  %774 = vrot.lane.b32.xlu0 %v690, 96
  %v775 = vpop.permute.xlu0 %774
  %776 = vrot.lane.b32.xlu0 %v691, 96
  %v777 = vpop.permute.xlu0 %776
  %778 = vrot.lane.b32.xlu0 %v692, 96
  %v779 = vpop.permute.xlu0 %778
  %780 = vrot.lane.b32.xlu0 %v693, 96
  %v781 = vpop.permute.xlu0 %780
  %782 = vrot.lane.b32.xlu0 %v694, 96
  %v783 = vpop.permute.xlu0 %782
  %784 = vrot.lane.b32.xlu0 %v695, 96
  %v785 = vpop.permute.xlu0 %784
  %786 = vrot.lane.b32.xlu0 %v696, 96
  %v787 = vpop.permute.xlu0 %786
  %788 = vrot.lane.b32.xlu0 %v697, 96
  %v789 = vpop.permute.xlu0 %788
  %790 = vrot.lane.b32.xlu0 %v698, 96
  %v791 = vpop.permute.xlu0 %790
  %792 = vrot.lane.b32.xlu0 %v699, 96
  %v793 = vpop.permute.xlu0 %792
  %794 = vrot.lane.b32.xlu0 %v700, 96
  %v795 = vpop.permute.xlu0 %794
  %796 = vrot.lane.b32.xlu0 %v701, 96
  %v797 = vpop.permute.xlu0 %796
  %vm798 = vcmask 261120
  %v799 = vsel %vm798, %v735, 0
  %v801 = vsel %vm798, %v737, 0
  %v803 = vsel %vm798, %v739, 0
  %v805 = vsel %vm798, %v741, 0
  %v807 = vsel %vm798, %v743, 0
  %v809 = vsel %vm798, %v745, 0
  %v811 = vsel %vm798, %v747, 0
  %v813 = vsel %vm798, %v749, 0
  %v815 = vsel %vm798, %v751, 0
  %v817 = vsel %vm798, %v753, 0
  %v819 = vsel %vm798, %v755, 0
  %v821 = vsel %vm798, %v757, 0
  %v823 = vsel %vm798, %v759, 0
  %v825 = vsel %vm798, %v761, 0
  %v827 = vsel %vm798, %v763, 0
  %v829 = vsel %vm798, %v765, 0
  %v831 = vsel %vm798, %v767, 0
  %v833 = vsel %vm798, %v769, 0
  %v835 = vsel %vm798, %v771, 0
  %v837 = vsel %vm798, %v773, 0
  %v839 = vsel %vm798, %v775, 0
  %v841 = vsel %vm798, %v777, 0
  %v843 = vsel %vm798, %v779, 0
  %v845 = vsel %vm798, %v781, 0
  %v847 = vsel %vm798, %v783, 0
  %v849 = vsel %vm798, %v785, 0
  %v851 = vsel %vm798, %v787, 0
  %v853 = vsel %vm798, %v789, 0
  %v855 = vsel %vm798, %v791, 0
  %v857 = vsel %vm798, %v793, 0
  %v859 = vsel %vm798, %v795, 0
  %v861 = vsel %vm798, %v797, 0
  %863 = vmatprep.subr.mxu0 0.0
  %864 = vmatpush1.msra.mxu0 %v300
  %865 = vmatprep.subr.mxu0 0.0
  %866 = vmatpush1.msra.mxu0 %v301
  %867 = vmatprep.subr.mxu0 0.0
  %868 = vmatpush1.msra.mxu0 %v302
  %869 = vmatprep.subr.mxu0 0.0
  %870 = vmatpush1.msra.mxu0 %v303
  %871 = vmatprep.subr.mxu0 0.0
  %872 = vmatpush1.msra.mxu0 0.0
  %873 = vmatprep.subr.mxu0 0.0
  %874 = vmatpush1.msra.mxu0 0.0
  %875 = vmatprep.subr.mxu0 0.0
  %876 = vmatpush1.msra.mxu0 0.0
  %877 = vmatprep.subr.mxu0 0.0
  %878 = vmatpush1.msra.mxu0 0.0
  %879 = vmatprep.subr.mxu0 0.0
  %880 = vmatpush1.msra.mxu0 0.0
  %881 = vmatprep.subr.mxu0 0.0
  %882 = vmatpush1.msra.mxu0 0.0
  %883 = vmatprep.subr.mxu0 0.0
  %884 = vmatpush1.msra.mxu0 0.0
  %885 = vmatprep.subr.mxu0 0.0
  %886 = vmatpush1.msra.mxu0 0.0
  %887 = vmatprep.subr.mxu0 0.0
  %888 = vmatpush1.msra.mxu0 0.0
  %889 = vmatprep.subr.mxu0 0.0
  %890 = vmatpush1.msra.mxu0 0.0
  %891 = vmatprep.subr.mxu0 0.0
  %892 = vmatpush1.msra.mxu0 0.0
  %893 = vmatprep.subr.mxu0 0.0
  %894 = vmatpush1.msra.mxu0 0.0
  %895 = vmatprep.subr.mxu0 0.0
  %896 = vmatpush1.msra.mxu0 0.0
  %897 = vmatprep.subr.mxu0 0.0
  %898 = vmatpush1.msra.mxu0 0.0
  %899 = vmatprep.subr.mxu0 0.0
  %900 = vmatpush1.msra.mxu0 0.0
  %901 = vmatprep.subr.mxu0 0.0
  %902 = vmatpush1.msra.mxu0 0.0
  %903 = vmatprep.subr.mxu0 0.0
  %904 = vmatpush1.msra.mxu0 0.0
  %905 = vmatprep.subr.mxu0 0.0
  %906 = vmatpush1.msra.mxu0 0.0
  %907 = vmatprep.subr.mxu0 0.0
  %908 = vmatpush1.msra.mxu0 0.0
  %909 = vmatprep.subr.mxu0 0.0
  %910 = vmatpush1.msra.mxu0 0.0
  %911 = vmatprep.subr.mxu0 0.0
  %912 = vmatpush1.msra.mxu0 0.0
  %913 = vmatprep.subr.mxu0 0.0
  %914 = vmatpush1.msra.mxu0 0.0
  %915 = vmatprep.subr.mxu0 0.0
  %916 = vmatpush1.msra.mxu0 0.0
  %917 = vmatprep.subr.mxu0 0.0
  %918 = vmatpush1.msra.mxu0 0.0
  %919 = vmatprep.subr.mxu0 0.0
  %920 = vmatpush1.msra.mxu0 0.0
  %921 = vmatprep.subr.mxu0 0.0
  %922 = vmatpush1.msra.mxu0 0.0
  %923 = vmatprep.subr.mxu0 0.0
  %924 = vmatpush1.msra.mxu0 0.0
  %925 = vmatprep.subr.mxu0 0.0
  %926 = vmatpush1.msra.mxu0 0.0
  %927 = vmatprep.mubr.f32.mxu0 0.0
  %928 = vmatmul.mubr.f32.gmra.mrb[0].mxu0 %v799
  %v929 = vpop.f32.mrb[0].mxu0
  %v930 = vadd.f32 0.0, %v929
  %v931 = vpop.f32.mrb[0].mxu0
  %932 = vmatprep.mubr.f32.mxu0 0.0
  %933 = vmatmul.mubr.f32.gmra.mrb[0].mxu0 %v801
  %v934 = vpop.f32.mrb[0].mxu0
  %v935 = vadd.f32 0.0, %v934
  %v936 = vpop.f32.mrb[0].mxu0
  %937 = vmatprep.mubr.f32.mxu0 0.0
  %938 = vmatmul.mubr.f32.gmra.mrb[0].mxu0 %v803
  %v939 = vpop.f32.mrb[0].mxu0
  %v940 = vadd.f32 0.0, %v939
  %v941 = vpop.f32.mrb[0].mxu0
  %942 = vmatprep.mubr.f32.mxu0 0.0
  %943 = vmatmul.mubr.f32.gmra.mrb[0].mxu0 %v805
  %v944 = vpop.f32.mrb[0].mxu0
  %v945 = vadd.f32 0.0, %v944
  %v946 = vpop.f32.mrb[0].mxu0
  %947 = vmatprep.mubr.f32.mxu0 0.0
  %948 = vmatmul.mubr.f32.gmra.mrb[0].mxu0 %v807
  %v949 = vpop.f32.mrb[0].mxu0
  %v950 = vadd.f32 0.0, %v949
  %v951 = vpop.f32.mrb[0].mxu0
  %952 = vmatprep.mubr.f32.mxu0 0.0
  %953 = vmatmul.mubr.f32.gmra.mrb[0].mxu0 %v809
  %v954 = vpop.f32.mrb[0].mxu0
  %v955 = vadd.f32 0.0, %v954
  %v956 = vpop.f32.mrb[0].mxu0
  %957 = vmatprep.mubr.f32.mxu0 0.0
  %958 = vmatmul.mubr.f32.gmra.mrb[0].mxu0 %v811
  %v959 = vpop.f32.mrb[0].mxu0
  %v960 = vadd.f32 0.0, %v959
  %v961 = vpop.f32.mrb[0].mxu0
  %962 = vmatprep.mubr.f32.mxu0 0.0
  %963 = vmatmul.mubr.f32.gmra.mrb[0].mxu0 %v813
  %v964 = vpop.f32.mrb[0].mxu0
  %v965 = vadd.f32 0.0, %v964
  %v966 = vpop.f32.mrb[0].mxu0
  %967 = vmatprep.mubr.f32.mxu0 0.0
  %968 = vmatmul.mubr.f32.gmra.mrb[0].mxu0 %v815
  %v969 = vpop.f32.mrb[0].mxu0
  %v970 = vadd.f32 0.0, %v969
  %v971 = vpop.f32.mrb[0].mxu0
  %972 = vmatprep.mubr.f32.mxu0 0.0
  %973 = vmatmul.mubr.f32.gmra.mrb[0].mxu0 %v817
  %v974 = vpop.f32.mrb[0].mxu0
  %v975 = vadd.f32 0.0, %v974
  %v976 = vpop.f32.mrb[0].mxu0
  %977 = vmatprep.mubr.f32.mxu0 0.0
  %978 = vmatmul.mubr.f32.gmra.mrb[0].mxu0 %v819
  %v979 = vpop.f32.mrb[0].mxu0
  %v980 = vadd.f32 0.0, %v979
  %v981 = vpop.f32.mrb[0].mxu0
  %982 = vmatprep.mubr.f32.mxu0 0.0
  %983 = vmatmul.mubr.f32.gmra.mrb[0].mxu0 %v821
  %v984 = vpop.f32.mrb[0].mxu0
  %v985 = vadd.f32 0.0, %v984
  %v986 = vpop.f32.mrb[0].mxu0
  %987 = vmatprep.mubr.f32.mxu0 0.0
  %988 = vmatmul.mubr.f32.gmra.mrb[0].mxu0 %v823
  %v989 = vpop.f32.mrb[0].mxu0
  %v990 = vadd.f32 0.0, %v989
  %v991 = vpop.f32.mrb[0].mxu0
  %992 = vmatprep.mubr.f32.mxu0 0.0
  %993 = vmatmul.mubr.f32.gmra.mrb[0].mxu0 %v825
  %v994 = vpop.f32.mrb[0].mxu0
  %v995 = vadd.f32 0.0, %v994
  %v996 = vpop.f32.mrb[0].mxu0
  %997 = vmatprep.mubr.f32.mxu0 0.0
  %998 = vmatmul.mubr.f32.gmra.mrb[0].mxu0 %v827
  %v999 = vpop.f32.mrb[0].mxu0
  %v1000 = vadd.f32 0.0, %v999
  %v1001 = vpop.f32.mrb[0].mxu0
  %1002 = vmatprep.mubr.f32.mxu0 0.0
  %1003 = vmatmul.mubr.f32.gmra.mrb[0].mxu0 %v829
  %v1004 = vpop.f32.mrb[0].mxu0
  %v1005 = vadd.f32 0.0, %v1004
  %v1006 = vpop.f32.mrb[0].mxu0
  %1007 = vmatprep.mubr.f32.mxu0 0.0
  %1008 = vmatmul.mubr.f32.gmra.mrb[0].mxu0 %v831
  %v1009 = vpop.f32.mrb[0].mxu0
  %v1010 = vadd.f32 0.0, %v1009
  %v1011 = vpop.f32.mrb[0].mxu0
  %1012 = vmatprep.mubr.f32.mxu0 0.0
  %1013 = vmatmul.mubr.f32.gmra.mrb[0].mxu0 %v833
  %v1014 = vpop.f32.mrb[0].mxu0
  %v1015 = vadd.f32 0.0, %v1014
  %v1016 = vpop.f32.mrb[0].mxu0
  %1017 = vmatprep.mubr.f32.mxu0 0.0
  %1018 = vmatmul.mubr.f32.gmra.mrb[0].mxu0 %v835
  %v1019 = vpop.f32.mrb[0].mxu0
  %v1020 = vadd.f32 0.0, %v1019
  %v1021 = vpop.f32.mrb[0].mxu0
  %1022 = vmatprep.mubr.f32.mxu0 0.0
  %1023 = vmatmul.mubr.f32.gmra.mrb[0].mxu0 %v837
  %v1024 = vpop.f32.mrb[0].mxu0
  %v1025 = vadd.f32 0.0, %v1024
  %v1026 = vpop.f32.mrb[0].mxu0
  %1027 = vmatprep.mubr.f32.mxu0 0.0
  %1028 = vmatmul.mubr.f32.gmra.mrb[0].mxu0 %v839
  %v1029 = vpop.f32.mrb[0].mxu0
  %v1030 = vadd.f32 0.0, %v1029
  %v1031 = vpop.f32.mrb[0].mxu0
  %1032 = vmatprep.mubr.f32.mxu0 0.0
  %1033 = vmatmul.mubr.f32.gmra.mrb[0].mxu0 %v841
  %v1034 = vpop.f32.mrb[0].mxu0
  %v1035 = vadd.f32 0.0, %v1034
  %v1036 = vpop.f32.mrb[0].mxu0
  %1037 = vmatprep.mubr.f32.mxu0 0.0
  %1038 = vmatmul.mubr.f32.gmra.mrb[0].mxu0 %v843
  %v1039 = vpop.f32.mrb[0].mxu0
  %v1040 = vadd.f32 0.0, %v1039
  %v1041 = vpop.f32.mrb[0].mxu0
  %1042 = vmatprep.mubr.f32.mxu0 0.0
  %1043 = vmatmul.mubr.f32.gmra.mrb[0].mxu0 %v845
  %v1044 = vpop.f32.mrb[0].mxu0
  %v1045 = vadd.f32 0.0, %v1044
  %v1046 = vpop.f32.mrb[0].mxu0
  %1047 = vmatprep.mubr.f32.mxu0 0.0
  %1048 = vmatmul.mubr.f32.gmra.mrb[0].mxu0 %v847
  %v1049 = vpop.f32.mrb[0].mxu0
  %v1050 = vadd.f32 0.0, %v1049
  %v1051 = vpop.f32.mrb[0].mxu0
  %1052 = vmatprep.mubr.f32.mxu0 0.0
  %1053 = vmatmul.mubr.f32.gmra.mrb[0].mxu0 %v849
  %v1054 = vpop.f32.mrb[0].mxu0
  %v1055 = vadd.f32 0.0, %v1054
  %v1056 = vpop.f32.mrb[0].mxu0
  %1057 = vmatprep.mubr.f32.mxu0 0.0
  %1058 = vmatmul.mubr.f32.gmra.mrb[0].mxu0 %v851
  %v1059 = vpop.f32.mrb[0].mxu0
  %v1060 = vadd.f32 0.0, %v1059
  %v1061 = vpop.f32.mrb[0].mxu0
  %1062 = vmatprep.mubr.f32.mxu0 0.0
  %1063 = vmatmul.mubr.f32.gmra.mrb[0].mxu0 %v853
  %v1064 = vpop.f32.mrb[0].mxu0
  %v1065 = vadd.f32 0.0, %v1064
  %v1066 = vpop.f32.mrb[0].mxu0
  %1067 = vmatprep.mubr.f32.mxu0 0.0
  %1068 = vmatmul.mubr.f32.gmra.mrb[0].mxu0 %v855
  %v1069 = vpop.f32.mrb[0].mxu0
  %v1070 = vadd.f32 0.0, %v1069
  %v1071 = vpop.f32.mrb[0].mxu0
  %1072 = vmatprep.mubr.f32.mxu0 0.0
  %1073 = vmatmul.mubr.f32.gmra.mrb[0].mxu0 %v857
  %v1074 = vpop.f32.mrb[0].mxu0
  %v1075 = vadd.f32 0.0, %v1074
  %v1076 = vpop.f32.mrb[0].mxu0
  %1077 = vmatprep.mubr.f32.mxu0 0.0
  %1078 = vmatmul.mubr.f32.gmra.mrb[0].mxu0 %v859
  %v1079 = vpop.f32.mrb[0].mxu0
  %v1080 = vadd.f32 0.0, %v1079
  %v1081 = vpop.f32.mrb[0].mxu0
  %1082 = vmatprep.mubr.f32.mxu0 0.0
  %1083 = vmatmul.mubr.f32.gmra.mrb[0].mxu0 %v861
  %v1084 = vpop.f32.mrb[0].mxu0
  %v1085 = vadd.f32 0.0, %v1084
  %v1086 = vpop.f32.mrb[0].mxu0
  %1087 = vdwg.mxu0
  %v1088 = vadd.f32 %v930, %v265
  %v1089 = vadd.f32 %v935, %v266
  %v1090 = vadd.f32 %v940, %v267
  %v1091 = vadd.f32 %v945, %v268
  %v1092 = vadd.f32 %v950, %v269
  %v1093 = vadd.f32 %v955, %v270
  %v1094 = vadd.f32 %v960, %v271
  %v1095 = vadd.f32 %v965, %v272
  %v1096 = vadd.f32 %v970, %v273
  %v1097 = vadd.f32 %v975, %v274
  %v1098 = vadd.f32 %v980, %v275
  %v1099 = vadd.f32 %v985, %v276
  %v1100 = vadd.f32 %v990, %v277
  %v1101 = vadd.f32 %v995, %v278
  %v1102 = vadd.f32 %v1000, %v279
  %v1103 = vadd.f32 %v1005, %v280
  %v1104 = vadd.f32 %v1010, %v281
  %v1105 = vadd.f32 %v1015, %v282
  %v1106 = vadd.f32 %v1020, %v283
  %v1107 = vadd.f32 %v1025, %v284
  %v1108 = vadd.f32 %v1030, %v285
  %v1109 = vadd.f32 %v1035, %v286
  %v1110 = vadd.f32 %v1040, %v287
  %v1111 = vadd.f32 %v1045, %v288
  %v1112 = vadd.f32 %v1050, %v289
  %v1113 = vadd.f32 %v1055, %v290
  %v1114 = vadd.f32 %v1060, %v291
  %v1115 = vadd.f32 %v1065, %v292
  %v1116 = vadd.f32 %v1070, %v293
  %v1117 = vadd.f32 %v1075, %v294
  %v1118 = vadd.f32 %v1080, %v295
  %v1119 = vadd.f32 %v1085, %v296
  %vm1120 = vcmask 31744
  %v1121 = vsel %vm1120, %v1088, -inf
  %v1122 = vsel %vm1120, %v1089, -inf
  %v1123 = vmax.f32 %v1121, %v1122
  %v1124 = vrot.slane %v1123, 4
  %v1125 = vmax.f32 %v1123, %v1124
  %v1126 = vrot.slane %v1125, 2
  %v1127 = vmax.f32 %v1125, %v1126
  %v1128 = vrot.slane %v1127, 1
  %v1129 = vmax.f32 %v1127, %v1128
  %v1130 = vsel %vm1120, %v1090, -inf
  %v1131 = vsel %vm1120, %v1091, -inf
  %v1132 = vmax.f32 %v1130, %v1131
  %v1133 = vrot.slane %v1132, 4
  %v1134 = vmax.f32 %v1132, %v1133
  %v1135 = vrot.slane %v1134, 2
  %v1136 = vmax.f32 %v1134, %v1135
  %v1137 = vrot.slane %v1136, 1
  %v1138 = vmax.f32 %v1136, %v1137
  %v1139 = vsel %vm1120, %v1092, -inf
  %v1140 = vsel %vm1120, %v1093, -inf
  %v1141 = vmax.f32 %v1139, %v1140
  %v1142 = vrot.slane %v1141, 4
  %v1143 = vmax.f32 %v1141, %v1142
  %v1144 = vrot.slane %v1143, 2
  %v1145 = vmax.f32 %v1143, %v1144
  %v1146 = vrot.slane %v1145, 1
  %v1147 = vmax.f32 %v1145, %v1146
  %v1148 = vsel %vm1120, %v1094, -inf
  %v1149 = vsel %vm1120, %v1095, -inf
  %v1150 = vmax.f32 %v1148, %v1149
  %v1151 = vrot.slane %v1150, 4
  %v1152 = vmax.f32 %v1150, %v1151
  %v1153 = vrot.slane %v1152, 2
  %v1154 = vmax.f32 %v1152, %v1153
  %v1155 = vrot.slane %v1154, 1
  %v1156 = vmax.f32 %v1154, %v1155
  %v1157 = vsel %vm1120, %v1096, -inf
  %v1158 = vsel %vm1120, %v1097, -inf
  %v1159 = vmax.f32 %v1157, %v1158
  %v1160 = vrot.slane %v1159, 4
  %v1161 = vmax.f32 %v1159, %v1160
  %v1162 = vrot.slane %v1161, 2
  %v1163 = vmax.f32 %v1161, %v1162
  %v1164 = vrot.slane %v1163, 1
  %v1165 = vmax.f32 %v1163, %v1164
  %v1166 = vsel %vm1120, %v1098, -inf
  %v1167 = vsel %vm1120, %v1099, -inf
  %v1168 = vmax.f32 %v1166, %v1167
  %v1169 = vrot.slane %v1168, 4
  %v1170 = vmax.f32 %v1168, %v1169
  %v1171 = vrot.slane %v1170, 2
  %v1172 = vmax.f32 %v1170, %v1171
  %v1173 = vrot.slane %v1172, 1
  %v1174 = vmax.f32 %v1172, %v1173
  %v1175 = vsel %vm1120, %v1100, -inf
  %v1176 = vsel %vm1120, %v1101, -inf
  %v1177 = vmax.f32 %v1175, %v1176
  %v1178 = vrot.slane %v1177, 4
  %v1179 = vmax.f32 %v1177, %v1178
  %v1180 = vrot.slane %v1179, 2
  %v1181 = vmax.f32 %v1179, %v1180
  %v1182 = vrot.slane %v1181, 1
  %v1183 = vmax.f32 %v1181, %v1182
  %v1184 = vsel %vm1120, %v1102, -inf
  %v1185 = vsel %vm1120, %v1103, -inf
  %v1186 = vmax.f32 %v1184, %v1185
  %v1187 = vrot.slane %v1186, 4
  %v1188 = vmax.f32 %v1186, %v1187
  %v1189 = vrot.slane %v1188, 2
  %v1190 = vmax.f32 %v1188, %v1189
  %v1191 = vrot.slane %v1190, 1
  %v1192 = vmax.f32 %v1190, %v1191
  %v1193 = vsel %vm1120, %v1104, -inf
  %v1194 = vsel %vm1120, %v1105, -inf
  %v1195 = vmax.f32 %v1193, %v1194
  %v1196 = vrot.slane %v1195, 4
  %v1197 = vmax.f32 %v1195, %v1196
  %v1198 = vrot.slane %v1197, 2
  %v1199 = vmax.f32 %v1197, %v1198
  %v1200 = vrot.slane %v1199, 1
  %v1201 = vmax.f32 %v1199, %v1200
  %v1202 = vsel %vm1120, %v1106, -inf
  %v1203 = vsel %vm1120, %v1107, -inf
  %v1204 = vmax.f32 %v1202, %v1203
  %v1205 = vrot.slane %v1204, 4
  %v1206 = vmax.f32 %v1204, %v1205
  %v1207 = vrot.slane %v1206, 2
  %v1208 = vmax.f32 %v1206, %v1207
  %v1209 = vrot.slane %v1208, 1
  %v1210 = vmax.f32 %v1208, %v1209
  %v1211 = vsel %vm1120, %v1108, -inf
  %v1212 = vsel %vm1120, %v1109, -inf
  %v1213 = vmax.f32 %v1211, %v1212
  %v1214 = vrot.slane %v1213, 4
  %v1215 = vmax.f32 %v1213, %v1214
  %v1216 = vrot.slane %v1215, 2
  %v1217 = vmax.f32 %v1215, %v1216
  %v1218 = vrot.slane %v1217, 1
  %v1219 = vmax.f32 %v1217, %v1218
  %v1220 = vsel %vm1120, %v1110, -inf
  %v1221 = vsel %vm1120, %v1111, -inf
  %v1222 = vmax.f32 %v1220, %v1221
  %v1223 = vrot.slane %v1222, 4
  %v1224 = vmax.f32 %v1222, %v1223
  %v1225 = vrot.slane %v1224, 2
  %v1226 = vmax.f32 %v1224, %v1225
  %v1227 = vrot.slane %v1226, 1
  %v1228 = vmax.f32 %v1226, %v1227
  %v1229 = vsel %vm1120, %v1112, -inf
  %v1230 = vsel %vm1120, %v1113, -inf
  %v1231 = vmax.f32 %v1229, %v1230
  %v1232 = vrot.slane %v1231, 4
  %v1233 = vmax.f32 %v1231, %v1232
  %v1234 = vrot.slane %v1233, 2
  %v1235 = vmax.f32 %v1233, %v1234
  %v1236 = vrot.slane %v1235, 1
  %v1237 = vmax.f32 %v1235, %v1236
  %v1238 = vsel %vm1120, %v1114, -inf
  %v1239 = vsel %vm1120, %v1115, -inf
  %v1240 = vmax.f32 %v1238, %v1239
  %v1241 = vrot.slane %v1240, 4
  %v1242 = vmax.f32 %v1240, %v1241
  %v1243 = vrot.slane %v1242, 2
  %v1244 = vmax.f32 %v1242, %v1243
  %v1245 = vrot.slane %v1244, 1
  %v1246 = vmax.f32 %v1244, %v1245
  %v1247 = vsel %vm1120, %v1116, -inf
  %v1248 = vsel %vm1120, %v1117, -inf
  %v1249 = vmax.f32 %v1247, %v1248
  %v1250 = vrot.slane %v1249, 4
  %v1251 = vmax.f32 %v1249, %v1250
  %v1252 = vrot.slane %v1251, 2
  %v1253 = vmax.f32 %v1251, %v1252
  %v1254 = vrot.slane %v1253, 1
  %v1255 = vmax.f32 %v1253, %v1254
  %v1256 = vsel %vm1120, %v1118, -inf
  %v1257 = vsel %vm1120, %v1119, -inf
  %v1258 = vmax.f32 %v1256, %v1257
  %v1259 = vrot.slane %v1258, 4
  %v1260 = vmax.f32 %v1258, %v1259
  %v1261 = vrot.slane %v1260, 2
  %v1262 = vmax.f32 %v1260, %v1261
  %v1263 = vrot.slane %v1262, 1
  %v1264 = vmax.f32 %v1262, %v1263
  %v1265 = vsub.f32 %v1088, %v1129
  %v1266 = vsub.f32 %v1089, %v1129
  %v1267 = vsub.f32 %v1090, %v1138
  %v1268 = vsub.f32 %v1091, %v1138
  %v1269 = vsub.f32 %v1092, %v1147
  %v1270 = vsub.f32 %v1093, %v1147
  %v1271 = vsub.f32 %v1094, %v1156
  %v1272 = vsub.f32 %v1095, %v1156
  %v1273 = vsub.f32 %v1096, %v1165
  %v1274 = vsub.f32 %v1097, %v1165
  %v1275 = vsub.f32 %v1098, %v1174
  %v1276 = vsub.f32 %v1099, %v1174
  %v1277 = vsub.f32 %v1100, %v1183
  %v1278 = vsub.f32 %v1101, %v1183
  %v1279 = vsub.f32 %v1102, %v1192
  %v1280 = vsub.f32 %v1103, %v1192
  %v1281 = vsub.f32 %v1104, %v1201
  %v1282 = vsub.f32 %v1105, %v1201
  %v1283 = vsub.f32 %v1106, %v1210
  %v1284 = vsub.f32 %v1107, %v1210
  %v1285 = vsub.f32 %v1108, %v1219
  %v1286 = vsub.f32 %v1109, %v1219
  %v1287 = vsub.f32 %v1110, %v1228
  %v1288 = vsub.f32 %v1111, %v1228
  %v1289 = vsub.f32 %v1112, %v1237
  %v1290 = vsub.f32 %v1113, %v1237
  %v1291 = vsub.f32 %v1114, %v1246
  %v1292 = vsub.f32 %v1115, %v1246
  %v1293 = vsub.f32 %v1116, %v1255
  %v1294 = vsub.f32 %v1117, %v1255
  %v1295 = vsub.f32 %v1118, %v1264
  %v1296 = vsub.f32 %v1119, %v1264
  %v1297 = vmul.f32 %v1265, 1.442695
  %v1298 = vpow.pop %v1297
  %v1299 = vmul.f32 %v1266, 1.442695
  %v1300 = vpow.pop %v1299
  %v1301 = vmul.f32 %v1267, 1.442695
  %v1302 = vpow.pop %v1301
  %v1303 = vmul.f32 %v1268, 1.442695
  %v1304 = vpow.pop %v1303
  %v1305 = vmul.f32 %v1269, 1.442695
  %v1306 = vpow.pop %v1305
  %v1307 = vmul.f32 %v1270, 1.442695
  %v1308 = vpow.pop %v1307
  %v1309 = vmul.f32 %v1271, 1.442695
  %v1310 = vpow.pop %v1309
  %v1311 = vmul.f32 %v1272, 1.442695
  %v1312 = vpow.pop %v1311
  %v1313 = vmul.f32 %v1273, 1.442695
  %v1314 = vpow.pop %v1313
  %v1315 = vmul.f32 %v1274, 1.442695
  %v1316 = vpow.pop %v1315
  %v1317 = vmul.f32 %v1275, 1.442695
  %v1318 = vpow.pop %v1317
  %v1319 = vmul.f32 %v1276, 1.442695
  %v1320 = vpow.pop %v1319
  %v1321 = vmul.f32 %v1277, 1.442695
  %v1322 = vpow.pop %v1321
  %v1323 = vmul.f32 %v1278, 1.442695
  %v1324 = vpow.pop %v1323
  %v1325 = vmul.f32 %v1279, 1.442695
  %v1326 = vpow.pop %v1325
  %v1327 = vmul.f32 %v1280, 1.442695
  %v1328 = vpow.pop %v1327
  %v1329 = vmul.f32 %v1281, 1.442695
  %v1330 = vpow.pop %v1329
  %v1331 = vmul.f32 %v1282, 1.442695
  %v1332 = vpow.pop %v1331
  %v1333 = vmul.f32 %v1283, 1.442695
  %v1334 = vpow.pop %v1333
  %v1335 = vmul.f32 %v1284, 1.442695
  %v1336 = vpow.pop %v1335
  %v1337 = vmul.f32 %v1285, 1.442695
  %v1338 = vpow.pop %v1337
  %v1339 = vmul.f32 %v1286, 1.442695
  %v1340 = vpow.pop %v1339
  %v1341 = vmul.f32 %v1287, 1.442695
  %v1342 = vpow.pop %v1341
  %v1343 = vmul.f32 %v1288, 1.442695
  %v1344 = vpow.pop %v1343
  %v1345 = vmul.f32 %v1289, 1.442695
  %v1346 = vpow.pop %v1345
  %v1347 = vmul.f32 %v1290, 1.442695
  %v1348 = vpow.pop %v1347
  %v1349 = vmul.f32 %v1291, 1.442695
  %v1350 = vpow.pop %v1349
  %v1351 = vmul.f32 %v1292, 1.442695
  %v1352 = vpow.pop %v1351
  %v1353 = vmul.f32 %v1293, 1.442695
  %v1354 = vpow.pop %v1353
  %v1355 = vmul.f32 %v1294, 1.442695
  %v1356 = vpow.pop %v1355
  %v1357 = vmul.f32 %v1295, 1.442695
  %v1358 = vpow.pop %v1357
  %v1359 = vmul.f32 %v1296, 1.442695
  %v1360 = vpow.pop %v1359
  %v1361 = vsel %vm1120, %v1298, 0.0
  %v1362 = vsel %vm1120, %v1300, 0.0
  %v1363 = vadd.f32 %v1361, %v1362
  %v1364 = vrot.slane %v1363, 4
  %v1365 = vadd.f32 %v1363, %v1364
  %v1366 = vrot.slane %v1365, 2
  %v1367 = vadd.f32 %v1365, %v1366
  %v1368 = vrot.slane %v1367, 1
  %v1369 = vadd.f32 %v1367, %v1368
  %v1370 = vsel %vm1120, %v1302, 0.0
  %v1371 = vsel %vm1120, %v1304, 0.0
  %v1372 = vadd.f32 %v1370, %v1371
  %v1373 = vrot.slane %v1372, 4
  %v1374 = vadd.f32 %v1372, %v1373
  %v1375 = vrot.slane %v1374, 2
  %v1376 = vadd.f32 %v1374, %v1375
  %v1377 = vrot.slane %v1376, 1
  %v1378 = vadd.f32 %v1376, %v1377
  %v1379 = vsel %vm1120, %v1306, 0.0
  %v1380 = vsel %vm1120, %v1308, 0.0
  %v1381 = vadd.f32 %v1379, %v1380
  %v1382 = vrot.slane %v1381, 4
  %v1383 = vadd.f32 %v1381, %v1382
  %v1384 = vrot.slane %v1383, 2
  %v1385 = vadd.f32 %v1383, %v1384
  %v1386 = vrot.slane %v1385, 1
  %v1387 = vadd.f32 %v1385, %v1386
  %v1388 = vsel %vm1120, %v1310, 0.0
  %v1389 = vsel %vm1120, %v1312, 0.0
  %v1390 = vadd.f32 %v1388, %v1389
  %v1391 = vrot.slane %v1390, 4
  %v1392 = vadd.f32 %v1390, %v1391
  %v1393 = vrot.slane %v1392, 2
  %v1394 = vadd.f32 %v1392, %v1393
  %v1395 = vrot.slane %v1394, 1
  %v1396 = vadd.f32 %v1394, %v1395
  %v1397 = vsel %vm1120, %v1314, 0.0
  %v1398 = vsel %vm1120, %v1316, 0.0
  %v1399 = vadd.f32 %v1397, %v1398
  %v1400 = vrot.slane %v1399, 4
  %v1401 = vadd.f32 %v1399, %v1400
  %v1402 = vrot.slane %v1401, 2
  %v1403 = vadd.f32 %v1401, %v1402
  %v1404 = vrot.slane %v1403, 1
  %v1405 = vadd.f32 %v1403, %v1404
  %v1406 = vsel %vm1120, %v1318, 0.0
  %v1407 = vsel %vm1120, %v1320, 0.0
  %v1408 = vadd.f32 %v1406, %v1407
  %v1409 = vrot.slane %v1408, 4
  %v1410 = vadd.f32 %v1408, %v1409
  %v1411 = vrot.slane %v1410, 2
  %v1412 = vadd.f32 %v1410, %v1411
  %v1413 = vrot.slane %v1412, 1
  %v1414 = vadd.f32 %v1412, %v1413
  %v1415 = vsel %vm1120, %v1322, 0.0
  %v1416 = vsel %vm1120, %v1324, 0.0
  %v1417 = vadd.f32 %v1415, %v1416
  %v1418 = vrot.slane %v1417, 4
  %v1419 = vadd.f32 %v1417, %v1418
  %v1420 = vrot.slane %v1419, 2
  %v1421 = vadd.f32 %v1419, %v1420
  %v1422 = vrot.slane %v1421, 1
  %v1423 = vadd.f32 %v1421, %v1422
  %v1424 = vsel %vm1120, %v1326, 0.0
  %v1425 = vsel %vm1120, %v1328, 0.0
  %v1426 = vadd.f32 %v1424, %v1425
  %v1427 = vrot.slane %v1426, 4
  %v1428 = vadd.f32 %v1426, %v1427
  %v1429 = vrot.slane %v1428, 2
  %v1430 = vadd.f32 %v1428, %v1429
  %v1431 = vrot.slane %v1430, 1
  %v1432 = vadd.f32 %v1430, %v1431
  %v1433 = vsel %vm1120, %v1330, 0.0
  %v1434 = vsel %vm1120, %v1332, 0.0
  %v1435 = vadd.f32 %v1433, %v1434
  %v1436 = vrot.slane %v1435, 4
  %v1437 = vadd.f32 %v1435, %v1436
  %v1438 = vrot.slane %v1437, 2
  %v1439 = vadd.f32 %v1437, %v1438
  %v1440 = vrot.slane %v1439, 1
  %v1441 = vadd.f32 %v1439, %v1440
  %v1442 = vsel %vm1120, %v1334, 0.0
  %v1443 = vsel %vm1120, %v1336, 0.0
  %v1444 = vadd.f32 %v1442, %v1443
  %v1445 = vrot.slane %v1444, 4
  %v1446 = vadd.f32 %v1444, %v1445
  %v1447 = vrot.slane %v1446, 2
  %v1448 = vadd.f32 %v1446, %v1447
  %v1449 = vrot.slane %v1448, 1
  %v1450 = vadd.f32 %v1448, %v1449
  %v1451 = vsel %vm1120, %v1338, 0.0
  %v1452 = vsel %vm1120, %v1340, 0.0
  %v1453 = vadd.f32 %v1451, %v1452
  %v1454 = vrot.slane %v1453, 4
  %v1455 = vadd.f32 %v1453, %v1454
  %v1456 = vrot.slane %v1455, 2
  %v1457 = vadd.f32 %v1455, %v1456
  %v1458 = vrot.slane %v1457, 1
  %v1459 = vadd.f32 %v1457, %v1458
  %v1460 = vsel %vm1120, %v1342, 0.0
  %v1461 = vsel %vm1120, %v1344, 0.0
  %v1462 = vadd.f32 %v1460, %v1461
  %v1463 = vrot.slane %v1462, 4
  %v1464 = vadd.f32 %v1462, %v1463
  %v1465 = vrot.slane %v1464, 2
  %v1466 = vadd.f32 %v1464, %v1465
  %v1467 = vrot.slane %v1466, 1
  %v1468 = vadd.f32 %v1466, %v1467
  %v1469 = vsel %vm1120, %v1346, 0.0
  %v1470 = vsel %vm1120, %v1348, 0.0
  %v1471 = vadd.f32 %v1469, %v1470
  %v1472 = vrot.slane %v1471, 4
  %v1473 = vadd.f32 %v1471, %v1472
  %v1474 = vrot.slane %v1473, 2
  %v1475 = vadd.f32 %v1473, %v1474
  %v1476 = vrot.slane %v1475, 1
  %v1477 = vadd.f32 %v1475, %v1476
  %v1478 = vsel %vm1120, %v1350, 0.0
  %v1479 = vsel %vm1120, %v1352, 0.0
  %v1480 = vadd.f32 %v1478, %v1479
  %v1481 = vrot.slane %v1480, 4
  %v1482 = vadd.f32 %v1480, %v1481
  %v1483 = vrot.slane %v1482, 2
  %v1484 = vadd.f32 %v1482, %v1483
  %v1485 = vrot.slane %v1484, 1
  %v1486 = vadd.f32 %v1484, %v1485
  %v1487 = vsel %vm1120, %v1354, 0.0
  %v1488 = vsel %vm1120, %v1356, 0.0
  %v1489 = vadd.f32 %v1487, %v1488
  %v1490 = vrot.slane %v1489, 4
  %v1491 = vadd.f32 %v1489, %v1490
  %v1492 = vrot.slane %v1491, 2
  %v1493 = vadd.f32 %v1491, %v1492
  %v1494 = vrot.slane %v1493, 1
  %v1495 = vadd.f32 %v1493, %v1494
  %v1496 = vsel %vm1120, %v1358, 0.0
  %v1497 = vsel %vm1120, %v1360, 0.0
  %v1498 = vadd.f32 %v1496, %v1497
  %v1499 = vrot.slane %v1498, 4
  %v1500 = vadd.f32 %v1498, %v1499
  %v1501 = vrot.slane %v1500, 2
  %v1502 = vadd.f32 %v1500, %v1501
  %v1503 = vrot.slane %v1502, 1
  %v1504 = vadd.f32 %v1502, %v1503
  %v1506 = vsel %vm1120, %v1298, 0
  %v1509 = vsel %vm1120, %v1300, 0
  %v1512 = vsel %vm1120, %v1302, 0
  %v1515 = vsel %vm1120, %v1304, 0
  %v1518 = vsel %vm1120, %v1306, 0
  %v1521 = vsel %vm1120, %v1308, 0
  %v1524 = vsel %vm1120, %v1310, 0
  %v1527 = vsel %vm1120, %v1312, 0
  %v1530 = vsel %vm1120, %v1314, 0
  %v1533 = vsel %vm1120, %v1316, 0
  %v1536 = vsel %vm1120, %v1318, 0
  %v1539 = vsel %vm1120, %v1320, 0
  %v1542 = vsel %vm1120, %v1322, 0
  %v1545 = vsel %vm1120, %v1324, 0
  %v1548 = vsel %vm1120, %v1326, 0
  %v1551 = vsel %vm1120, %v1328, 0
  %v1554 = vsel %vm1120, %v1330, 0
  %v1557 = vsel %vm1120, %v1332, 0
  %v1560 = vsel %vm1120, %v1334, 0
  %v1563 = vsel %vm1120, %v1336, 0
  %v1566 = vsel %vm1120, %v1338, 0
  %v1569 = vsel %vm1120, %v1340, 0
  %v1572 = vsel %vm1120, %v1342, 0
  %v1575 = vsel %vm1120, %v1344, 0
  %v1578 = vsel %vm1120, %v1346, 0
  %v1581 = vsel %vm1120, %v1348, 0
  %v1584 = vsel %vm1120, %v1350, 0
  %v1587 = vsel %vm1120, %v1352, 0
  %v1590 = vsel %vm1120, %v1354, 0
  %v1593 = vsel %vm1120, %v1356, 0
  %v1596 = vsel %vm1120, %v1358, 0
  %v1599 = vsel %vm1120, %v1360, 0
  %vm1601 = vcmask 1043456
  %v1603 = vsel %vm1601, %v304, 0
  %1605 = vmatprep.subr.mxu0 0.0
  %1606 = vmatpush1.msra.mxu0 %v1603
  %1607 = vmatprep.subr.mxu0 0.0
  %1608 = vmatpush1.msra.mxu0 0.0
  %1609 = vmatprep.subr.mxu0 0.0
  %1610 = vmatpush1.msra.mxu0 0.0
  %1611 = vmatprep.subr.mxu0 0.0
  %1612 = vmatpush1.msra.mxu0 0.0
  %1613 = vmatprep.subr.mxu0 0.0
  %1614 = vmatpush1.msra.mxu0 0.0
  %1615 = vmatprep.subr.mxu0 0.0
  %1616 = vmatpush1.msra.mxu0 0.0
  %1617 = vmatprep.subr.mxu0 0.0
  %1618 = vmatpush1.msra.mxu0 0.0
  %1619 = vmatprep.subr.mxu0 0.0
  %1620 = vmatpush1.msra.mxu0 0.0
  %1621 = vmatprep.subr.mxu0 0.0
  %1622 = vmatpush1.msra.mxu0 0.0
  %1623 = vmatprep.subr.mxu0 0.0
  %1624 = vmatpush1.msra.mxu0 0.0
  %1625 = vmatprep.subr.mxu0 0.0
  %1626 = vmatpush1.msra.mxu0 0.0
  %1627 = vmatprep.subr.mxu0 0.0
  %1628 = vmatpush1.msra.mxu0 0.0
  %1629 = vmatprep.subr.mxu0 0.0
  %1630 = vmatpush1.msra.mxu0 0.0
  %1631 = vmatprep.subr.mxu0 0.0
  %1632 = vmatpush1.msra.mxu0 0.0
  %1633 = vmatprep.subr.mxu0 0.0
  %1634 = vmatpush1.msra.mxu0 0.0
  %1635 = vmatprep.subr.mxu0 0.0
  %1636 = vmatpush1.msra.mxu0 0.0
  %1637 = vmatprep.subr.mxu0 0.0
  %1638 = vmatpush1.msra.mxu0 0.0
  %1639 = vmatprep.subr.mxu0 0.0
  %1640 = vmatpush1.msra.mxu0 0.0
  %1641 = vmatprep.subr.mxu0 0.0
  %1642 = vmatpush1.msra.mxu0 0.0
  %1643 = vmatprep.subr.mxu0 0.0
  %1644 = vmatpush1.msra.mxu0 0.0
  %1645 = vmatprep.subr.mxu0 0.0
  %1646 = vmatpush1.msra.mxu0 0.0
  %1647 = vmatprep.subr.mxu0 0.0
  %1648 = vmatpush1.msra.mxu0 0.0
  %1649 = vmatprep.subr.mxu0 0.0
  %1650 = vmatpush1.msra.mxu0 0.0
  %1651 = vmatprep.subr.mxu0 0.0
  %1652 = vmatpush1.msra.mxu0 0.0
  %1653 = vmatprep.subr.mxu0 0.0
  %1654 = vmatpush1.msra.mxu0 0.0
  %1655 = vmatprep.subr.mxu0 0.0
  %1656 = vmatpush1.msra.mxu0 0.0
  %1657 = vmatprep.subr.mxu0 0.0
  %1658 = vmatpush1.msra.mxu0 0.0
  %1659 = vmatprep.subr.mxu0 0.0
  %1660 = vmatpush1.msra.mxu0 0.0
  %1661 = vmatprep.subr.mxu0 0.0
  %1662 = vmatpush1.msra.mxu0 0.0
  %1663 = vmatprep.subr.mxu0 0.0
  %1664 = vmatpush1.msra.mxu0 0.0
  %1665 = vmatprep.subr.mxu0 0.0
  %1666 = vmatpush1.msra.mxu0 0.0
  %1667 = vmatprep.subr.mxu0 0.0
  %1668 = vmatpush1.msra.mxu0 0.0
  %1669 = vmatprep.mubr.f32.mxu0 0.0
  %1670 = vmatmul.mubr.f32.gmra.mrb[0].mxu0 %v1506
  %v1671 = vpop.f32.mrb[0].mxu0
  %v1672 = vadd.f32 0.0, %v1671
  %v1673 = vpop.f32.mrb[0].mxu0
  %1674 = vmatprep.mubr.f32.mxu0 0.0
  %1675 = vmatmul.mubr.f32.gmra.mrb[0].mxu0 %v1509
  %v1676 = vpop.f32.mrb[0].mxu0
  %v1677 = vadd.f32 0.0, %v1676
  %v1678 = vpop.f32.mrb[0].mxu0
  %1679 = vmatprep.mubr.f32.mxu0 0.0
  %1680 = vmatmul.mubr.f32.gmra.mrb[0].mxu0 %v1512
  %v1681 = vpop.f32.mrb[0].mxu0
  %v1682 = vadd.f32 0.0, %v1681
  %v1683 = vpop.f32.mrb[0].mxu0
  %1684 = vmatprep.mubr.f32.mxu0 0.0
  %1685 = vmatmul.mubr.f32.gmra.mrb[0].mxu0 %v1515
  %v1686 = vpop.f32.mrb[0].mxu0
  %v1687 = vadd.f32 0.0, %v1686
  %v1688 = vpop.f32.mrb[0].mxu0
  %1689 = vmatprep.mubr.f32.mxu0 0.0
  %1690 = vmatmul.mubr.f32.gmra.mrb[0].mxu0 %v1518
  %v1691 = vpop.f32.mrb[0].mxu0
  %v1692 = vadd.f32 0.0, %v1691
  %v1693 = vpop.f32.mrb[0].mxu0
  %1694 = vmatprep.mubr.f32.mxu0 0.0
  %1695 = vmatmul.mubr.f32.gmra.mrb[0].mxu0 %v1521
  %v1696 = vpop.f32.mrb[0].mxu0
  %v1697 = vadd.f32 0.0, %v1696
  %v1698 = vpop.f32.mrb[0].mxu0
  %1699 = vmatprep.mubr.f32.mxu0 0.0
  %1700 = vmatmul.mubr.f32.gmra.mrb[0].mxu0 %v1524
  %v1701 = vpop.f32.mrb[0].mxu0
  %v1702 = vadd.f32 0.0, %v1701
  %v1703 = vpop.f32.mrb[0].mxu0
  %1704 = vmatprep.mubr.f32.mxu0 0.0
  %1705 = vmatmul.mubr.f32.gmra.mrb[0].mxu0 %v1527
  %v1706 = vpop.f32.mrb[0].mxu0
  %v1707 = vadd.f32 0.0, %v1706
  %v1708 = vpop.f32.mrb[0].mxu0
  %1709 = vmatprep.mubr.f32.mxu0 0.0
  %1710 = vmatmul.mubr.f32.gmra.mrb[0].mxu0 %v1530
  %v1711 = vpop.f32.mrb[0].mxu0
  %v1712 = vadd.f32 0.0, %v1711
  %v1713 = vpop.f32.mrb[0].mxu0
  %1714 = vmatprep.mubr.f32.mxu0 0.0
  %1715 = vmatmul.mubr.f32.gmra.mrb[0].mxu0 %v1533
  %v1716 = vpop.f32.mrb[0].mxu0
  %v1717 = vadd.f32 0.0, %v1716
  %v1718 = vpop.f32.mrb[0].mxu0
  %1719 = vmatprep.mubr.f32.mxu0 0.0
  %1720 = vmatmul.mubr.f32.gmra.mrb[0].mxu0 %v1536
  %v1721 = vpop.f32.mrb[0].mxu0
  %v1722 = vadd.f32 0.0, %v1721
  %v1723 = vpop.f32.mrb[0].mxu0
  %1724 = vmatprep.mubr.f32.mxu0 0.0
  %1725 = vmatmul.mubr.f32.gmra.mrb[0].mxu0 %v1539
  %v1726 = vpop.f32.mrb[0].mxu0
  %v1727 = vadd.f32 0.0, %v1726
  %v1728 = vpop.f32.mrb[0].mxu0
  %1729 = vmatprep.mubr.f32.mxu0 0.0
  %1730 = vmatmul.mubr.f32.gmra.mrb[0].mxu0 %v1542
  %v1731 = vpop.f32.mrb[0].mxu0
  %v1732 = vadd.f32 0.0, %v1731
  %v1733 = vpop.f32.mrb[0].mxu0
  %1734 = vmatprep.mubr.f32.mxu0 0.0
  %1735 = vmatmul.mubr.f32.gmra.mrb[0].mxu0 %v1545
  %v1736 = vpop.f32.mrb[0].mxu0
  %v1737 = vadd.f32 0.0, %v1736
  %v1738 = vpop.f32.mrb[0].mxu0
  %1739 = vmatprep.mubr.f32.mxu0 0.0
  %1740 = vmatmul.mubr.f32.gmra.mrb[0].mxu0 %v1548
  %v1741 = vpop.f32.mrb[0].mxu0
  %v1742 = vadd.f32 0.0, %v1741
  %v1743 = vpop.f32.mrb[0].mxu0
  %1744 = vmatprep.mubr.f32.mxu0 0.0
  %1745 = vmatmul.mubr.f32.gmra.mrb[0].mxu0 %v1551
  %v1746 = vpop.f32.mrb[0].mxu0
  %v1747 = vadd.f32 0.0, %v1746
  %v1748 = vpop.f32.mrb[0].mxu0
  %1749 = vmatprep.mubr.f32.mxu0 0.0
  %1750 = vmatmul.mubr.f32.gmra.mrb[0].mxu0 %v1554
  %v1751 = vpop.f32.mrb[0].mxu0
  %v1752 = vadd.f32 0.0, %v1751
  %v1753 = vpop.f32.mrb[0].mxu0
  %1754 = vmatprep.mubr.f32.mxu0 0.0
  %1755 = vmatmul.mubr.f32.gmra.mrb[0].mxu0 %v1557
  %v1756 = vpop.f32.mrb[0].mxu0
  %v1757 = vadd.f32 0.0, %v1756
  %v1758 = vpop.f32.mrb[0].mxu0
  %1759 = vmatprep.mubr.f32.mxu0 0.0
  %1760 = vmatmul.mubr.f32.gmra.mrb[0].mxu0 %v1560
  %v1761 = vpop.f32.mrb[0].mxu0
  %v1762 = vadd.f32 0.0, %v1761
  %v1763 = vpop.f32.mrb[0].mxu0
  %1764 = vmatprep.mubr.f32.mxu0 0.0
  %1765 = vmatmul.mubr.f32.gmra.mrb[0].mxu0 %v1563
  %v1766 = vpop.f32.mrb[0].mxu0
  %v1767 = vadd.f32 0.0, %v1766
  %v1768 = vpop.f32.mrb[0].mxu0
  %1769 = vmatprep.mubr.f32.mxu0 0.0
  %1770 = vmatmul.mubr.f32.gmra.mrb[0].mxu0 %v1566
  %v1771 = vpop.f32.mrb[0].mxu0
  %v1772 = vadd.f32 0.0, %v1771
  %v1773 = vpop.f32.mrb[0].mxu0
  %1774 = vmatprep.mubr.f32.mxu0 0.0
  %1775 = vmatmul.mubr.f32.gmra.mrb[0].mxu0 %v1569
  %v1776 = vpop.f32.mrb[0].mxu0
  %v1777 = vadd.f32 0.0, %v1776
  %v1778 = vpop.f32.mrb[0].mxu0
  %1779 = vmatprep.mubr.f32.mxu0 0.0
  %1780 = vmatmul.mubr.f32.gmra.mrb[0].mxu0 %v1572
  %v1781 = vpop.f32.mrb[0].mxu0
  %v1782 = vadd.f32 0.0, %v1781
  %v1783 = vpop.f32.mrb[0].mxu0
  %1784 = vmatprep.mubr.f32.mxu0 0.0
  %1785 = vmatmul.mubr.f32.gmra.mrb[0].mxu0 %v1575
  %v1786 = vpop.f32.mrb[0].mxu0
  %v1787 = vadd.f32 0.0, %v1786
  %v1788 = vpop.f32.mrb[0].mxu0
  %1789 = vmatprep.mubr.f32.mxu0 0.0
  %1790 = vmatmul.mubr.f32.gmra.mrb[0].mxu0 %v1578
  %v1791 = vpop.f32.mrb[0].mxu0
  %v1792 = vadd.f32 0.0, %v1791
  %v1793 = vpop.f32.mrb[0].mxu0
  %1794 = vmatprep.mubr.f32.mxu0 0.0
  %1795 = vmatmul.mubr.f32.gmra.mrb[0].mxu0 %v1581
  %v1796 = vpop.f32.mrb[0].mxu0
  %v1797 = vadd.f32 0.0, %v1796
  %v1798 = vpop.f32.mrb[0].mxu0
  %1799 = vmatprep.mubr.f32.mxu0 0.0
  %1800 = vmatmul.mubr.f32.gmra.mrb[0].mxu0 %v1584
  %v1801 = vpop.f32.mrb[0].mxu0
  %v1802 = vadd.f32 0.0, %v1801
  %v1803 = vpop.f32.mrb[0].mxu0
  %1804 = vmatprep.mubr.f32.mxu0 0.0
  %1805 = vmatmul.mubr.f32.gmra.mrb[0].mxu0 %v1587
  %v1806 = vpop.f32.mrb[0].mxu0
  %v1807 = vadd.f32 0.0, %v1806
  %v1808 = vpop.f32.mrb[0].mxu0
  %1809 = vmatprep.mubr.f32.mxu0 0.0
  %1810 = vmatmul.mubr.f32.gmra.mrb[0].mxu0 %v1590
  %v1811 = vpop.f32.mrb[0].mxu0
  %v1812 = vadd.f32 0.0, %v1811
  %v1813 = vpop.f32.mrb[0].mxu0
  %1814 = vmatprep.mubr.f32.mxu0 0.0
  %1815 = vmatmul.mubr.f32.gmra.mrb[0].mxu0 %v1593
  %v1816 = vpop.f32.mrb[0].mxu0
  %v1817 = vadd.f32 0.0, %v1816
  %v1818 = vpop.f32.mrb[0].mxu0
  %1819 = vmatprep.mubr.f32.mxu0 0.0
  %1820 = vmatmul.mubr.f32.gmra.mrb[0].mxu0 %v1596
  %v1821 = vpop.f32.mrb[0].mxu0
  %v1822 = vadd.f32 0.0, %v1821
  %v1823 = vpop.f32.mrb[0].mxu0
  %1824 = vmatprep.mubr.f32.mxu0 0.0
  %1825 = vmatmul.mubr.f32.gmra.mrb[0].mxu0 %v1599
  %v1826 = vpop.f32.mrb[0].mxu0
  %v1827 = vadd.f32 0.0, %v1826
  %v1828 = vpop.f32.mrb[0].mxu0
  %1829 = vdwg.mxu0
  %v1830 = vmul.f32 %v1672, %v380
  %v1831 = vmul.f32 %v1677, %v385
  %v1832 = vmul.f32 %v1682, %v380
  %v1833 = vmul.f32 %v1687, %v385
  %v1834 = vmul.f32 %v1692, %v380
  %v1835 = vmul.f32 %v1697, %v385
  %v1836 = vmul.f32 %v1702, %v380
  %v1837 = vmul.f32 %v1707, %v385
  %v1838 = vmul.f32 %v1712, %v380
  %v1839 = vmul.f32 %v1717, %v385
  %v1840 = vmul.f32 %v1722, %v380
  %v1841 = vmul.f32 %v1727, %v385
  %v1842 = vmul.f32 %v1732, %v380
  %v1843 = vmul.f32 %v1737, %v385
  %v1844 = vmul.f32 %v1742, %v380
  %v1845 = vmul.f32 %v1747, %v385
  %v1846 = vmul.f32 %v1752, %v380
  %v1847 = vmul.f32 %v1757, %v385
  %v1848 = vmul.f32 %v1762, %v380
  %v1849 = vmul.f32 %v1767, %v385
  %v1850 = vmul.f32 %v1772, %v380
  %v1851 = vmul.f32 %v1777, %v385
  %v1852 = vmul.f32 %v1782, %v380
  %v1853 = vmul.f32 %v1787, %v385
  %v1854 = vmul.f32 %v1792, %v380
  %v1855 = vmul.f32 %v1797, %v385
  %v1856 = vmul.f32 %v1802, %v380
  %v1857 = vmul.f32 %v1807, %v385
  %v1858 = vmul.f32 %v1812, %v380
  %v1859 = vmul.f32 %v1817, %v385
  %v1860 = vmul.f32 %v1822, %v380
  %v1861 = vmul.f32 %v1827, %v385
  %v1862 = vsel %vm798, %v1830, 0.0
  %v1863 = vsel %vm798, %v1831, 0.0
  %v1864 = vadd.f32 %v1862, %v1863
  %v1865 = vrot.slane %v1864, 4
  %v1866 = vadd.f32 %v1864, %v1865
  %v1867 = vrot.slane %v1866, 2
  %v1868 = vadd.f32 %v1866, %v1867
  %v1869 = vrot.slane %v1868, 1
  %v1870 = vadd.f32 %v1868, %v1869
  %v1871 = vsel %vm798, %v1832, 0.0
  %v1872 = vsel %vm798, %v1833, 0.0
  %v1873 = vadd.f32 %v1871, %v1872
  %v1874 = vrot.slane %v1873, 4
  %v1875 = vadd.f32 %v1873, %v1874
  %v1876 = vrot.slane %v1875, 2
  %v1877 = vadd.f32 %v1875, %v1876
  %v1878 = vrot.slane %v1877, 1
  %v1879 = vadd.f32 %v1877, %v1878
  %v1880 = vsel %vm798, %v1834, 0.0
  %v1881 = vsel %vm798, %v1835, 0.0
  %v1882 = vadd.f32 %v1880, %v1881
  %v1883 = vrot.slane %v1882, 4
  %v1884 = vadd.f32 %v1882, %v1883
  %v1885 = vrot.slane %v1884, 2
  %v1886 = vadd.f32 %v1884, %v1885
  %v1887 = vrot.slane %v1886, 1
  %v1888 = vadd.f32 %v1886, %v1887
  %v1889 = vsel %vm798, %v1836, 0.0
  %v1890 = vsel %vm798, %v1837, 0.0
  %v1891 = vadd.f32 %v1889, %v1890
  %v1892 = vrot.slane %v1891, 4
  %v1893 = vadd.f32 %v1891, %v1892
  %v1894 = vrot.slane %v1893, 2
  %v1895 = vadd.f32 %v1893, %v1894
  %v1896 = vrot.slane %v1895, 1
  %v1897 = vadd.f32 %v1895, %v1896
  %v1898 = vsel %vm798, %v1838, 0.0
  %v1899 = vsel %vm798, %v1839, 0.0
  %v1900 = vadd.f32 %v1898, %v1899
  %v1901 = vrot.slane %v1900, 4
  %v1902 = vadd.f32 %v1900, %v1901
  %v1903 = vrot.slane %v1902, 2
  %v1904 = vadd.f32 %v1902, %v1903
  %v1905 = vrot.slane %v1904, 1
  %v1906 = vadd.f32 %v1904, %v1905
  %v1907 = vsel %vm798, %v1840, 0.0
  %v1908 = vsel %vm798, %v1841, 0.0
  %v1909 = vadd.f32 %v1907, %v1908
  %v1910 = vrot.slane %v1909, 4
  %v1911 = vadd.f32 %v1909, %v1910
  %v1912 = vrot.slane %v1911, 2
  %v1913 = vadd.f32 %v1911, %v1912
  %v1914 = vrot.slane %v1913, 1
  %v1915 = vadd.f32 %v1913, %v1914
  %v1916 = vsel %vm798, %v1842, 0.0
  %v1917 = vsel %vm798, %v1843, 0.0
  %v1918 = vadd.f32 %v1916, %v1917
  %v1919 = vrot.slane %v1918, 4
  %v1920 = vadd.f32 %v1918, %v1919
  %v1921 = vrot.slane %v1920, 2
  %v1922 = vadd.f32 %v1920, %v1921
  %v1923 = vrot.slane %v1922, 1
  %v1924 = vadd.f32 %v1922, %v1923
  %v1925 = vsel %vm798, %v1844, 0.0
  %v1926 = vsel %vm798, %v1845, 0.0
  %v1927 = vadd.f32 %v1925, %v1926
  %v1928 = vrot.slane %v1927, 4
  %v1929 = vadd.f32 %v1927, %v1928
  %v1930 = vrot.slane %v1929, 2
  %v1931 = vadd.f32 %v1929, %v1930
  %v1932 = vrot.slane %v1931, 1
  %v1933 = vadd.f32 %v1931, %v1932
  %v1934 = vsel %vm798, %v1846, 0.0
  %v1935 = vsel %vm798, %v1847, 0.0
  %v1936 = vadd.f32 %v1934, %v1935
  %v1937 = vrot.slane %v1936, 4
  %v1938 = vadd.f32 %v1936, %v1937
  %v1939 = vrot.slane %v1938, 2
  %v1940 = vadd.f32 %v1938, %v1939
  %v1941 = vrot.slane %v1940, 1
  %v1942 = vadd.f32 %v1940, %v1941
  %v1943 = vsel %vm798, %v1848, 0.0
  %v1944 = vsel %vm798, %v1849, 0.0
  %v1945 = vadd.f32 %v1943, %v1944
  %v1946 = vrot.slane %v1945, 4
  %v1947 = vadd.f32 %v1945, %v1946
  %v1948 = vrot.slane %v1947, 2
  %v1949 = vadd.f32 %v1947, %v1948
  %v1950 = vrot.slane %v1949, 1
  %v1951 = vadd.f32 %v1949, %v1950
  %v1952 = vsel %vm798, %v1850, 0.0
  %v1953 = vsel %vm798, %v1851, 0.0
  %v1954 = vadd.f32 %v1952, %v1953
  %v1955 = vrot.slane %v1954, 4
  %v1956 = vadd.f32 %v1954, %v1955
  %v1957 = vrot.slane %v1956, 2
  %v1958 = vadd.f32 %v1956, %v1957
  %v1959 = vrot.slane %v1958, 1
  %v1960 = vadd.f32 %v1958, %v1959
  %v1961 = vsel %vm798, %v1852, 0.0
  %v1962 = vsel %vm798, %v1853, 0.0
  %v1963 = vadd.f32 %v1961, %v1962
  %v1964 = vrot.slane %v1963, 4
  %v1965 = vadd.f32 %v1963, %v1964
  %v1966 = vrot.slane %v1965, 2
  %v1967 = vadd.f32 %v1965, %v1966
  %v1968 = vrot.slane %v1967, 1
  %v1969 = vadd.f32 %v1967, %v1968
  %v1970 = vsel %vm798, %v1854, 0.0
  %v1971 = vsel %vm798, %v1855, 0.0
  %v1972 = vadd.f32 %v1970, %v1971
  %v1973 = vrot.slane %v1972, 4
  %v1974 = vadd.f32 %v1972, %v1973
  %v1975 = vrot.slane %v1974, 2
  %v1976 = vadd.f32 %v1974, %v1975
  %v1977 = vrot.slane %v1976, 1
  %v1978 = vadd.f32 %v1976, %v1977
  %v1979 = vsel %vm798, %v1856, 0.0
  %v1980 = vsel %vm798, %v1857, 0.0
  %v1981 = vadd.f32 %v1979, %v1980
  %v1982 = vrot.slane %v1981, 4
  %v1983 = vadd.f32 %v1981, %v1982
  %v1984 = vrot.slane %v1983, 2
  %v1985 = vadd.f32 %v1983, %v1984
  %v1986 = vrot.slane %v1985, 1
  %v1987 = vadd.f32 %v1985, %v1986
  %v1988 = vsel %vm798, %v1858, 0.0
  %v1989 = vsel %vm798, %v1859, 0.0
  %v1990 = vadd.f32 %v1988, %v1989
  %v1991 = vrot.slane %v1990, 4
  %v1992 = vadd.f32 %v1990, %v1991
  %v1993 = vrot.slane %v1992, 2
  %v1994 = vadd.f32 %v1992, %v1993
  %v1995 = vrot.slane %v1994, 1
  %v1996 = vadd.f32 %v1994, %v1995
  %v1997 = vsel %vm798, %v1860, 0.0
  %v1998 = vsel %vm798, %v1861, 0.0
  %v1999 = vadd.f32 %v1997, %v1998
  %v2000 = vrot.slane %v1999, 4
  %v2001 = vadd.f32 %v1999, %v2000
  %v2002 = vrot.slane %v2001, 2
  %v2003 = vadd.f32 %v2001, %v2002
  %v2004 = vrot.slane %v2003, 1
  %v2005 = vadd.f32 %v2003, %v2004
  %v2006 = vrcp.pop %v1369
  %v2007 = vmul.f32 1.0, %v2006
  %v2008 = vrcp.pop %v1378
  %v2009 = vmul.f32 1.0, %v2008
  %v2010 = vrcp.pop %v1387
  %v2011 = vmul.f32 1.0, %v2010
  %v2012 = vrcp.pop %v1396
  %v2013 = vmul.f32 1.0, %v2012
  %v2014 = vrcp.pop %v1405
  %v2015 = vmul.f32 1.0, %v2014
  %v2016 = vrcp.pop %v1414
  %v2017 = vmul.f32 1.0, %v2016
  %v2018 = vrcp.pop %v1423
  %v2019 = vmul.f32 1.0, %v2018
  %v2020 = vrcp.pop %v1432
  %v2021 = vmul.f32 1.0, %v2020
  %v2022 = vrcp.pop %v1441
  %v2023 = vmul.f32 1.0, %v2022
  %v2024 = vrcp.pop %v1450
  %v2025 = vmul.f32 1.0, %v2024
  %v2026 = vrcp.pop %v1459
  %v2027 = vmul.f32 1.0, %v2026
  %v2028 = vrcp.pop %v1468
  %v2029 = vmul.f32 1.0, %v2028
  %v2030 = vrcp.pop %v1477
  %v2031 = vmul.f32 1.0, %v2030
  %v2032 = vrcp.pop %v1486
  %v2033 = vmul.f32 1.0, %v2032
  %v2034 = vrcp.pop %v1495
  %v2035 = vmul.f32 1.0, %v2034
  %v2036 = vrcp.pop %v1504
  %v2037 = vmul.f32 1.0, %v2036
  %vm2054 = vcmask 1041409
  %v2055 = vsel %vm2054, %v2009, %v2007
  %vm2056 = vcmask 1042434
  %v2057 = vsel %vm2056, %v2011, %v2055
  %vm2058 = vcmask 1043459
  %v2059 = vsel %vm2058, %v2013, %v2057
  %vm2060 = vcmask 1044484
  %v2061 = vsel %vm2060, %v2015, %v2059
  %vm2062 = vcmask 1045509
  %v2063 = vsel %vm2062, %v2017, %v2061
  %vm2064 = vcmask 1046534
  %v2065 = vsel %vm2064, %v2019, %v2063
  %vm2066 = vcmask 1047559
  %v2067 = vsel %vm2066, %v2021, %v2065
  %v2068 = vsel %vm2054, %v2025, %v2023
  %v2069 = vsel %vm2056, %v2027, %v2068
  %v2070 = vsel %vm2058, %v2029, %v2069
  %v2071 = vsel %vm2060, %v2031, %v2070
  %v2072 = vsel %vm2062, %v2033, %v2071
  %v2073 = vsel %vm2064, %v2035, %v2072
  %v2074 = vsel %vm2066, %v2037, %v2073
  %v2075 = vsel %vm1120, %v2067, 0
  %v2077 = vsel %vm1120, %v2074, 0
  %2079 = vmatprep.subr.mxu0 0.0
  %2080 = vmatpush1.msra.mxu0 %v1603
  %2081 = vmatprep.subr.mxu0 0.0
  %2082 = vmatpush1.msra.mxu0 0.0
  %2083 = vmatprep.subr.mxu0 0.0
  %2084 = vmatpush1.msra.mxu0 0.0
  %2085 = vmatprep.subr.mxu0 0.0
  %2086 = vmatpush1.msra.mxu0 0.0
  %2087 = vmatprep.subr.mxu0 0.0
  %2088 = vmatpush1.msra.mxu0 0.0
  %2089 = vmatprep.subr.mxu0 0.0
  %2090 = vmatpush1.msra.mxu0 0.0
  %2091 = vmatprep.subr.mxu0 0.0
  %2092 = vmatpush1.msra.mxu0 0.0
  %2093 = vmatprep.subr.mxu0 0.0
  %2094 = vmatpush1.msra.mxu0 0.0
  %2095 = vmatprep.subr.mxu0 0.0
  %2096 = vmatpush1.msra.mxu0 0.0
  %2097 = vmatprep.subr.mxu0 0.0
  %2098 = vmatpush1.msra.mxu0 0.0
  %2099 = vmatprep.subr.mxu0 0.0
  %2100 = vmatpush1.msra.mxu0 0.0
  %2101 = vmatprep.subr.mxu0 0.0
  %2102 = vmatpush1.msra.mxu0 0.0
  %2103 = vmatprep.subr.mxu0 0.0
  %2104 = vmatpush1.msra.mxu0 0.0
  %2105 = vmatprep.subr.mxu0 0.0
  %2106 = vmatpush1.msra.mxu0 0.0
  %2107 = vmatprep.subr.mxu0 0.0
  %2108 = vmatpush1.msra.mxu0 0.0
  %2109 = vmatprep.subr.mxu0 0.0
  %2110 = vmatpush1.msra.mxu0 0.0
  %2111 = vmatprep.subr.mxu0 0.0
  %2112 = vmatpush1.msra.mxu0 0.0
  %2113 = vmatprep.subr.mxu0 0.0
  %2114 = vmatpush1.msra.mxu0 0.0
  %2115 = vmatprep.subr.mxu0 0.0
  %2116 = vmatpush1.msra.mxu0 0.0
  %2117 = vmatprep.subr.mxu0 0.0
  %2118 = vmatpush1.msra.mxu0 0.0
  %2119 = vmatprep.subr.mxu0 0.0
  %2120 = vmatpush1.msra.mxu0 0.0
  %2121 = vmatprep.subr.mxu0 0.0
  %2122 = vmatpush1.msra.mxu0 0.0
  %2123 = vmatprep.subr.mxu0 0.0
  %2124 = vmatpush1.msra.mxu0 0.0
  %2125 = vmatprep.subr.mxu0 0.0
  %2126 = vmatpush1.msra.mxu0 0.0
  %2127 = vmatprep.subr.mxu0 0.0
  %2128 = vmatpush1.msra.mxu0 0.0
  %2129 = vmatprep.subr.mxu0 0.0
  %2130 = vmatpush1.msra.mxu0 0.0
  %2131 = vmatprep.subr.mxu0 0.0
  %2132 = vmatpush1.msra.mxu0 0.0
  %2133 = vmatprep.subr.mxu0 0.0
  %2134 = vmatpush1.msra.mxu0 0.0
  %2135 = vmatprep.subr.mxu0 0.0
  %2136 = vmatpush1.msra.mxu0 0.0
  %2137 = vmatprep.subr.mxu0 0.0
  %2138 = vmatpush1.msra.mxu0 0.0
  %2139 = vmatprep.subr.mxu0 0.0
  %2140 = vmatpush1.msra.mxu0 0.0
  %2141 = vmatprep.subr.mxu0 0.0
  %2142 = vmatpush1.msra.mxu0 0.0
  %2143 = vmatprep.mubr.f32.mxu0 0.0
  %2144 = vmatmul.mubr.f32.gmra.mrb[0].mxu0 %v2075
  %v2145 = vpop.f32.mrb[0].mxu0
  %v2146 = vadd.f32 0.0, %v2145
  %v2147 = vpop.f32.mrb[0].mxu0
  %2148 = vmatprep.mubr.f32.mxu0 0.0
  %2149 = vmatmul.mubr.f32.gmra.mrb[0].mxu0 %v2077
  %v2150 = vpop.f32.mrb[0].mxu0
  %v2151 = vadd.f32 0.0, %v2150
  %v2152 = vpop.f32.mrb[0].mxu0
  %2153 = vdwg.mxu0
  %v2156 = vrot.slane %v2146, 1
  %v2157 = vrot.slane %v2146, 2
  %v2158 = vrot.slane %v2146, 3
  %v2159 = vrot.slane %v2146, 4
  %v2160 = vrot.slane %v2146, 5
  %v2161 = vrot.slane %v2146, 6
  %v2162 = vrot.slane %v2146, 7
  %v2163 = vrot.slane %v2151, 1
  %v2164 = vrot.slane %v2151, 2
  %v2165 = vrot.slane %v2151, 3
  %v2166 = vrot.slane %v2151, 4
  %v2167 = vrot.slane %v2151, 5
  %v2168 = vrot.slane %v2151, 6
  %v2169 = vrot.slane %v2151, 7
  %v2186 = vmul.f32 %v1870, %v2146
  %v2187 = vmul.f32 %v1879, %v2156
  %v2188 = vmul.f32 %v1888, %v2157
  %v2189 = vmul.f32 %v1897, %v2158
  %v2190 = vmul.f32 %v1906, %v2159
  %v2191 = vmul.f32 %v1915, %v2160
  %v2192 = vmul.f32 %v1924, %v2161
  %v2193 = vmul.f32 %v1933, %v2162
  %v2194 = vmul.f32 %v1942, %v2151
  %v2195 = vmul.f32 %v1951, %v2163
  %v2196 = vmul.f32 %v1960, %v2164
  %v2197 = vmul.f32 %v1969, %v2165
  %v2198 = vmul.f32 %v1978, %v2166
  %v2199 = vmul.f32 %v1987, %v2167
  %v2200 = vmul.f32 %v1996, %v2168
  %v2201 = vmul.f32 %v2005, %v2169
  %v2203 = vlaneseq
  %v2204 = vshrl.u32 %v2203, 7
  %v2205 = vsub.s32 0, %v2204
  %v2206 = vrot.slane %v305, %v2205
  %v2208 = vadd.f32 %v2186, %v2206
  %v2209 = vadd.f32 %v2187, %v2206
  %v2210 = vadd.f32 %v2188, %v2206
  %v2211 = vadd.f32 %v2189, %v2206
  %v2212 = vadd.f32 %v2190, %v2206
  %v2213 = vadd.f32 %v2191, %v2206
  %v2214 = vadd.f32 %v2192, %v2206
  %v2215 = vadd.f32 %v2193, %v2206
  %v2216 = vadd.f32 %v2194, %v2206
  %v2217 = vadd.f32 %v2195, %v2206
  %v2218 = vadd.f32 %v2196, %v2206
  %v2219 = vadd.f32 %v2197, %v2206
  %v2220 = vadd.f32 %v2198, %v2206
  %v2221 = vadd.f32 %v2199, %v2206
  %v2222 = vadd.f32 %v2200, %v2206
  %v2223 = vadd.f32 %v2201, %v2206
  %v2224 = vmax.f32 %v2208, 0.0
  %v2225 = vmax.f32 %v2209, 0.0
  %v2226 = vmax.f32 %v2210, 0.0
  %v2227 = vmax.f32 %v2211, 0.0
  %v2228 = vmax.f32 %v2212, 0.0
  %v2229 = vmax.f32 %v2213, 0.0
  %v2230 = vmax.f32 %v2214, 0.0
  %v2231 = vmax.f32 %v2215, 0.0
  %v2232 = vmax.f32 %v2216, 0.0
  %v2233 = vmax.f32 %v2217, 0.0
  %v2234 = vmax.f32 %v2218, 0.0
  %v2235 = vmax.f32 %v2219, 0.0
  %v2236 = vmax.f32 %v2220, 0.0
  %v2237 = vmax.f32 %v2221, 0.0
  %v2238 = vmax.f32 %v2222, 0.0
  %v2239 = vmax.f32 %v2223, 0.0
  %v2240 = vld [vmem:[%s6] sm:$0xff]
  %v2241 = vld [vmem:[%s6 + $0x8] sm:$0xff]
  %v2242 = vld [vmem:[%s6 + $0x10] sm:$0xff]
  %v2243 = vld [vmem:[%s6 + $0x18] sm:$0xff]
  %v2244 = vld [vmem:[%s6 + $0x20] sm:$0xff]
  %v2245 = vld [vmem:[%s6 + $0x28] sm:$0xff]
  %v2246 = vld [vmem:[%s6 + $0x30] sm:$0xff]
  %v2247 = vld [vmem:[%s6 + $0x38] sm:$0xff]
  %v2248 = vld [vmem:[%s7] sm:$0xff]
  %v2249 = vld [vmem:[%s7 + $0x8] sm:$0xff]
  %v2250 = vld [vmem:[%s7 + $0x10] sm:$0xff]
  %v2251 = vld [vmem:[%s7 + $0x18] sm:$0xff]
  %v2252 = vld [vmem:[%s7 + $0x20] sm:$0xff]
  %v2253 = vld [vmem:[%s7 + $0x28] sm:$0xff]
  %v2254 = vld [vmem:[%s7 + $0x30] sm:$0xff]
  %v2255 = vld [vmem:[%s7 + $0x38] sm:$0xff]
  %v2256 = vld [vmem:[%s7 + $0x40] sm:$0xff]
  %v2257 = vld [vmem:[%s7 + $0x48] sm:$0xff]
  %v2258 = vld [vmem:[%s7 + $0x50] sm:$0xff]
  %v2259 = vld [vmem:[%s7 + $0x58] sm:$0xff]
  %v2260 = vld [vmem:[%s7 + $0x60] sm:$0xff]
  %v2261 = vld [vmem:[%s7 + $0x68] sm:$0xff]
  %v2262 = vld [vmem:[%s7 + $0x70] sm:$0xff]
  %v2263 = vld [vmem:[%s7 + $0x78] sm:$0xff]
  %v2264 = vld [vmem:[%s8] sm:$0xf]
  %v2265 = vld [vmem:[%s9] sm:$0x1]
  %v2282 = vrot.slane %v2225, 7
  %v2283 = vsel %vm2054, %v2282, %v2224
  %v2284 = vrot.slane %v2226, 6
  %v2285 = vsel %vm2056, %v2284, %v2283
  %v2286 = vrot.slane %v2227, 5
  %v2287 = vsel %vm2058, %v2286, %v2285
  %v2288 = vrot.slane %v2228, 4
  %v2289 = vsel %vm2060, %v2288, %v2287
  %v2290 = vrot.slane %v2229, 3
  %v2291 = vsel %vm2062, %v2290, %v2289
  %v2292 = vrot.slane %v2230, 2
  %v2293 = vsel %vm2064, %v2292, %v2291
  %v2294 = vrot.slane %v2231, 1
  %v2295 = vsel %vm2066, %v2294, %v2293
  %v2296 = vrot.slane %v2233, 7
  %v2297 = vsel %vm2054, %v2296, %v2232
  %v2298 = vrot.slane %v2234, 6
  %v2299 = vsel %vm2056, %v2298, %v2297
  %v2300 = vrot.slane %v2235, 5
  %v2301 = vsel %vm2058, %v2300, %v2299
  %v2302 = vrot.slane %v2236, 4
  %v2303 = vsel %vm2060, %v2302, %v2301
  %v2304 = vrot.slane %v2237, 3
  %v2305 = vsel %vm2062, %v2304, %v2303
  %v2306 = vrot.slane %v2238, 2
  %v2307 = vsel %vm2064, %v2306, %v2305
  %v2308 = vrot.slane %v2239, 1
  %v2309 = vsel %vm2066, %v2308, %v2307
  %v2310 = vsel %vm798, %v2295, 0
  %v2312 = vsel %vm798, %v2309, 0
  %2314 = vmatprep.subr.mxu0 %v2241
  %2315 = vmatpush1.msra.mxu0 %v2240
  %2316 = vmatprep.subr.mxu0 %v2243
  %2317 = vmatpush1.msra.mxu0 %v2242
  %2318 = vmatprep.subr.mxu0 %v2245
  %2319 = vmatpush1.msra.mxu0 %v2244
  %2320 = vmatprep.subr.mxu0 %v2247
  %2321 = vmatpush1.msra.mxu0 %v2246
  %2322 = vmatprep.subr.mxu0 0.0
  %2323 = vmatpush1.msra.mxu0 0.0
  %2324 = vmatprep.subr.mxu0 0.0
  %2325 = vmatpush1.msra.mxu0 0.0
  %2326 = vmatprep.subr.mxu0 0.0
  %2327 = vmatpush1.msra.mxu0 0.0
  %2328 = vmatprep.subr.mxu0 0.0
  %2329 = vmatpush1.msra.mxu0 0.0
  %2330 = vmatprep.subr.mxu0 0.0
  %2331 = vmatpush1.msra.mxu0 0.0
  %2332 = vmatprep.subr.mxu0 0.0
  %2333 = vmatpush1.msra.mxu0 0.0
  %2334 = vmatprep.subr.mxu0 0.0
  %2335 = vmatpush1.msra.mxu0 0.0
  %2336 = vmatprep.subr.mxu0 0.0
  %2337 = vmatpush1.msra.mxu0 0.0
  %2338 = vmatprep.subr.mxu0 0.0
  %2339 = vmatpush1.msra.mxu0 0.0
  %2340 = vmatprep.subr.mxu0 0.0
  %2341 = vmatpush1.msra.mxu0 0.0
  %2342 = vmatprep.subr.mxu0 0.0
  %2343 = vmatpush1.msra.mxu0 0.0
  %2344 = vmatprep.subr.mxu0 0.0
  %2345 = vmatpush1.msra.mxu0 0.0
  %2346 = vmatprep.subr.mxu0 0.0
  %2347 = vmatpush1.msra.mxu0 0.0
  %2348 = vmatprep.subr.mxu0 0.0
  %2349 = vmatpush1.msra.mxu0 0.0
  %2350 = vmatprep.subr.mxu0 0.0
  %2351 = vmatpush1.msra.mxu0 0.0
  %2352 = vmatprep.subr.mxu0 0.0
  %2353 = vmatpush1.msra.mxu0 0.0
  %2354 = vmatprep.subr.mxu0 0.0
  %2355 = vmatpush1.msra.mxu0 0.0
  %2356 = vmatprep.subr.mxu0 0.0
  %2357 = vmatpush1.msra.mxu0 0.0
  %2358 = vmatprep.subr.mxu0 0.0
  %2359 = vmatpush1.msra.mxu0 0.0
  %2360 = vmatprep.subr.mxu0 0.0
  %2361 = vmatpush1.msra.mxu0 0.0
  %2362 = vmatprep.subr.mxu0 0.0
  %2363 = vmatpush1.msra.mxu0 0.0
  %2364 = vmatprep.subr.mxu0 0.0
  %2365 = vmatpush1.msra.mxu0 0.0
  %2366 = vmatprep.subr.mxu0 0.0
  %2367 = vmatpush1.msra.mxu0 0.0
  %2368 = vmatprep.subr.mxu0 0.0
  %2369 = vmatpush1.msra.mxu0 0.0
  %2370 = vmatprep.subr.mxu0 0.0
  %2371 = vmatpush1.msra.mxu0 0.0
  %2372 = vmatprep.subr.mxu0 0.0
  %2373 = vmatpush1.msra.mxu0 0.0
  %2374 = vmatprep.subr.mxu0 0.0
  %2375 = vmatpush1.msra.mxu0 0.0
  %2376 = vmatprep.subr.mxu0 0.0
  %2377 = vmatpush1.msra.mxu0 0.0
  %2378 = vmatprep.mubr.f32.mxu0 0.0
  %2379 = vmatmul.mubr.f32.gmra.mrb[0].mxu0 %v2310
  %v2380 = vpop.f32.mrb[0].mxu0
  %v2381 = vadd.f32 0.0, %v2380
  %v2382 = vpop.f32.mrb[0].mxu0
  %v2383 = vadd.f32 0.0, %v2382
  %2384 = vmatprep.mubr.f32.mxu0 0.0
  %2385 = vmatmul.mubr.f32.gmra.mrb[0].mxu0 %v2312
  %v2386 = vpop.f32.mrb[0].mxu0
  %v2387 = vadd.f32 0.0, %v2386
  %v2388 = vpop.f32.mrb[0].mxu0
  %v2389 = vadd.f32 0.0, %v2388
  %2390 = vdwg.mxu0
  %v2393 = vcombine.high %v2383, %v2383
  %v2395 = vunpack.c.l.s4 1966171168
  %v2396 = vunpack.c.0.s8 %v2395
  %v2397 = vlaneseq
  %v2398 = vshrl.u32 %v2397, 7
  %v2399 = vsub.s32 %v2396, %v2398
  %v2400 = vrot.slane %v2383, %v2399
  %v2402 = vunpack.c.l.s4 1966171168
  %v2403 = vunpack.c.0.s8 %v2402
  %v2404 = vlaneseq
  %v2405 = vshrl.u32 %v2404, 7
  %v2406 = vsub.s32 %v2403, %v2405
  %v2407 = vrot.slane %v2393, %v2406
  %v2408 = vcombine.high %v2400, %v2400
  %v2409 = vcombine.high %v2407, %v2407
  %v2411 = vunpack.c.l.s4 1966171168
  %v2412 = vunpack.c.0.s8 %v2411
  %v2413 = vlaneseq
  %v2414 = vshrl.u32 %v2413, 7
  %v2415 = vsub.s32 %v2412, %v2414
  %v2416 = vrot.slane %v2400, %v2415
  %v2418 = vunpack.c.l.s4 1966171168
  %v2419 = vunpack.c.0.s8 %v2418
  %v2420 = vlaneseq
  %v2421 = vshrl.u32 %v2420, 7
  %v2422 = vsub.s32 %v2419, %v2421
  %v2423 = vrot.slane %v2407, %v2422
  %v2425 = vunpack.c.l.s4 1966171168
  %v2426 = vunpack.c.0.s8 %v2425
  %v2427 = vlaneseq
  %v2428 = vshrl.u32 %v2427, 7
  %v2429 = vsub.s32 %v2426, %v2428
  %v2430 = vrot.slane %v2408, %v2429
  %v2432 = vunpack.c.l.s4 1966171168
  %v2433 = vunpack.c.0.s8 %v2432
  %v2434 = vlaneseq
  %v2435 = vshrl.u32 %v2434, 7
  %v2436 = vsub.s32 %v2433, %v2435
  %v2437 = vrot.slane %v2409, %v2436
  %v2438 = vcombine.high %v2416, %v2416
  %v2439 = vcombine.high %v2423, %v2423
  %v2440 = vcombine.high %v2430, %v2430
  %v2441 = vcombine.high %v2437, %v2437
  %v2442 = vcombine.high %v2389, %v2389
  %v2444 = vunpack.c.l.s4 1966171168
  %v2445 = vunpack.c.0.s8 %v2444
  %v2446 = vlaneseq
  %v2447 = vshrl.u32 %v2446, 7
  %v2448 = vsub.s32 %v2445, %v2447
  %v2449 = vrot.slane %v2389, %v2448
  %v2451 = vunpack.c.l.s4 1966171168
  %v2452 = vunpack.c.0.s8 %v2451
  %v2453 = vlaneseq
  %v2454 = vshrl.u32 %v2453, 7
  %v2455 = vsub.s32 %v2452, %v2454
  %v2456 = vrot.slane %v2442, %v2455
  %v2457 = vcombine.high %v2449, %v2449
  %v2458 = vcombine.high %v2456, %v2456
  %v2460 = vunpack.c.l.s4 1966171168
  %v2461 = vunpack.c.0.s8 %v2460
  %v2462 = vlaneseq
  %v2463 = vshrl.u32 %v2462, 7
  %v2464 = vsub.s32 %v2461, %v2463
  %v2465 = vrot.slane %v2449, %v2464
  %v2467 = vunpack.c.l.s4 1966171168
  %v2468 = vunpack.c.0.s8 %v2467
  %v2469 = vlaneseq
  %v2470 = vshrl.u32 %v2469, 7
  %v2471 = vsub.s32 %v2468, %v2470
  %v2472 = vrot.slane %v2456, %v2471
  %v2474 = vunpack.c.l.s4 1966171168
  %v2475 = vunpack.c.0.s8 %v2474
  %v2476 = vlaneseq
  %v2477 = vshrl.u32 %v2476, 7
  %v2478 = vsub.s32 %v2475, %v2477
  %v2479 = vrot.slane %v2457, %v2478
  %v2481 = vunpack.c.l.s4 1966171168
  %v2482 = vunpack.c.0.s8 %v2481
  %v2483 = vlaneseq
  %v2484 = vshrl.u32 %v2483, 7
  %v2485 = vsub.s32 %v2482, %v2484
  %v2486 = vrot.slane %v2458, %v2485
  %v2487 = vcombine.high %v2465, %v2465
  %v2488 = vcombine.high %v2472, %v2472
  %v2489 = vcombine.high %v2479, %v2479
  %v2490 = vcombine.high %v2486, %v2486
  %v2491 = vlaneseq
  %v2492 = vshrl.u32 %v2491, 7
  %v2493 = vsub.s32 0, %v2492
  %v2494 = vrot.slane %v2416, %v2493
  %v2495 = vlaneseq
  %v2496 = vshrl.u32 %v2495, 7
  %v2497 = vsub.s32 0, %v2496
  %v2498 = vrot.slane %v2430, %v2497
  %v2499 = vlaneseq
  %v2500 = vshrl.u32 %v2499, 7
  %v2501 = vsub.s32 0, %v2500
  %v2502 = vrot.slane %v2438, %v2501
  %v2503 = vlaneseq
  %v2504 = vshrl.u32 %v2503, 7
  %v2505 = vsub.s32 0, %v2504
  %v2506 = vrot.slane %v2440, %v2505
  %v2507 = vlaneseq
  %v2508 = vshrl.u32 %v2507, 7
  %v2509 = vsub.s32 0, %v2508
  %v2510 = vrot.slane %v2423, %v2509
  %v2511 = vlaneseq
  %v2512 = vshrl.u32 %v2511, 7
  %v2513 = vsub.s32 0, %v2512
  %v2514 = vrot.slane %v2437, %v2513
  %v2515 = vlaneseq
  %v2516 = vshrl.u32 %v2515, 7
  %v2517 = vsub.s32 0, %v2516
  %v2518 = vrot.slane %v2439, %v2517
  %v2519 = vlaneseq
  %v2520 = vshrl.u32 %v2519, 7
  %v2521 = vsub.s32 0, %v2520
  %v2522 = vrot.slane %v2441, %v2521
  %v2523 = vlaneseq
  %v2524 = vshrl.u32 %v2523, 7
  %v2525 = vsub.s32 0, %v2524
  %v2526 = vrot.slane %v2465, %v2525
  %v2527 = vlaneseq
  %v2528 = vshrl.u32 %v2527, 7
  %v2529 = vsub.s32 0, %v2528
  %v2530 = vrot.slane %v2479, %v2529
  %v2531 = vlaneseq
  %v2532 = vshrl.u32 %v2531, 7
  %v2533 = vsub.s32 0, %v2532
  %v2534 = vrot.slane %v2487, %v2533
  %v2535 = vlaneseq
  %v2536 = vshrl.u32 %v2535, 7
  %v2537 = vsub.s32 0, %v2536
  %v2538 = vrot.slane %v2489, %v2537
  %v2539 = vlaneseq
  %v2540 = vshrl.u32 %v2539, 7
  %v2541 = vsub.s32 0, %v2540
  %v2542 = vrot.slane %v2472, %v2541
  %v2543 = vlaneseq
  %v2544 = vshrl.u32 %v2543, 7
  %v2545 = vsub.s32 0, %v2544
  %v2546 = vrot.slane %v2486, %v2545
  %v2547 = vlaneseq
  %v2548 = vshrl.u32 %v2547, 7
  %v2549 = vsub.s32 0, %v2548
  %v2550 = vrot.slane %v2488, %v2549
  %v2551 = vlaneseq
  %v2552 = vshrl.u32 %v2551, 7
  %v2553 = vsub.s32 0, %v2552
  %v2554 = vrot.slane %v2490, %v2553
  %v2571 = vadd.f32 %v2494, %v2381
  %v2572 = vadd.f32 %v2494, %v2387
  %v2573 = vadd.f32 %v2498, %v2381
  %v2574 = vadd.f32 %v2498, %v2387
  %v2575 = vadd.f32 %v2502, %v2381
  %v2576 = vadd.f32 %v2502, %v2387
  %v2577 = vadd.f32 %v2506, %v2381
  %v2578 = vadd.f32 %v2506, %v2387
  %v2579 = vadd.f32 %v2510, %v2381
  %v2580 = vadd.f32 %v2510, %v2387
  %v2581 = vadd.f32 %v2514, %v2381
  %v2582 = vadd.f32 %v2514, %v2387
  %v2583 = vadd.f32 %v2518, %v2381
  %v2584 = vadd.f32 %v2518, %v2387
  %v2585 = vadd.f32 %v2522, %v2381
  %v2586 = vadd.f32 %v2522, %v2387
  %v2587 = vadd.f32 %v2526, %v2381
  %v2588 = vadd.f32 %v2526, %v2387
  %v2589 = vadd.f32 %v2530, %v2381
  %v2590 = vadd.f32 %v2530, %v2387
  %v2591 = vadd.f32 %v2534, %v2381
  %v2592 = vadd.f32 %v2534, %v2387
  %v2593 = vadd.f32 %v2538, %v2381
  %v2594 = vadd.f32 %v2538, %v2387
  %v2595 = vadd.f32 %v2542, %v2381
  %v2596 = vadd.f32 %v2542, %v2387
  %v2597 = vadd.f32 %v2546, %v2381
  %v2598 = vadd.f32 %v2546, %v2387
  %v2599 = vadd.f32 %v2550, %v2381
  %v2600 = vadd.f32 %v2550, %v2387
  %v2601 = vadd.f32 %v2554, %v2381
  %v2602 = vadd.f32 %v2554, %v2387
  %vm2603 = vcmp.gt.f32.partialorder %v2571, 0.0
  %vm2604 = vcmp.gt.f32.partialorder %v2572, 0.0
  %vm2605 = vcmp.gt.f32.partialorder %v2573, 0.0
  %vm2606 = vcmp.gt.f32.partialorder %v2574, 0.0
  %vm2607 = vcmp.gt.f32.partialorder %v2575, 0.0
  %vm2608 = vcmp.gt.f32.partialorder %v2576, 0.0
  %vm2609 = vcmp.gt.f32.partialorder %v2577, 0.0
  %vm2610 = vcmp.gt.f32.partialorder %v2578, 0.0
  %vm2611 = vcmp.gt.f32.partialorder %v2579, 0.0
  %vm2612 = vcmp.gt.f32.partialorder %v2580, 0.0
  %vm2613 = vcmp.gt.f32.partialorder %v2581, 0.0
  %vm2614 = vcmp.gt.f32.partialorder %v2582, 0.0
  %vm2615 = vcmp.gt.f32.partialorder %v2583, 0.0
  %vm2616 = vcmp.gt.f32.partialorder %v2584, 0.0
  %vm2617 = vcmp.gt.f32.partialorder %v2585, 0.0
  %vm2618 = vcmp.gt.f32.partialorder %v2586, 0.0
  %vm2619 = vcmp.gt.f32.partialorder %v2587, 0.0
  %vm2620 = vcmp.gt.f32.partialorder %v2588, 0.0
  %vm2621 = vcmp.gt.f32.partialorder %v2589, 0.0
  %vm2622 = vcmp.gt.f32.partialorder %v2590, 0.0
  %vm2623 = vcmp.gt.f32.partialorder %v2591, 0.0
  %vm2624 = vcmp.gt.f32.partialorder %v2592, 0.0
  %vm2625 = vcmp.gt.f32.partialorder %v2593, 0.0
  %vm2626 = vcmp.gt.f32.partialorder %v2594, 0.0
  %vm2627 = vcmp.gt.f32.partialorder %v2595, 0.0
  %vm2628 = vcmp.gt.f32.partialorder %v2596, 0.0
  %vm2629 = vcmp.gt.f32.partialorder %v2597, 0.0
  %vm2630 = vcmp.gt.f32.partialorder %v2598, 0.0
  %vm2631 = vcmp.gt.f32.partialorder %v2599, 0.0
  %vm2632 = vcmp.gt.f32.partialorder %v2600, 0.0
  %vm2633 = vcmp.gt.f32.partialorder %v2601, 0.0
  %vm2634 = vcmp.gt.f32.partialorder %v2602, 0.0
  %v2635 = vmul.f32 %v2571, 0.2
  %v2636 = vmul.f32 %v2572, 0.2
  %v2637 = vmul.f32 %v2573, 0.2
  %v2638 = vmul.f32 %v2574, 0.2
  %v2639 = vmul.f32 %v2575, 0.2
  %v2640 = vmul.f32 %v2576, 0.2
  %v2641 = vmul.f32 %v2577, 0.2
  %v2642 = vmul.f32 %v2578, 0.2
  %v2643 = vmul.f32 %v2579, 0.2
  %v2644 = vmul.f32 %v2580, 0.2
  %v2645 = vmul.f32 %v2581, 0.2
  %v2646 = vmul.f32 %v2582, 0.2
  %v2647 = vmul.f32 %v2583, 0.2
  %v2648 = vmul.f32 %v2584, 0.2
  %v2649 = vmul.f32 %v2585, 0.2
  %v2650 = vmul.f32 %v2586, 0.2
  %v2651 = vmul.f32 %v2587, 0.2
  %v2652 = vmul.f32 %v2588, 0.2
  %v2653 = vmul.f32 %v2589, 0.2
  %v2654 = vmul.f32 %v2590, 0.2
  %v2655 = vmul.f32 %v2591, 0.2
  %v2656 = vmul.f32 %v2592, 0.2
  %v2657 = vmul.f32 %v2593, 0.2
  %v2658 = vmul.f32 %v2594, 0.2
  %v2659 = vmul.f32 %v2595, 0.2
  %v2660 = vmul.f32 %v2596, 0.2
  %v2661 = vmul.f32 %v2597, 0.2
  %v2662 = vmul.f32 %v2598, 0.2
  %v2663 = vmul.f32 %v2599, 0.2
  %v2664 = vmul.f32 %v2600, 0.2
  %v2665 = vmul.f32 %v2601, 0.2
  %v2666 = vmul.f32 %v2602, 0.2
  %v2667 = vsel %vm2603, %v2571, %v2635
  %v2668 = vsel %vm2604, %v2572, %v2636
  %v2669 = vsel %vm2605, %v2573, %v2637
  %v2670 = vsel %vm2606, %v2574, %v2638
  %v2671 = vsel %vm2607, %v2575, %v2639
  %v2672 = vsel %vm2608, %v2576, %v2640
  %v2673 = vsel %vm2609, %v2577, %v2641
  %v2674 = vsel %vm2610, %v2578, %v2642
  %v2675 = vsel %vm2611, %v2579, %v2643
  %v2676 = vsel %vm2612, %v2580, %v2644
  %v2677 = vsel %vm2613, %v2581, %v2645
  %v2678 = vsel %vm2614, %v2582, %v2646
  %v2679 = vsel %vm2615, %v2583, %v2647
  %v2680 = vsel %vm2616, %v2584, %v2648
  %v2681 = vsel %vm2617, %v2585, %v2649
  %v2682 = vsel %vm2618, %v2586, %v2650
  %v2683 = vsel %vm2619, %v2587, %v2651
  %v2684 = vsel %vm2620, %v2588, %v2652
  %v2685 = vsel %vm2621, %v2589, %v2653
  %v2686 = vsel %vm2622, %v2590, %v2654
  %v2687 = vsel %vm2623, %v2591, %v2655
  %v2688 = vsel %vm2624, %v2592, %v2656
  %v2689 = vsel %vm2625, %v2593, %v2657
  %v2690 = vsel %vm2626, %v2594, %v2658
  %v2691 = vsel %vm2627, %v2595, %v2659
  %v2692 = vsel %vm2628, %v2596, %v2660
  %v2693 = vsel %vm2629, %v2597, %v2661
  %v2694 = vsel %vm2630, %v2598, %v2662
  %v2695 = vsel %vm2631, %v2599, %v2663
  %v2696 = vsel %vm2632, %v2600, %v2664
  %v2697 = vsel %vm2633, %v2601, %v2665
  %v2698 = vsel %vm2634, %v2602, %v2666
  %2699 = vmatprep.subr.mxu0 0.0
  %2700 = vmatpush1.msra.mxu0 %v2248
  %2701 = vmatprep.subr.mxu0 0.0
  %2702 = vmatpush1.msra.mxu0 %v2249
  %2703 = vmatprep.subr.mxu0 0.0
  %2704 = vmatpush1.msra.mxu0 %v2250
  %2705 = vmatprep.subr.mxu0 0.0
  %2706 = vmatpush1.msra.mxu0 %v2251
  %2707 = vmatprep.subr.mxu0 0.0
  %2708 = vmatpush1.msra.mxu0 %v2252
  %2709 = vmatprep.subr.mxu0 0.0
  %2710 = vmatpush1.msra.mxu0 %v2253
  %2711 = vmatprep.subr.mxu0 0.0
  %2712 = vmatpush1.msra.mxu0 %v2254
  %2713 = vmatprep.subr.mxu0 0.0
  %2714 = vmatpush1.msra.mxu0 %v2255
  %2715 = vmatprep.subr.mxu0 0.0
  %2716 = vmatpush1.msra.mxu0 %v2256
  %2717 = vmatprep.subr.mxu0 0.0
  %2718 = vmatpush1.msra.mxu0 %v2257
  %2719 = vmatprep.subr.mxu0 0.0
  %2720 = vmatpush1.msra.mxu0 %v2258
  %2721 = vmatprep.subr.mxu0 0.0
  %2722 = vmatpush1.msra.mxu0 %v2259
  %2723 = vmatprep.subr.mxu0 0.0
  %2724 = vmatpush1.msra.mxu0 %v2260
  %2725 = vmatprep.subr.mxu0 0.0
  %2726 = vmatpush1.msra.mxu0 %v2261
  %2727 = vmatprep.subr.mxu0 0.0
  %2728 = vmatpush1.msra.mxu0 %v2262
  %2729 = vmatprep.subr.mxu0 0.0
  %2730 = vmatpush1.msra.mxu0 %v2263
  %2731 = vmatprep.subr.mxu0 0.0
  %2732 = vmatpush1.msra.mxu0 0.0
  %2733 = vmatprep.subr.mxu0 0.0
  %2734 = vmatpush1.msra.mxu0 0.0
  %2735 = vmatprep.subr.mxu0 0.0
  %2736 = vmatpush1.msra.mxu0 0.0
  %2737 = vmatprep.subr.mxu0 0.0
  %2738 = vmatpush1.msra.mxu0 0.0
  %2739 = vmatprep.subr.mxu0 0.0
  %2740 = vmatpush1.msra.mxu0 0.0
  %2741 = vmatprep.subr.mxu0 0.0
  %2742 = vmatpush1.msra.mxu0 0.0
  %2743 = vmatprep.subr.mxu0 0.0
  %2744 = vmatpush1.msra.mxu0 0.0
  %2745 = vmatprep.subr.mxu0 0.0
  %2746 = vmatpush1.msra.mxu0 0.0
  %2747 = vmatprep.subr.mxu0 0.0
  %2748 = vmatpush1.msra.mxu0 0.0
  %2749 = vmatprep.subr.mxu0 0.0
  %2750 = vmatpush1.msra.mxu0 0.0
  %2751 = vmatprep.subr.mxu0 0.0
  %2752 = vmatpush1.msra.mxu0 0.0
  %2753 = vmatprep.subr.mxu0 0.0
  %2754 = vmatpush1.msra.mxu0 0.0
  %2755 = vmatprep.subr.mxu0 0.0
  %2756 = vmatpush1.msra.mxu0 0.0
  %2757 = vmatprep.subr.mxu0 0.0
  %2758 = vmatpush1.msra.mxu0 0.0
  %2759 = vmatprep.subr.mxu0 0.0
  %2760 = vmatpush1.msra.mxu0 0.0
  %2761 = vmatprep.subr.mxu0 0.0
  %2762 = vmatpush1.msra.mxu0 0.0
  %2763 = vmatprep.mubr.f32.mxu0 0.0
  %2764 = vmatmul.mubr.f32.gmra.mrb[0].mxu0 %v2667
  %v2765 = vpop.f32.mrb[0].mxu0
  %v2766 = vadd.f32 0.0, %v2765
  %v2767 = vpop.f32.mrb[0].mxu0
  %2768 = vmatprep.mubr.f32.mxu0 0.0
  %2769 = vmatmul.mubr.f32.gmra.mrb[0].mxu0 %v2668
  %v2770 = vpop.f32.mrb[0].mxu0
  %v2771 = vadd.f32 0.0, %v2770
  %v2772 = vpop.f32.mrb[0].mxu0
  %2773 = vmatprep.mubr.f32.mxu0 0.0
  %2774 = vmatmul.mubr.f32.gmra.mrb[0].mxu0 %v2669
  %v2775 = vpop.f32.mrb[0].mxu0
  %v2776 = vadd.f32 0.0, %v2775
  %v2777 = vpop.f32.mrb[0].mxu0
  %2778 = vmatprep.mubr.f32.mxu0 0.0
  %2779 = vmatmul.mubr.f32.gmra.mrb[0].mxu0 %v2670
  %v2780 = vpop.f32.mrb[0].mxu0
  %v2781 = vadd.f32 0.0, %v2780
  %v2782 = vpop.f32.mrb[0].mxu0
  %2783 = vmatprep.mubr.f32.mxu0 0.0
  %2784 = vmatmul.mubr.f32.gmra.mrb[0].mxu0 %v2671
  %v2785 = vpop.f32.mrb[0].mxu0
  %v2786 = vadd.f32 0.0, %v2785
  %v2787 = vpop.f32.mrb[0].mxu0
  %2788 = vmatprep.mubr.f32.mxu0 0.0
  %2789 = vmatmul.mubr.f32.gmra.mrb[0].mxu0 %v2672
  %v2790 = vpop.f32.mrb[0].mxu0
  %v2791 = vadd.f32 0.0, %v2790
  %v2792 = vpop.f32.mrb[0].mxu0
  %2793 = vmatprep.mubr.f32.mxu0 0.0
  %2794 = vmatmul.mubr.f32.gmra.mrb[0].mxu0 %v2673
  %v2795 = vpop.f32.mrb[0].mxu0
  %v2796 = vadd.f32 0.0, %v2795
  %v2797 = vpop.f32.mrb[0].mxu0
  %2798 = vmatprep.mubr.f32.mxu0 0.0
  %2799 = vmatmul.mubr.f32.gmra.mrb[0].mxu0 %v2674
  %v2800 = vpop.f32.mrb[0].mxu0
  %v2801 = vadd.f32 0.0, %v2800
  %v2802 = vpop.f32.mrb[0].mxu0
  %2803 = vmatprep.mubr.f32.mxu0 0.0
  %2804 = vmatmul.mubr.f32.gmra.mrb[0].mxu0 %v2675
  %v2805 = vpop.f32.mrb[0].mxu0
  %v2806 = vadd.f32 0.0, %v2805
  %v2807 = vpop.f32.mrb[0].mxu0
  %2808 = vmatprep.mubr.f32.mxu0 0.0
  %2809 = vmatmul.mubr.f32.gmra.mrb[0].mxu0 %v2676
  %v2810 = vpop.f32.mrb[0].mxu0
  %v2811 = vadd.f32 0.0, %v2810
  %v2812 = vpop.f32.mrb[0].mxu0
  %2813 = vmatprep.mubr.f32.mxu0 0.0
  %2814 = vmatmul.mubr.f32.gmra.mrb[0].mxu0 %v2677
  %v2815 = vpop.f32.mrb[0].mxu0
  %v2816 = vadd.f32 0.0, %v2815
  %v2817 = vpop.f32.mrb[0].mxu0
  %2818 = vmatprep.mubr.f32.mxu0 0.0
  %2819 = vmatmul.mubr.f32.gmra.mrb[0].mxu0 %v2678
  %v2820 = vpop.f32.mrb[0].mxu0
  %v2821 = vadd.f32 0.0, %v2820
  %v2822 = vpop.f32.mrb[0].mxu0
  %2823 = vmatprep.mubr.f32.mxu0 0.0
  %2824 = vmatmul.mubr.f32.gmra.mrb[0].mxu0 %v2679
  %v2825 = vpop.f32.mrb[0].mxu0
  %v2826 = vadd.f32 0.0, %v2825
  %v2827 = vpop.f32.mrb[0].mxu0
  %2828 = vmatprep.mubr.f32.mxu0 0.0
  %2829 = vmatmul.mubr.f32.gmra.mrb[0].mxu0 %v2680
  %v2830 = vpop.f32.mrb[0].mxu0
  %v2831 = vadd.f32 0.0, %v2830
  %v2832 = vpop.f32.mrb[0].mxu0
  %2833 = vmatprep.mubr.f32.mxu0 0.0
  %2834 = vmatmul.mubr.f32.gmra.mrb[0].mxu0 %v2681
  %v2835 = vpop.f32.mrb[0].mxu0
  %v2836 = vadd.f32 0.0, %v2835
  %v2837 = vpop.f32.mrb[0].mxu0
  %2838 = vmatprep.mubr.f32.mxu0 0.0
  %2839 = vmatmul.mubr.f32.gmra.mrb[0].mxu0 %v2682
  %v2840 = vpop.f32.mrb[0].mxu0
  %v2841 = vadd.f32 0.0, %v2840
  %v2842 = vpop.f32.mrb[0].mxu0
  %2843 = vmatprep.mubr.f32.mxu0 0.0
  %2844 = vmatmul.mubr.f32.gmra.mrb[0].mxu0 %v2683
  %v2845 = vpop.f32.mrb[0].mxu0
  %v2846 = vadd.f32 0.0, %v2845
  %v2847 = vpop.f32.mrb[0].mxu0
  %2848 = vmatprep.mubr.f32.mxu0 0.0
  %2849 = vmatmul.mubr.f32.gmra.mrb[0].mxu0 %v2684
  %v2850 = vpop.f32.mrb[0].mxu0
  %v2851 = vadd.f32 0.0, %v2850
  %v2852 = vpop.f32.mrb[0].mxu0
  %2853 = vmatprep.mubr.f32.mxu0 0.0
  %2854 = vmatmul.mubr.f32.gmra.mrb[0].mxu0 %v2685
  %v2855 = vpop.f32.mrb[0].mxu0
  %v2856 = vadd.f32 0.0, %v2855
  %v2857 = vpop.f32.mrb[0].mxu0
  %2858 = vmatprep.mubr.f32.mxu0 0.0
  %2859 = vmatmul.mubr.f32.gmra.mrb[0].mxu0 %v2686
  %v2860 = vpop.f32.mrb[0].mxu0
  %v2861 = vadd.f32 0.0, %v2860
  %v2862 = vpop.f32.mrb[0].mxu0
  %2863 = vmatprep.mubr.f32.mxu0 0.0
  %2864 = vmatmul.mubr.f32.gmra.mrb[0].mxu0 %v2687
  %v2865 = vpop.f32.mrb[0].mxu0
  %v2866 = vadd.f32 0.0, %v2865
  %v2867 = vpop.f32.mrb[0].mxu0
  %2868 = vmatprep.mubr.f32.mxu0 0.0
  %2869 = vmatmul.mubr.f32.gmra.mrb[0].mxu0 %v2688
  %v2870 = vpop.f32.mrb[0].mxu0
  %v2871 = vadd.f32 0.0, %v2870
  %v2872 = vpop.f32.mrb[0].mxu0
  %2873 = vmatprep.mubr.f32.mxu0 0.0
  %2874 = vmatmul.mubr.f32.gmra.mrb[0].mxu0 %v2689
  %v2875 = vpop.f32.mrb[0].mxu0
  %v2876 = vadd.f32 0.0, %v2875
  %v2877 = vpop.f32.mrb[0].mxu0
  %2878 = vmatprep.mubr.f32.mxu0 0.0
  %2879 = vmatmul.mubr.f32.gmra.mrb[0].mxu0 %v2690
  %v2880 = vpop.f32.mrb[0].mxu0
  %v2881 = vadd.f32 0.0, %v2880
  %v2882 = vpop.f32.mrb[0].mxu0
  %2883 = vmatprep.mubr.f32.mxu0 0.0
  %2884 = vmatmul.mubr.f32.gmra.mrb[0].mxu0 %v2691
  %v2885 = vpop.f32.mrb[0].mxu0
  %v2886 = vadd.f32 0.0, %v2885
  %v2887 = vpop.f32.mrb[0].mxu0
  %2888 = vmatprep.mubr.f32.mxu0 0.0
  %2889 = vmatmul.mubr.f32.gmra.mrb[0].mxu0 %v2692
  %v2890 = vpop.f32.mrb[0].mxu0
  %v2891 = vadd.f32 0.0, %v2890
  %v2892 = vpop.f32.mrb[0].mxu0
  %2893 = vmatprep.mubr.f32.mxu0 0.0
  %2894 = vmatmul.mubr.f32.gmra.mrb[0].mxu0 %v2693
  %v2895 = vpop.f32.mrb[0].mxu0
  %v2896 = vadd.f32 0.0, %v2895
  %v2897 = vpop.f32.mrb[0].mxu0
  %2898 = vmatprep.mubr.f32.mxu0 0.0
  %2899 = vmatmul.mubr.f32.gmra.mrb[0].mxu0 %v2694
  %v2900 = vpop.f32.mrb[0].mxu0
  %v2901 = vadd.f32 0.0, %v2900
  %v2902 = vpop.f32.mrb[0].mxu0
  %2903 = vmatprep.mubr.f32.mxu0 0.0
  %2904 = vmatmul.mubr.f32.gmra.mrb[0].mxu0 %v2695
  %v2905 = vpop.f32.mrb[0].mxu0
  %v2906 = vadd.f32 0.0, %v2905
  %v2907 = vpop.f32.mrb[0].mxu0
  %2908 = vmatprep.mubr.f32.mxu0 0.0
  %2909 = vmatmul.mubr.f32.gmra.mrb[0].mxu0 %v2696
  %v2910 = vpop.f32.mrb[0].mxu0
  %v2911 = vadd.f32 0.0, %v2910
  %v2912 = vpop.f32.mrb[0].mxu0
  %2913 = vmatprep.mubr.f32.mxu0 0.0
  %2914 = vmatmul.mubr.f32.gmra.mrb[0].mxu0 %v2697
  %v2915 = vpop.f32.mrb[0].mxu0
  %v2916 = vadd.f32 0.0, %v2915
  %v2917 = vpop.f32.mrb[0].mxu0
  %2918 = vmatprep.mubr.f32.mxu0 0.0
  %2919 = vmatmul.mubr.f32.gmra.mrb[0].mxu0 %v2698
  %v2920 = vpop.f32.mrb[0].mxu0
  %v2921 = vadd.f32 0.0, %v2920
  %v2922 = vpop.f32.mrb[0].mxu0
  %2923 = vdwg.mxu0
  %v2924 = vadd.f32 %v2766, %v265
  %v2925 = vadd.f32 %v2771, %v266
  %v2926 = vadd.f32 %v2776, %v267
  %v2927 = vadd.f32 %v2781, %v268
  %v2928 = vadd.f32 %v2786, %v269
  %v2929 = vadd.f32 %v2791, %v270
  %v2930 = vadd.f32 %v2796, %v271
  %v2931 = vadd.f32 %v2801, %v272
  %v2932 = vadd.f32 %v2806, %v273
  %v2933 = vadd.f32 %v2811, %v274
  %v2934 = vadd.f32 %v2816, %v275
  %v2935 = vadd.f32 %v2821, %v276
  %v2936 = vadd.f32 %v2826, %v277
  %v2937 = vadd.f32 %v2831, %v278
  %v2938 = vadd.f32 %v2836, %v279
  %v2939 = vadd.f32 %v2841, %v280
  %v2940 = vadd.f32 %v2846, %v281
  %v2941 = vadd.f32 %v2851, %v282
  %v2942 = vadd.f32 %v2856, %v283
  %v2943 = vadd.f32 %v2861, %v284
  %v2944 = vadd.f32 %v2866, %v285
  %v2945 = vadd.f32 %v2871, %v286
  %v2946 = vadd.f32 %v2876, %v287
  %v2947 = vadd.f32 %v2881, %v288
  %v2948 = vadd.f32 %v2886, %v289
  %v2949 = vadd.f32 %v2891, %v290
  %v2950 = vadd.f32 %v2896, %v291
  %v2951 = vadd.f32 %v2901, %v292
  %v2952 = vadd.f32 %v2906, %v293
  %v2953 = vadd.f32 %v2911, %v294
  %v2954 = vadd.f32 %v2916, %v295
  %v2955 = vadd.f32 %v2921, %v296
  %v2956 = vsel %vm1120, %v2924, -inf
  %v2957 = vsel %vm1120, %v2925, -inf
  %v2958 = vmax.f32 %v2956, %v2957
  %v2959 = vrot.slane %v2958, 4
  %v2960 = vmax.f32 %v2958, %v2959
  %v2961 = vrot.slane %v2960, 2
  %v2962 = vmax.f32 %v2960, %v2961
  %v2963 = vrot.slane %v2962, 1
  %v2964 = vmax.f32 %v2962, %v2963
  %v2965 = vsel %vm1120, %v2926, -inf
  %v2966 = vsel %vm1120, %v2927, -inf
  %v2967 = vmax.f32 %v2965, %v2966
  %v2968 = vrot.slane %v2967, 4
  %v2969 = vmax.f32 %v2967, %v2968
  %v2970 = vrot.slane %v2969, 2
  %v2971 = vmax.f32 %v2969, %v2970
  %v2972 = vrot.slane %v2971, 1
  %v2973 = vmax.f32 %v2971, %v2972
  %v2974 = vsel %vm1120, %v2928, -inf
  %v2975 = vsel %vm1120, %v2929, -inf
  %v2976 = vmax.f32 %v2974, %v2975
  %v2977 = vrot.slane %v2976, 4
  %v2978 = vmax.f32 %v2976, %v2977
  %v2979 = vrot.slane %v2978, 2
  %v2980 = vmax.f32 %v2978, %v2979
  %v2981 = vrot.slane %v2980, 1
  %v2982 = vmax.f32 %v2980, %v2981
  %v2983 = vsel %vm1120, %v2930, -inf
  %v2984 = vsel %vm1120, %v2931, -inf
  %v2985 = vmax.f32 %v2983, %v2984
  %v2986 = vrot.slane %v2985, 4
  %v2987 = vmax.f32 %v2985, %v2986
  %v2988 = vrot.slane %v2987, 2
  %v2989 = vmax.f32 %v2987, %v2988
  %v2990 = vrot.slane %v2989, 1
  %v2991 = vmax.f32 %v2989, %v2990
  %v2992 = vsel %vm1120, %v2932, -inf
  %v2993 = vsel %vm1120, %v2933, -inf
  %v2994 = vmax.f32 %v2992, %v2993
  %v2995 = vrot.slane %v2994, 4
  %v2996 = vmax.f32 %v2994, %v2995
  %v2997 = vrot.slane %v2996, 2
  %v2998 = vmax.f32 %v2996, %v2997
  %v2999 = vrot.slane %v2998, 1
  %v3000 = vmax.f32 %v2998, %v2999
  %v3001 = vsel %vm1120, %v2934, -inf
  %v3002 = vsel %vm1120, %v2935, -inf
  %v3003 = vmax.f32 %v3001, %v3002
  %v3004 = vrot.slane %v3003, 4
  %v3005 = vmax.f32 %v3003, %v3004
  %v3006 = vrot.slane %v3005, 2
  %v3007 = vmax.f32 %v3005, %v3006
  %v3008 = vrot.slane %v3007, 1
  %v3009 = vmax.f32 %v3007, %v3008
  %v3010 = vsel %vm1120, %v2936, -inf
  %v3011 = vsel %vm1120, %v2937, -inf
  %v3012 = vmax.f32 %v3010, %v3011
  %v3013 = vrot.slane %v3012, 4
  %v3014 = vmax.f32 %v3012, %v3013
  %v3015 = vrot.slane %v3014, 2
  %v3016 = vmax.f32 %v3014, %v3015
  %v3017 = vrot.slane %v3016, 1
  %v3018 = vmax.f32 %v3016, %v3017
  %v3019 = vsel %vm1120, %v2938, -inf
  %v3020 = vsel %vm1120, %v2939, -inf
  %v3021 = vmax.f32 %v3019, %v3020
  %v3022 = vrot.slane %v3021, 4
  %v3023 = vmax.f32 %v3021, %v3022
  %v3024 = vrot.slane %v3023, 2
  %v3025 = vmax.f32 %v3023, %v3024
  %v3026 = vrot.slane %v3025, 1
  %v3027 = vmax.f32 %v3025, %v3026
  %v3028 = vsel %vm1120, %v2940, -inf
  %v3029 = vsel %vm1120, %v2941, -inf
  %v3030 = vmax.f32 %v3028, %v3029
  %v3031 = vrot.slane %v3030, 4
  %v3032 = vmax.f32 %v3030, %v3031
  %v3033 = vrot.slane %v3032, 2
  %v3034 = vmax.f32 %v3032, %v3033
  %v3035 = vrot.slane %v3034, 1
  %v3036 = vmax.f32 %v3034, %v3035
  %v3037 = vsel %vm1120, %v2942, -inf
  %v3038 = vsel %vm1120, %v2943, -inf
  %v3039 = vmax.f32 %v3037, %v3038
  %v3040 = vrot.slane %v3039, 4
  %v3041 = vmax.f32 %v3039, %v3040
  %v3042 = vrot.slane %v3041, 2
  %v3043 = vmax.f32 %v3041, %v3042
  %v3044 = vrot.slane %v3043, 1
  %v3045 = vmax.f32 %v3043, %v3044
  %v3046 = vsel %vm1120, %v2944, -inf
  %v3047 = vsel %vm1120, %v2945, -inf
  %v3048 = vmax.f32 %v3046, %v3047
  %v3049 = vrot.slane %v3048, 4
  %v3050 = vmax.f32 %v3048, %v3049
  %v3051 = vrot.slane %v3050, 2
  %v3052 = vmax.f32 %v3050, %v3051
  %v3053 = vrot.slane %v3052, 1
  %v3054 = vmax.f32 %v3052, %v3053
  %v3055 = vsel %vm1120, %v2946, -inf
  %v3056 = vsel %vm1120, %v2947, -inf
  %v3057 = vmax.f32 %v3055, %v3056
  %v3058 = vrot.slane %v3057, 4
  %v3059 = vmax.f32 %v3057, %v3058
  %v3060 = vrot.slane %v3059, 2
  %v3061 = vmax.f32 %v3059, %v3060
  %v3062 = vrot.slane %v3061, 1
  %v3063 = vmax.f32 %v3061, %v3062
  %v3064 = vsel %vm1120, %v2948, -inf
  %v3065 = vsel %vm1120, %v2949, -inf
  %v3066 = vmax.f32 %v3064, %v3065
  %v3067 = vrot.slane %v3066, 4
  %v3068 = vmax.f32 %v3066, %v3067
  %v3069 = vrot.slane %v3068, 2
  %v3070 = vmax.f32 %v3068, %v3069
  %v3071 = vrot.slane %v3070, 1
  %v3072 = vmax.f32 %v3070, %v3071
  %v3073 = vsel %vm1120, %v2950, -inf
  %v3074 = vsel %vm1120, %v2951, -inf
  %v3075 = vmax.f32 %v3073, %v3074
  %v3076 = vrot.slane %v3075, 4
  %v3077 = vmax.f32 %v3075, %v3076
  %v3078 = vrot.slane %v3077, 2
  %v3079 = vmax.f32 %v3077, %v3078
  %v3080 = vrot.slane %v3079, 1
  %v3081 = vmax.f32 %v3079, %v3080
  %v3082 = vsel %vm1120, %v2952, -inf
  %v3083 = vsel %vm1120, %v2953, -inf
  %v3084 = vmax.f32 %v3082, %v3083
  %v3085 = vrot.slane %v3084, 4
  %v3086 = vmax.f32 %v3084, %v3085
  %v3087 = vrot.slane %v3086, 2
  %v3088 = vmax.f32 %v3086, %v3087
  %v3089 = vrot.slane %v3088, 1
  %v3090 = vmax.f32 %v3088, %v3089
  %v3091 = vsel %vm1120, %v2954, -inf
  %v3092 = vsel %vm1120, %v2955, -inf
  %v3093 = vmax.f32 %v3091, %v3092
  %v3094 = vrot.slane %v3093, 4
  %v3095 = vmax.f32 %v3093, %v3094
  %v3096 = vrot.slane %v3095, 2
  %v3097 = vmax.f32 %v3095, %v3096
  %v3098 = vrot.slane %v3097, 1
  %v3099 = vmax.f32 %v3097, %v3098
  %v3100 = vsub.f32 %v2924, %v2964
  %v3101 = vsub.f32 %v2925, %v2964
  %v3102 = vsub.f32 %v2926, %v2973
  %v3103 = vsub.f32 %v2927, %v2973
  %v3104 = vsub.f32 %v2928, %v2982
  %v3105 = vsub.f32 %v2929, %v2982
  %v3106 = vsub.f32 %v2930, %v2991
  %v3107 = vsub.f32 %v2931, %v2991
  %v3108 = vsub.f32 %v2932, %v3000
  %v3109 = vsub.f32 %v2933, %v3000
  %v3110 = vsub.f32 %v2934, %v3009
  %v3111 = vsub.f32 %v2935, %v3009
  %v3112 = vsub.f32 %v2936, %v3018
  %v3113 = vsub.f32 %v2937, %v3018
  %v3114 = vsub.f32 %v2938, %v3027
  %v3115 = vsub.f32 %v2939, %v3027
  %v3116 = vsub.f32 %v2940, %v3036
  %v3117 = vsub.f32 %v2941, %v3036
  %v3118 = vsub.f32 %v2942, %v3045
  %v3119 = vsub.f32 %v2943, %v3045
  %v3120 = vsub.f32 %v2944, %v3054
  %v3121 = vsub.f32 %v2945, %v3054
  %v3122 = vsub.f32 %v2946, %v3063
  %v3123 = vsub.f32 %v2947, %v3063
  %v3124 = vsub.f32 %v2948, %v3072
  %v3125 = vsub.f32 %v2949, %v3072
  %v3126 = vsub.f32 %v2950, %v3081
  %v3127 = vsub.f32 %v2951, %v3081
  %v3128 = vsub.f32 %v2952, %v3090
  %v3129 = vsub.f32 %v2953, %v3090
  %v3130 = vsub.f32 %v2954, %v3099
  %v3131 = vsub.f32 %v2955, %v3099
  %v3132 = vmul.f32 %v3100, 1.442695
  %v3133 = vpow.pop %v3132
  %v3134 = vmul.f32 %v3101, 1.442695
  %v3135 = vpow.pop %v3134
  %v3136 = vmul.f32 %v3102, 1.442695
  %v3137 = vpow.pop %v3136
  %v3138 = vmul.f32 %v3103, 1.442695
  %v3139 = vpow.pop %v3138
  %v3140 = vmul.f32 %v3104, 1.442695
  %v3141 = vpow.pop %v3140
  %v3142 = vmul.f32 %v3105, 1.442695
  %v3143 = vpow.pop %v3142
  %v3144 = vmul.f32 %v3106, 1.442695
  %v3145 = vpow.pop %v3144
  %v3146 = vmul.f32 %v3107, 1.442695
  %v3147 = vpow.pop %v3146
  %v3148 = vmul.f32 %v3108, 1.442695
  %v3149 = vpow.pop %v3148
  %v3150 = vmul.f32 %v3109, 1.442695
  %v3151 = vpow.pop %v3150
  %v3152 = vmul.f32 %v3110, 1.442695
  %v3153 = vpow.pop %v3152
  %v3154 = vmul.f32 %v3111, 1.442695
  %v3155 = vpow.pop %v3154
  %v3156 = vmul.f32 %v3112, 1.442695
  %v3157 = vpow.pop %v3156
  %v3158 = vmul.f32 %v3113, 1.442695
  %v3159 = vpow.pop %v3158
  %v3160 = vmul.f32 %v3114, 1.442695
  %v3161 = vpow.pop %v3160
  %v3162 = vmul.f32 %v3115, 1.442695
  %v3163 = vpow.pop %v3162
  %v3164 = vmul.f32 %v3116, 1.442695
  %v3165 = vpow.pop %v3164
  %v3166 = vmul.f32 %v3117, 1.442695
  %v3167 = vpow.pop %v3166
  %v3168 = vmul.f32 %v3118, 1.442695
  %v3169 = vpow.pop %v3168
  %v3170 = vmul.f32 %v3119, 1.442695
  %v3171 = vpow.pop %v3170
  %v3172 = vmul.f32 %v3120, 1.442695
  %v3173 = vpow.pop %v3172
  %v3174 = vmul.f32 %v3121, 1.442695
  %v3175 = vpow.pop %v3174
  %v3176 = vmul.f32 %v3122, 1.442695
  %v3177 = vpow.pop %v3176
  %v3178 = vmul.f32 %v3123, 1.442695
  %v3179 = vpow.pop %v3178
  %v3180 = vmul.f32 %v3124, 1.442695
  %v3181 = vpow.pop %v3180
  %v3182 = vmul.f32 %v3125, 1.442695
  %v3183 = vpow.pop %v3182
  %v3184 = vmul.f32 %v3126, 1.442695
  %v3185 = vpow.pop %v3184
  %v3186 = vmul.f32 %v3127, 1.442695
  %v3187 = vpow.pop %v3186
  %v3188 = vmul.f32 %v3128, 1.442695
  %v3189 = vpow.pop %v3188
  %v3190 = vmul.f32 %v3129, 1.442695
  %v3191 = vpow.pop %v3190
  %v3192 = vmul.f32 %v3130, 1.442695
  %v3193 = vpow.pop %v3192
  %v3194 = vmul.f32 %v3131, 1.442695
  %v3195 = vpow.pop %v3194
  %v3196 = vsel %vm1120, %v3133, 0.0
  %v3197 = vsel %vm1120, %v3135, 0.0
  %v3198 = vadd.f32 %v3196, %v3197
  %v3199 = vrot.slane %v3198, 4
  %v3200 = vadd.f32 %v3198, %v3199
  %v3201 = vrot.slane %v3200, 2
  %v3202 = vadd.f32 %v3200, %v3201
  %v3203 = vrot.slane %v3202, 1
  %v3204 = vadd.f32 %v3202, %v3203
  %v3205 = vsel %vm1120, %v3137, 0.0
  %v3206 = vsel %vm1120, %v3139, 0.0
  %v3207 = vadd.f32 %v3205, %v3206
  %v3208 = vrot.slane %v3207, 4
  %v3209 = vadd.f32 %v3207, %v3208
  %v3210 = vrot.slane %v3209, 2
  %v3211 = vadd.f32 %v3209, %v3210
  %v3212 = vrot.slane %v3211, 1
  %v3213 = vadd.f32 %v3211, %v3212
  %v3214 = vsel %vm1120, %v3141, 0.0
  %v3215 = vsel %vm1120, %v3143, 0.0
  %v3216 = vadd.f32 %v3214, %v3215
  %v3217 = vrot.slane %v3216, 4
  %v3218 = vadd.f32 %v3216, %v3217
  %v3219 = vrot.slane %v3218, 2
  %v3220 = vadd.f32 %v3218, %v3219
  %v3221 = vrot.slane %v3220, 1
  %v3222 = vadd.f32 %v3220, %v3221
  %v3223 = vsel %vm1120, %v3145, 0.0
  %v3224 = vsel %vm1120, %v3147, 0.0
  %v3225 = vadd.f32 %v3223, %v3224
  %v3226 = vrot.slane %v3225, 4
  %v3227 = vadd.f32 %v3225, %v3226
  %v3228 = vrot.slane %v3227, 2
  %v3229 = vadd.f32 %v3227, %v3228
  %v3230 = vrot.slane %v3229, 1
  %v3231 = vadd.f32 %v3229, %v3230
  %v3232 = vsel %vm1120, %v3149, 0.0
  %v3233 = vsel %vm1120, %v3151, 0.0
  %v3234 = vadd.f32 %v3232, %v3233
  %v3235 = vrot.slane %v3234, 4
  %v3236 = vadd.f32 %v3234, %v3235
  %v3237 = vrot.slane %v3236, 2
  %v3238 = vadd.f32 %v3236, %v3237
  %v3239 = vrot.slane %v3238, 1
  %v3240 = vadd.f32 %v3238, %v3239
  %v3241 = vsel %vm1120, %v3153, 0.0
  %v3242 = vsel %vm1120, %v3155, 0.0
  %v3243 = vadd.f32 %v3241, %v3242
  %v3244 = vrot.slane %v3243, 4
  %v3245 = vadd.f32 %v3243, %v3244
  %v3246 = vrot.slane %v3245, 2
  %v3247 = vadd.f32 %v3245, %v3246
  %v3248 = vrot.slane %v3247, 1
  %v3249 = vadd.f32 %v3247, %v3248
  %v3250 = vsel %vm1120, %v3157, 0.0
  %v3251 = vsel %vm1120, %v3159, 0.0
  %v3252 = vadd.f32 %v3250, %v3251
  %v3253 = vrot.slane %v3252, 4
  %v3254 = vadd.f32 %v3252, %v3253
  %v3255 = vrot.slane %v3254, 2
  %v3256 = vadd.f32 %v3254, %v3255
  %v3257 = vrot.slane %v3256, 1
  %v3258 = vadd.f32 %v3256, %v3257
  %v3259 = vsel %vm1120, %v3161, 0.0
  %v3260 = vsel %vm1120, %v3163, 0.0
  %v3261 = vadd.f32 %v3259, %v3260
  %v3262 = vrot.slane %v3261, 4
  %v3263 = vadd.f32 %v3261, %v3262
  %v3264 = vrot.slane %v3263, 2
  %v3265 = vadd.f32 %v3263, %v3264
  %v3266 = vrot.slane %v3265, 1
  %v3267 = vadd.f32 %v3265, %v3266
  %v3268 = vsel %vm1120, %v3165, 0.0
  %v3269 = vsel %vm1120, %v3167, 0.0
  %v3270 = vadd.f32 %v3268, %v3269
  %v3271 = vrot.slane %v3270, 4
  %v3272 = vadd.f32 %v3270, %v3271
  %v3273 = vrot.slane %v3272, 2
  %v3274 = vadd.f32 %v3272, %v3273
  %v3275 = vrot.slane %v3274, 1
  %v3276 = vadd.f32 %v3274, %v3275
  %v3277 = vsel %vm1120, %v3169, 0.0
  %v3278 = vsel %vm1120, %v3171, 0.0
  %v3279 = vadd.f32 %v3277, %v3278
  %v3280 = vrot.slane %v3279, 4
  %v3281 = vadd.f32 %v3279, %v3280
  %v3282 = vrot.slane %v3281, 2
  %v3283 = vadd.f32 %v3281, %v3282
  %v3284 = vrot.slane %v3283, 1
  %v3285 = vadd.f32 %v3283, %v3284
  %v3286 = vsel %vm1120, %v3173, 0.0
  %v3287 = vsel %vm1120, %v3175, 0.0
  %v3288 = vadd.f32 %v3286, %v3287
  %v3289 = vrot.slane %v3288, 4
  %v3290 = vadd.f32 %v3288, %v3289
  %v3291 = vrot.slane %v3290, 2
  %v3292 = vadd.f32 %v3290, %v3291
  %v3293 = vrot.slane %v3292, 1
  %v3294 = vadd.f32 %v3292, %v3293
  %v3295 = vsel %vm1120, %v3177, 0.0
  %v3296 = vsel %vm1120, %v3179, 0.0
  %v3297 = vadd.f32 %v3295, %v3296
  %v3298 = vrot.slane %v3297, 4
  %v3299 = vadd.f32 %v3297, %v3298
  %v3300 = vrot.slane %v3299, 2
  %v3301 = vadd.f32 %v3299, %v3300
  %v3302 = vrot.slane %v3301, 1
  %v3303 = vadd.f32 %v3301, %v3302
  %v3304 = vsel %vm1120, %v3181, 0.0
  %v3305 = vsel %vm1120, %v3183, 0.0
  %v3306 = vadd.f32 %v3304, %v3305
  %v3307 = vrot.slane %v3306, 4
  %v3308 = vadd.f32 %v3306, %v3307
  %v3309 = vrot.slane %v3308, 2
  %v3310 = vadd.f32 %v3308, %v3309
  %v3311 = vrot.slane %v3310, 1
  %v3312 = vadd.f32 %v3310, %v3311
  %v3313 = vsel %vm1120, %v3185, 0.0
  %v3314 = vsel %vm1120, %v3187, 0.0
  %v3315 = vadd.f32 %v3313, %v3314
  %v3316 = vrot.slane %v3315, 4
  %v3317 = vadd.f32 %v3315, %v3316
  %v3318 = vrot.slane %v3317, 2
  %v3319 = vadd.f32 %v3317, %v3318
  %v3320 = vrot.slane %v3319, 1
  %v3321 = vadd.f32 %v3319, %v3320
  %v3322 = vsel %vm1120, %v3189, 0.0
  %v3323 = vsel %vm1120, %v3191, 0.0
  %v3324 = vadd.f32 %v3322, %v3323
  %v3325 = vrot.slane %v3324, 4
  %v3326 = vadd.f32 %v3324, %v3325
  %v3327 = vrot.slane %v3326, 2
  %v3328 = vadd.f32 %v3326, %v3327
  %v3329 = vrot.slane %v3328, 1
  %v3330 = vadd.f32 %v3328, %v3329
  %v3331 = vsel %vm1120, %v3193, 0.0
  %v3332 = vsel %vm1120, %v3195, 0.0
  %v3333 = vadd.f32 %v3331, %v3332
  %v3334 = vrot.slane %v3333, 4
  %v3335 = vadd.f32 %v3333, %v3334
  %v3336 = vrot.slane %v3335, 2
  %v3337 = vadd.f32 %v3335, %v3336
  %v3338 = vrot.slane %v3337, 1
  %v3339 = vadd.f32 %v3337, %v3338
  %v3341 = vsel %vm1120, %v3133, 0
  %v3344 = vsel %vm1120, %v3135, 0
  %v3347 = vsel %vm1120, %v3137, 0
  %v3350 = vsel %vm1120, %v3139, 0
  %v3353 = vsel %vm1120, %v3141, 0
  %v3356 = vsel %vm1120, %v3143, 0
  %v3359 = vsel %vm1120, %v3145, 0
  %v3362 = vsel %vm1120, %v3147, 0
  %v3365 = vsel %vm1120, %v3149, 0
  %v3368 = vsel %vm1120, %v3151, 0
  %v3371 = vsel %vm1120, %v3153, 0
  %v3374 = vsel %vm1120, %v3155, 0
  %v3377 = vsel %vm1120, %v3157, 0
  %v3380 = vsel %vm1120, %v3159, 0
  %v3383 = vsel %vm1120, %v3161, 0
  %v3386 = vsel %vm1120, %v3163, 0
  %v3389 = vsel %vm1120, %v3165, 0
  %v3392 = vsel %vm1120, %v3167, 0
  %v3395 = vsel %vm1120, %v3169, 0
  %v3398 = vsel %vm1120, %v3171, 0
  %v3401 = vsel %vm1120, %v3173, 0
  %v3404 = vsel %vm1120, %v3175, 0
  %v3407 = vsel %vm1120, %v3177, 0
  %v3410 = vsel %vm1120, %v3179, 0
  %v3413 = vsel %vm1120, %v3181, 0
  %v3416 = vsel %vm1120, %v3183, 0
  %v3419 = vsel %vm1120, %v3185, 0
  %v3422 = vsel %vm1120, %v3187, 0
  %v3425 = vsel %vm1120, %v3189, 0
  %v3428 = vsel %vm1120, %v3191, 0
  %v3431 = vsel %vm1120, %v3193, 0
  %v3434 = vsel %vm1120, %v3195, 0
  %v3437 = vsel %vm1601, %v2264, 0
  %3439 = vmatprep.subr.mxu0 0.0
  %3440 = vmatpush1.msra.mxu0 %v3437
  %3441 = vmatprep.subr.mxu0 0.0
  %3442 = vmatpush1.msra.mxu0 0.0
  %3443 = vmatprep.subr.mxu0 0.0
  %3444 = vmatpush1.msra.mxu0 0.0
  %3445 = vmatprep.subr.mxu0 0.0
  %3446 = vmatpush1.msra.mxu0 0.0
  %3447 = vmatprep.subr.mxu0 0.0
  %3448 = vmatpush1.msra.mxu0 0.0
  %3449 = vmatprep.subr.mxu0 0.0
  %3450 = vmatpush1.msra.mxu0 0.0
  %3451 = vmatprep.subr.mxu0 0.0
  %3452 = vmatpush1.msra.mxu0 0.0
  %3453 = vmatprep.subr.mxu0 0.0
  %3454 = vmatpush1.msra.mxu0 0.0
  %3455 = vmatprep.subr.mxu0 0.0
  %3456 = vmatpush1.msra.mxu0 0.0
  %3457 = vmatprep.subr.mxu0 0.0
  %3458 = vmatpush1.msra.mxu0 0.0
  %3459 = vmatprep.subr.mxu0 0.0
  %3460 = vmatpush1.msra.mxu0 0.0
  %3461 = vmatprep.subr.mxu0 0.0
  %3462 = vmatpush1.msra.mxu0 0.0
  %3463 = vmatprep.subr.mxu0 0.0
  %3464 = vmatpush1.msra.mxu0 0.0
  %3465 = vmatprep.subr.mxu0 0.0
  %3466 = vmatpush1.msra.mxu0 0.0
  %3467 = vmatprep.subr.mxu0 0.0
  %3468 = vmatpush1.msra.mxu0 0.0
  %3469 = vmatprep.subr.mxu0 0.0
  %3470 = vmatpush1.msra.mxu0 0.0
  %3471 = vmatprep.subr.mxu0 0.0
  %3472 = vmatpush1.msra.mxu0 0.0
  %3473 = vmatprep.subr.mxu0 0.0
  %3474 = vmatpush1.msra.mxu0 0.0
  %3475 = vmatprep.subr.mxu0 0.0
  %3476 = vmatpush1.msra.mxu0 0.0
  %3477 = vmatprep.subr.mxu0 0.0
  %3478 = vmatpush1.msra.mxu0 0.0
  %3479 = vmatprep.subr.mxu0 0.0
  %3480 = vmatpush1.msra.mxu0 0.0
  %3481 = vmatprep.subr.mxu0 0.0
  %3482 = vmatpush1.msra.mxu0 0.0
  %3483 = vmatprep.subr.mxu0 0.0
  %3484 = vmatpush1.msra.mxu0 0.0
  %3485 = vmatprep.subr.mxu0 0.0
  %3486 = vmatpush1.msra.mxu0 0.0
  %3487 = vmatprep.subr.mxu0 0.0
  %3488 = vmatpush1.msra.mxu0 0.0
  %3489 = vmatprep.subr.mxu0 0.0
  %3490 = vmatpush1.msra.mxu0 0.0
  %3491 = vmatprep.subr.mxu0 0.0
  %3492 = vmatpush1.msra.mxu0 0.0
  %3493 = vmatprep.subr.mxu0 0.0
  %3494 = vmatpush1.msra.mxu0 0.0
  %3495 = vmatprep.subr.mxu0 0.0
  %3496 = vmatpush1.msra.mxu0 0.0
  %3497 = vmatprep.subr.mxu0 0.0
  %3498 = vmatpush1.msra.mxu0 0.0
  %3499 = vmatprep.subr.mxu0 0.0
  %3500 = vmatpush1.msra.mxu0 0.0
  %3501 = vmatprep.subr.mxu0 0.0
  %3502 = vmatpush1.msra.mxu0 0.0
  %3503 = vmatprep.mubr.f32.mxu0 0.0
  %3504 = vmatmul.mubr.f32.gmra.mrb[0].mxu0 %v3341
  %v3505 = vpop.f32.mrb[0].mxu0
  %v3506 = vadd.f32 0.0, %v3505
  %v3507 = vpop.f32.mrb[0].mxu0
  %3508 = vmatprep.mubr.f32.mxu0 0.0
  %3509 = vmatmul.mubr.f32.gmra.mrb[0].mxu0 %v3344
  %v3510 = vpop.f32.mrb[0].mxu0
  %v3511 = vadd.f32 0.0, %v3510
  %v3512 = vpop.f32.mrb[0].mxu0
  %3513 = vmatprep.mubr.f32.mxu0 0.0
  %3514 = vmatmul.mubr.f32.gmra.mrb[0].mxu0 %v3347
  %v3515 = vpop.f32.mrb[0].mxu0
  %v3516 = vadd.f32 0.0, %v3515
  %v3517 = vpop.f32.mrb[0].mxu0
  %3518 = vmatprep.mubr.f32.mxu0 0.0
  %3519 = vmatmul.mubr.f32.gmra.mrb[0].mxu0 %v3350
  %v3520 = vpop.f32.mrb[0].mxu0
  %v3521 = vadd.f32 0.0, %v3520
  %v3522 = vpop.f32.mrb[0].mxu0
  %3523 = vmatprep.mubr.f32.mxu0 0.0
  %3524 = vmatmul.mubr.f32.gmra.mrb[0].mxu0 %v3353
  %v3525 = vpop.f32.mrb[0].mxu0
  %v3526 = vadd.f32 0.0, %v3525
  %v3527 = vpop.f32.mrb[0].mxu0
  %3528 = vmatprep.mubr.f32.mxu0 0.0
  %3529 = vmatmul.mubr.f32.gmra.mrb[0].mxu0 %v3356
  %v3530 = vpop.f32.mrb[0].mxu0
  %v3531 = vadd.f32 0.0, %v3530
  %v3532 = vpop.f32.mrb[0].mxu0
  %3533 = vmatprep.mubr.f32.mxu0 0.0
  %3534 = vmatmul.mubr.f32.gmra.mrb[0].mxu0 %v3359
  %v3535 = vpop.f32.mrb[0].mxu0
  %v3536 = vadd.f32 0.0, %v3535
  %v3537 = vpop.f32.mrb[0].mxu0
  %3538 = vmatprep.mubr.f32.mxu0 0.0
  %3539 = vmatmul.mubr.f32.gmra.mrb[0].mxu0 %v3362
  %v3540 = vpop.f32.mrb[0].mxu0
  %v3541 = vadd.f32 0.0, %v3540
  %v3542 = vpop.f32.mrb[0].mxu0
  %3543 = vmatprep.mubr.f32.mxu0 0.0
  %3544 = vmatmul.mubr.f32.gmra.mrb[0].mxu0 %v3365
  %v3545 = vpop.f32.mrb[0].mxu0
  %v3546 = vadd.f32 0.0, %v3545
  %v3547 = vpop.f32.mrb[0].mxu0
  %3548 = vmatprep.mubr.f32.mxu0 0.0
  %3549 = vmatmul.mubr.f32.gmra.mrb[0].mxu0 %v3368
  %v3550 = vpop.f32.mrb[0].mxu0
  %v3551 = vadd.f32 0.0, %v3550
  %v3552 = vpop.f32.mrb[0].mxu0
  %3553 = vmatprep.mubr.f32.mxu0 0.0
  %3554 = vmatmul.mubr.f32.gmra.mrb[0].mxu0 %v3371
  %v3555 = vpop.f32.mrb[0].mxu0
  %v3556 = vadd.f32 0.0, %v3555
  %v3557 = vpop.f32.mrb[0].mxu0
  %3558 = vmatprep.mubr.f32.mxu0 0.0
  %3559 = vmatmul.mubr.f32.gmra.mrb[0].mxu0 %v3374
  %v3560 = vpop.f32.mrb[0].mxu0
  %v3561 = vadd.f32 0.0, %v3560
  %v3562 = vpop.f32.mrb[0].mxu0
  %3563 = vmatprep.mubr.f32.mxu0 0.0
  %3564 = vmatmul.mubr.f32.gmra.mrb[0].mxu0 %v3377
  %v3565 = vpop.f32.mrb[0].mxu0
  %v3566 = vadd.f32 0.0, %v3565
  %v3567 = vpop.f32.mrb[0].mxu0
  %3568 = vmatprep.mubr.f32.mxu0 0.0
  %3569 = vmatmul.mubr.f32.gmra.mrb[0].mxu0 %v3380
  %v3570 = vpop.f32.mrb[0].mxu0
  %v3571 = vadd.f32 0.0, %v3570
  %v3572 = vpop.f32.mrb[0].mxu0
  %3573 = vmatprep.mubr.f32.mxu0 0.0
  %3574 = vmatmul.mubr.f32.gmra.mrb[0].mxu0 %v3383
  %v3575 = vpop.f32.mrb[0].mxu0
  %v3576 = vadd.f32 0.0, %v3575
  %v3577 = vpop.f32.mrb[0].mxu0
  %3578 = vmatprep.mubr.f32.mxu0 0.0
  %3579 = vmatmul.mubr.f32.gmra.mrb[0].mxu0 %v3386
  %v3580 = vpop.f32.mrb[0].mxu0
  %v3581 = vadd.f32 0.0, %v3580
  %v3582 = vpop.f32.mrb[0].mxu0
  %3583 = vmatprep.mubr.f32.mxu0 0.0
  %3584 = vmatmul.mubr.f32.gmra.mrb[0].mxu0 %v3389
  %v3585 = vpop.f32.mrb[0].mxu0
  %v3586 = vadd.f32 0.0, %v3585
  %v3587 = vpop.f32.mrb[0].mxu0
  %3588 = vmatprep.mubr.f32.mxu0 0.0
  %3589 = vmatmul.mubr.f32.gmra.mrb[0].mxu0 %v3392
  %v3590 = vpop.f32.mrb[0].mxu0
  %v3591 = vadd.f32 0.0, %v3590
  %v3592 = vpop.f32.mrb[0].mxu0
  %3593 = vmatprep.mubr.f32.mxu0 0.0
  %3594 = vmatmul.mubr.f32.gmra.mrb[0].mxu0 %v3395
  %v3595 = vpop.f32.mrb[0].mxu0
  %v3596 = vadd.f32 0.0, %v3595
  %v3597 = vpop.f32.mrb[0].mxu0
  %3598 = vmatprep.mubr.f32.mxu0 0.0
  %3599 = vmatmul.mubr.f32.gmra.mrb[0].mxu0 %v3398
  %v3600 = vpop.f32.mrb[0].mxu0
  %v3601 = vadd.f32 0.0, %v3600
  %v3602 = vpop.f32.mrb[0].mxu0
  %3603 = vmatprep.mubr.f32.mxu0 0.0
  %3604 = vmatmul.mubr.f32.gmra.mrb[0].mxu0 %v3401
  %v3605 = vpop.f32.mrb[0].mxu0
  %v3606 = vadd.f32 0.0, %v3605
  %v3607 = vpop.f32.mrb[0].mxu0
  %3608 = vmatprep.mubr.f32.mxu0 0.0
  %3609 = vmatmul.mubr.f32.gmra.mrb[0].mxu0 %v3404
  %v3610 = vpop.f32.mrb[0].mxu0
  %v3611 = vadd.f32 0.0, %v3610
  %v3612 = vpop.f32.mrb[0].mxu0
  %3613 = vmatprep.mubr.f32.mxu0 0.0
  %3614 = vmatmul.mubr.f32.gmra.mrb[0].mxu0 %v3407
  %v3615 = vpop.f32.mrb[0].mxu0
  %v3616 = vadd.f32 0.0, %v3615
  %v3617 = vpop.f32.mrb[0].mxu0
  %3618 = vmatprep.mubr.f32.mxu0 0.0
  %3619 = vmatmul.mubr.f32.gmra.mrb[0].mxu0 %v3410
  %v3620 = vpop.f32.mrb[0].mxu0
  %v3621 = vadd.f32 0.0, %v3620
  %v3622 = vpop.f32.mrb[0].mxu0
  %3623 = vmatprep.mubr.f32.mxu0 0.0
  %3624 = vmatmul.mubr.f32.gmra.mrb[0].mxu0 %v3413
  %v3625 = vpop.f32.mrb[0].mxu0
  %v3626 = vadd.f32 0.0, %v3625
  %v3627 = vpop.f32.mrb[0].mxu0
  %3628 = vmatprep.mubr.f32.mxu0 0.0
  %3629 = vmatmul.mubr.f32.gmra.mrb[0].mxu0 %v3416
  %v3630 = vpop.f32.mrb[0].mxu0
  %v3631 = vadd.f32 0.0, %v3630
  %v3632 = vpop.f32.mrb[0].mxu0
  %3633 = vmatprep.mubr.f32.mxu0 0.0
  %3634 = vmatmul.mubr.f32.gmra.mrb[0].mxu0 %v3419
  %v3635 = vpop.f32.mrb[0].mxu0
  %v3636 = vadd.f32 0.0, %v3635
  %v3637 = vpop.f32.mrb[0].mxu0
  %3638 = vmatprep.mubr.f32.mxu0 0.0
  %3639 = vmatmul.mubr.f32.gmra.mrb[0].mxu0 %v3422
  %v3640 = vpop.f32.mrb[0].mxu0
  %v3641 = vadd.f32 0.0, %v3640
  %v3642 = vpop.f32.mrb[0].mxu0
  %3643 = vmatprep.mubr.f32.mxu0 0.0
  %3644 = vmatmul.mubr.f32.gmra.mrb[0].mxu0 %v3425
  %v3645 = vpop.f32.mrb[0].mxu0
  %v3646 = vadd.f32 0.0, %v3645
  %v3647 = vpop.f32.mrb[0].mxu0
  %3648 = vmatprep.mubr.f32.mxu0 0.0
  %3649 = vmatmul.mubr.f32.gmra.mrb[0].mxu0 %v3428
  %v3650 = vpop.f32.mrb[0].mxu0
  %v3651 = vadd.f32 0.0, %v3650
  %v3652 = vpop.f32.mrb[0].mxu0
  %3653 = vmatprep.mubr.f32.mxu0 0.0
  %3654 = vmatmul.mubr.f32.gmra.mrb[0].mxu0 %v3431
  %v3655 = vpop.f32.mrb[0].mxu0
  %v3656 = vadd.f32 0.0, %v3655
  %v3657 = vpop.f32.mrb[0].mxu0
  %3658 = vmatprep.mubr.f32.mxu0 0.0
  %3659 = vmatmul.mubr.f32.gmra.mrb[0].mxu0 %v3434
  %v3660 = vpop.f32.mrb[0].mxu0
  %v3661 = vadd.f32 0.0, %v3660
  %v3662 = vpop.f32.mrb[0].mxu0
  %3663 = vdwg.mxu0
  %v3664 = vmul.f32 %v3506, %v2381
  %v3665 = vmul.f32 %v3511, %v2387
  %v3666 = vmul.f32 %v3516, %v2381
  %v3667 = vmul.f32 %v3521, %v2387
  %v3668 = vmul.f32 %v3526, %v2381
  %v3669 = vmul.f32 %v3531, %v2387
  %v3670 = vmul.f32 %v3536, %v2381
  %v3671 = vmul.f32 %v3541, %v2387
  %v3672 = vmul.f32 %v3546, %v2381
  %v3673 = vmul.f32 %v3551, %v2387
  %v3674 = vmul.f32 %v3556, %v2381
  %v3675 = vmul.f32 %v3561, %v2387
  %v3676 = vmul.f32 %v3566, %v2381
  %v3677 = vmul.f32 %v3571, %v2387
  %v3678 = vmul.f32 %v3576, %v2381
  %v3679 = vmul.f32 %v3581, %v2387
  %v3680 = vmul.f32 %v3586, %v2381
  %v3681 = vmul.f32 %v3591, %v2387
  %v3682 = vmul.f32 %v3596, %v2381
  %v3683 = vmul.f32 %v3601, %v2387
  %v3684 = vmul.f32 %v3606, %v2381
  %v3685 = vmul.f32 %v3611, %v2387
  %v3686 = vmul.f32 %v3616, %v2381
  %v3687 = vmul.f32 %v3621, %v2387
  %v3688 = vmul.f32 %v3626, %v2381
  %v3689 = vmul.f32 %v3631, %v2387
  %v3690 = vmul.f32 %v3636, %v2381
  %v3691 = vmul.f32 %v3641, %v2387
  %v3692 = vmul.f32 %v3646, %v2381
  %v3693 = vmul.f32 %v3651, %v2387
  %v3694 = vmul.f32 %v3656, %v2381
  %v3695 = vmul.f32 %v3661, %v2387
  %v3696 = vadd.f32 %v3664, %v3665
  %v3697 = vrot.slane %v3696, 4
  %v3698 = vadd.f32 %v3696, %v3697
  %v3699 = vrot.slane %v3698, 2
  %v3700 = vadd.f32 %v3698, %v3699
  %v3701 = vrot.slane %v3700, 1
  %v3702 = vadd.f32 %v3700, %v3701
  %v3703 = vadd.f32 %v3666, %v3667
  %v3704 = vrot.slane %v3703, 4
  %v3705 = vadd.f32 %v3703, %v3704
  %v3706 = vrot.slane %v3705, 2
  %v3707 = vadd.f32 %v3705, %v3706
  %v3708 = vrot.slane %v3707, 1
  %v3709 = vadd.f32 %v3707, %v3708
  %v3710 = vadd.f32 %v3668, %v3669
  %v3711 = vrot.slane %v3710, 4
  %v3712 = vadd.f32 %v3710, %v3711
  %v3713 = vrot.slane %v3712, 2
  %v3714 = vadd.f32 %v3712, %v3713
  %v3715 = vrot.slane %v3714, 1
  %v3716 = vadd.f32 %v3714, %v3715
  %v3717 = vadd.f32 %v3670, %v3671
  %v3718 = vrot.slane %v3717, 4
  %v3719 = vadd.f32 %v3717, %v3718
  %v3720 = vrot.slane %v3719, 2
  %v3721 = vadd.f32 %v3719, %v3720
  %v3722 = vrot.slane %v3721, 1
  %v3723 = vadd.f32 %v3721, %v3722
  %v3724 = vadd.f32 %v3672, %v3673
  %v3725 = vrot.slane %v3724, 4
  %v3726 = vadd.f32 %v3724, %v3725
  %v3727 = vrot.slane %v3726, 2
  %v3728 = vadd.f32 %v3726, %v3727
  %v3729 = vrot.slane %v3728, 1
  %v3730 = vadd.f32 %v3728, %v3729
  %v3731 = vadd.f32 %v3674, %v3675
  %v3732 = vrot.slane %v3731, 4
  %v3733 = vadd.f32 %v3731, %v3732
  %v3734 = vrot.slane %v3733, 2
  %v3735 = vadd.f32 %v3733, %v3734
  %v3736 = vrot.slane %v3735, 1
  %v3737 = vadd.f32 %v3735, %v3736
  %v3738 = vadd.f32 %v3676, %v3677
  %v3739 = vrot.slane %v3738, 4
  %v3740 = vadd.f32 %v3738, %v3739
  %v3741 = vrot.slane %v3740, 2
  %v3742 = vadd.f32 %v3740, %v3741
  %v3743 = vrot.slane %v3742, 1
  %v3744 = vadd.f32 %v3742, %v3743
  %v3745 = vadd.f32 %v3678, %v3679
  %v3746 = vrot.slane %v3745, 4
  %v3747 = vadd.f32 %v3745, %v3746
  %v3748 = vrot.slane %v3747, 2
  %v3749 = vadd.f32 %v3747, %v3748
  %v3750 = vrot.slane %v3749, 1
  %v3751 = vadd.f32 %v3749, %v3750
  %v3752 = vadd.f32 %v3680, %v3681
  %v3753 = vrot.slane %v3752, 4
  %v3754 = vadd.f32 %v3752, %v3753
  %v3755 = vrot.slane %v3754, 2
  %v3756 = vadd.f32 %v3754, %v3755
  %v3757 = vrot.slane %v3756, 1
  %v3758 = vadd.f32 %v3756, %v3757
  %v3759 = vadd.f32 %v3682, %v3683
  %v3760 = vrot.slane %v3759, 4
  %v3761 = vadd.f32 %v3759, %v3760
  %v3762 = vrot.slane %v3761, 2
  %v3763 = vadd.f32 %v3761, %v3762
  %v3764 = vrot.slane %v3763, 1
  %v3765 = vadd.f32 %v3763, %v3764
  %v3766 = vadd.f32 %v3684, %v3685
  %v3767 = vrot.slane %v3766, 4
  %v3768 = vadd.f32 %v3766, %v3767
  %v3769 = vrot.slane %v3768, 2
  %v3770 = vadd.f32 %v3768, %v3769
  %v3771 = vrot.slane %v3770, 1
  %v3772 = vadd.f32 %v3770, %v3771
  %v3773 = vadd.f32 %v3686, %v3687
  %v3774 = vrot.slane %v3773, 4
  %v3775 = vadd.f32 %v3773, %v3774
  %v3776 = vrot.slane %v3775, 2
  %v3777 = vadd.f32 %v3775, %v3776
  %v3778 = vrot.slane %v3777, 1
  %v3779 = vadd.f32 %v3777, %v3778
  %v3780 = vadd.f32 %v3688, %v3689
  %v3781 = vrot.slane %v3780, 4
  %v3782 = vadd.f32 %v3780, %v3781
  %v3783 = vrot.slane %v3782, 2
  %v3784 = vadd.f32 %v3782, %v3783
  %v3785 = vrot.slane %v3784, 1
  %v3786 = vadd.f32 %v3784, %v3785
  %v3787 = vadd.f32 %v3690, %v3691
  %v3788 = vrot.slane %v3787, 4
  %v3789 = vadd.f32 %v3787, %v3788
  %v3790 = vrot.slane %v3789, 2
  %v3791 = vadd.f32 %v3789, %v3790
  %v3792 = vrot.slane %v3791, 1
  %v3793 = vadd.f32 %v3791, %v3792
  %v3794 = vadd.f32 %v3692, %v3693
  %v3795 = vrot.slane %v3794, 4
  %v3796 = vadd.f32 %v3794, %v3795
  %v3797 = vrot.slane %v3796, 2
  %v3798 = vadd.f32 %v3796, %v3797
  %v3799 = vrot.slane %v3798, 1
  %v3800 = vadd.f32 %v3798, %v3799
  %v3801 = vadd.f32 %v3694, %v3695
  %v3802 = vrot.slane %v3801, 4
  %v3803 = vadd.f32 %v3801, %v3802
  %v3804 = vrot.slane %v3803, 2
  %v3805 = vadd.f32 %v3803, %v3804
  %v3806 = vrot.slane %v3805, 1
  %v3807 = vadd.f32 %v3805, %v3806
  %v3808 = vrcp.pop %v3204
  %v3809 = vmul.f32 1.0, %v3808
  %v3810 = vrcp.pop %v3213
  %v3811 = vmul.f32 1.0, %v3810
  %v3812 = vrcp.pop %v3222
  %v3813 = vmul.f32 1.0, %v3812
  %v3814 = vrcp.pop %v3231
  %v3815 = vmul.f32 1.0, %v3814
  %v3816 = vrcp.pop %v3240
  %v3817 = vmul.f32 1.0, %v3816
  %v3818 = vrcp.pop %v3249
  %v3819 = vmul.f32 1.0, %v3818
  %v3820 = vrcp.pop %v3258
  %v3821 = vmul.f32 1.0, %v3820
  %v3822 = vrcp.pop %v3267
  %v3823 = vmul.f32 1.0, %v3822
  %v3824 = vrcp.pop %v3276
  %v3825 = vmul.f32 1.0, %v3824
  %v3826 = vrcp.pop %v3285
  %v3827 = vmul.f32 1.0, %v3826
  %v3828 = vrcp.pop %v3294
  %v3829 = vmul.f32 1.0, %v3828
  %v3830 = vrcp.pop %v3303
  %v3831 = vmul.f32 1.0, %v3830
  %v3832 = vrcp.pop %v3312
  %v3833 = vmul.f32 1.0, %v3832
  %v3834 = vrcp.pop %v3321
  %v3835 = vmul.f32 1.0, %v3834
  %v3836 = vrcp.pop %v3330
  %v3837 = vmul.f32 1.0, %v3836
  %v3838 = vrcp.pop %v3339
  %v3839 = vmul.f32 1.0, %v3838
  %v3856 = vsel %vm2054, %v3811, %v3809
  %v3857 = vsel %vm2056, %v3813, %v3856
  %v3858 = vsel %vm2058, %v3815, %v3857
  %v3859 = vsel %vm2060, %v3817, %v3858
  %v3860 = vsel %vm2062, %v3819, %v3859
  %v3861 = vsel %vm2064, %v3821, %v3860
  %v3862 = vsel %vm2066, %v3823, %v3861
  %v3863 = vsel %vm2054, %v3827, %v3825
  %v3864 = vsel %vm2056, %v3829, %v3863
  %v3865 = vsel %vm2058, %v3831, %v3864
  %v3866 = vsel %vm2060, %v3833, %v3865
  %v3867 = vsel %vm2062, %v3835, %v3866
  %v3868 = vsel %vm2064, %v3837, %v3867
  %v3869 = vsel %vm2066, %v3839, %v3868
  %v3870 = vsel %vm1120, %v3862, 0
  %v3872 = vsel %vm1120, %v3869, 0
  %3874 = vmatprep.subr.mxu0 0.0
  %3875 = vmatpush1.msra.mxu0 %v3437
  %3876 = vmatprep.subr.mxu0 0.0
  %3877 = vmatpush1.msra.mxu0 0.0
  %3878 = vmatprep.subr.mxu0 0.0
  %3879 = vmatpush1.msra.mxu0 0.0
  %3880 = vmatprep.subr.mxu0 0.0
  %3881 = vmatpush1.msra.mxu0 0.0
  %3882 = vmatprep.subr.mxu0 0.0
  %3883 = vmatpush1.msra.mxu0 0.0
  %3884 = vmatprep.subr.mxu0 0.0
  %3885 = vmatpush1.msra.mxu0 0.0
  %3886 = vmatprep.subr.mxu0 0.0
  %3887 = vmatpush1.msra.mxu0 0.0
  %3888 = vmatprep.subr.mxu0 0.0
  %3889 = vmatpush1.msra.mxu0 0.0
  %3890 = vmatprep.subr.mxu0 0.0
  %3891 = vmatpush1.msra.mxu0 0.0
  %3892 = vmatprep.subr.mxu0 0.0
  %3893 = vmatpush1.msra.mxu0 0.0
  %3894 = vmatprep.subr.mxu0 0.0
  %3895 = vmatpush1.msra.mxu0 0.0
  %3896 = vmatprep.subr.mxu0 0.0
  %3897 = vmatpush1.msra.mxu0 0.0
  %3898 = vmatprep.subr.mxu0 0.0
  %3899 = vmatpush1.msra.mxu0 0.0
  %3900 = vmatprep.subr.mxu0 0.0
  %3901 = vmatpush1.msra.mxu0 0.0
  %3902 = vmatprep.subr.mxu0 0.0
  %3903 = vmatpush1.msra.mxu0 0.0
  %3904 = vmatprep.subr.mxu0 0.0
  %3905 = vmatpush1.msra.mxu0 0.0
  %3906 = vmatprep.subr.mxu0 0.0
  %3907 = vmatpush1.msra.mxu0 0.0
  %3908 = vmatprep.subr.mxu0 0.0
  %3909 = vmatpush1.msra.mxu0 0.0
  %3910 = vmatprep.subr.mxu0 0.0
  %3911 = vmatpush1.msra.mxu0 0.0
  %3912 = vmatprep.subr.mxu0 0.0
  %3913 = vmatpush1.msra.mxu0 0.0
  %3914 = vmatprep.subr.mxu0 0.0
  %3915 = vmatpush1.msra.mxu0 0.0
  %3916 = vmatprep.subr.mxu0 0.0
  %3917 = vmatpush1.msra.mxu0 0.0
  %3918 = vmatprep.subr.mxu0 0.0
  %3919 = vmatpush1.msra.mxu0 0.0
  %3920 = vmatprep.subr.mxu0 0.0
  %3921 = vmatpush1.msra.mxu0 0.0
  %3922 = vmatprep.subr.mxu0 0.0
  %3923 = vmatpush1.msra.mxu0 0.0
  %3924 = vmatprep.subr.mxu0 0.0
  %3925 = vmatpush1.msra.mxu0 0.0
  %3926 = vmatprep.subr.mxu0 0.0
  %3927 = vmatpush1.msra.mxu0 0.0
  %3928 = vmatprep.subr.mxu0 0.0
  %3929 = vmatpush1.msra.mxu0 0.0
  %3930 = vmatprep.subr.mxu0 0.0
  %3931 = vmatpush1.msra.mxu0 0.0
  %3932 = vmatprep.subr.mxu0 0.0
  %3933 = vmatpush1.msra.mxu0 0.0
  %3934 = vmatprep.subr.mxu0 0.0
  %3935 = vmatpush1.msra.mxu0 0.0
  %3936 = vmatprep.subr.mxu0 0.0
  %3937 = vmatpush1.msra.mxu0 0.0
  %3938 = vmatprep.mubr.f32.mxu0 0.0
  %3939 = vmatmul.mubr.f32.gmra.mrb[0].mxu0 %v3870
  %v3940 = vpop.f32.mrb[0].mxu0
  %v3941 = vadd.f32 0.0, %v3940
  %v3942 = vpop.f32.mrb[0].mxu0
  %3943 = vmatprep.mubr.f32.mxu0 0.0
  %3944 = vmatmul.mubr.f32.gmra.mrb[0].mxu0 %v3872
  %v3945 = vpop.f32.mrb[0].mxu0
  %v3946 = vadd.f32 0.0, %v3945
  %v3947 = vpop.f32.mrb[0].mxu0
  %3948 = vdwg.mxu0
  %v3951 = vrot.slane %v3941, 1
  %v3952 = vrot.slane %v3941, 2
  %v3953 = vrot.slane %v3941, 3
  %v3954 = vrot.slane %v3941, 4
  %v3955 = vrot.slane %v3941, 5
  %v3956 = vrot.slane %v3941, 6
  %v3957 = vrot.slane %v3941, 7
  %v3958 = vrot.slane %v3946, 1
  %v3959 = vrot.slane %v3946, 2
  %v3960 = vrot.slane %v3946, 3
  %v3961 = vrot.slane %v3946, 4
  %v3962 = vrot.slane %v3946, 5
  %v3963 = vrot.slane %v3946, 6
  %v3964 = vrot.slane %v3946, 7
  %v3981 = vmul.f32 %v3702, %v3941
  %v3982 = vmul.f32 %v3709, %v3951
  %v3983 = vmul.f32 %v3716, %v3952
  %v3984 = vmul.f32 %v3723, %v3953
  %v3985 = vmul.f32 %v3730, %v3954
  %v3986 = vmul.f32 %v3737, %v3955
  %v3987 = vmul.f32 %v3744, %v3956
  %v3988 = vmul.f32 %v3751, %v3957
  %v3989 = vmul.f32 %v3758, %v3946
  %v3990 = vmul.f32 %v3765, %v3958
  %v3991 = vmul.f32 %v3772, %v3959
  %v3992 = vmul.f32 %v3779, %v3960
  %v3993 = vmul.f32 %v3786, %v3961
  %v3994 = vmul.f32 %v3793, %v3962
  %v3995 = vmul.f32 %v3800, %v3963
  %v3996 = vmul.f32 %v3807, %v3964
  %v3998 = vlaneseq
  %v3999 = vshrl.u32 %v3998, 7
  %v4000 = vsub.s32 0, %v3999
  %v4001 = vrot.slane %v2265, %v4000
  %v4003 = vadd.f32 %v3981, %v4001
  %v4004 = vadd.f32 %v3982, %v4001
  %v4005 = vadd.f32 %v3983, %v4001
  %v4006 = vadd.f32 %v3984, %v4001
  %v4007 = vadd.f32 %v3985, %v4001
  %v4008 = vadd.f32 %v3986, %v4001
  %v4009 = vadd.f32 %v3987, %v4001
  %v4010 = vadd.f32 %v3988, %v4001
  %v4011 = vadd.f32 %v3989, %v4001
  %v4012 = vadd.f32 %v3990, %v4001
  %v4013 = vadd.f32 %v3991, %v4001
  %v4014 = vadd.f32 %v3992, %v4001
  %v4015 = vadd.f32 %v3993, %v4001
  %v4016 = vadd.f32 %v3994, %v4001
  %v4017 = vadd.f32 %v3995, %v4001
  %v4018 = vadd.f32 %v3996, %v4001
  %v4019 = vmax.f32 %v4003, 0.0
  %v4020 = vmax.f32 %v4004, 0.0
  %v4021 = vmax.f32 %v4005, 0.0
  %v4022 = vmax.f32 %v4006, 0.0
  %v4023 = vmax.f32 %v4007, 0.0
  %v4024 = vmax.f32 %v4008, 0.0
  %v4025 = vmax.f32 %v4009, 0.0
  %v4026 = vmax.f32 %v4010, 0.0
  %v4027 = vmax.f32 %v4011, 0.0
  %v4028 = vmax.f32 %v4012, 0.0
  %v4029 = vmax.f32 %v4013, 0.0
  %v4030 = vmax.f32 %v4014, 0.0
  %v4031 = vmax.f32 %v4015, 0.0
  %v4032 = vmax.f32 %v4016, 0.0
  %v4033 = vmax.f32 %v4017, 0.0
  %v4034 = vmax.f32 %v4018, 0.0
  %v4035 = vld [vmem:[%s10] sm:$0xff]
  %v4036 = vld [vmem:[%s10 + $0x8] sm:$0xff]
  %v4037 = vld [vmem:[%s10 + $0x10] sm:$0xff]
  %v4038 = vld [vmem:[%s10 + $0x18] sm:$0xff]
  %v4039 = vld [vmem:[%s10 + $0x20] sm:$0xff]
  %v4040 = vld [vmem:[%s10 + $0x28] sm:$0xff]
  %v4041 = vld [vmem:[%s10 + $0x30] sm:$0xff]
  %v4042 = vld [vmem:[%s10 + $0x38] sm:$0xff]
  %v4043 = vld [vmem:[%s10 + $0x40] sm:$0xff]
  %v4044 = vld [vmem:[%s10 + $0x48] sm:$0xff]
  %v4045 = vld [vmem:[%s10 + $0x50] sm:$0xff]
  %v4046 = vld [vmem:[%s10 + $0x58] sm:$0xff]
  %v4047 = vld [vmem:[%s10 + $0x60] sm:$0xff]
  %v4048 = vld [vmem:[%s10 + $0x68] sm:$0xff]
  %v4049 = vld [vmem:[%s10 + $0x70] sm:$0xff]
  %v4050 = vld [vmem:[%s10 + $0x78] sm:$0xff]
  %v4051 = vld [vmem:[%s10 + $0x80] sm:$0xff]
  %v4052 = vld [vmem:[%s10 + $0x88] sm:$0xff]
  %v4053 = vld [vmem:[%s10 + $0x90] sm:$0xff]
  %v4054 = vld [vmem:[%s10 + $0x98] sm:$0xff]
  %v4055 = vld [vmem:[%s10 + $0xa0] sm:$0xff]
  %v4056 = vld [vmem:[%s10 + $0xa8] sm:$0xff]
  %v4057 = vld [vmem:[%s10 + $0xb0] sm:$0xff]
  %v4058 = vld [vmem:[%s10 + $0xb8] sm:$0xff]
  %v4059 = vld [vmem:[%s10 + $0xc0] sm:$0xff]
  %v4060 = vld [vmem:[%s10 + $0xc8] sm:$0xff]
  %v4061 = vld [vmem:[%s10 + $0xd0] sm:$0xff]
  %v4062 = vld [vmem:[%s10 + $0xd8] sm:$0xff]
  %v4063 = vld [vmem:[%s10 + $0xe0] sm:$0xff]
  %v4064 = vld [vmem:[%s10 + $0xe8] sm:$0xff]
  %v4065 = vld [vmem:[%s10 + $0xf0] sm:$0xff]
  %v4066 = vld [vmem:[%s10 + $0xf8] sm:$0xff]
  %v4067 = vld [vmem:[%s11] sm:$0xff]
  %v4068 = vld [vmem:[%s11 + $0x8] sm:$0xff]
  %v4069 = vld [vmem:[%s11 + $0x10] sm:$0xff]
  %v4070 = vld [vmem:[%s11 + $0x18] sm:$0xff]
  %v4071 = vld [vmem:[%s11 + $0x20] sm:$0xff]
  %v4072 = vld [vmem:[%s11 + $0x28] sm:$0xff]
  %v4073 = vld [vmem:[%s11 + $0x30] sm:$0xff]
  %v4074 = vld [vmem:[%s11 + $0x38] sm:$0xff]
  %v4075 = vld [vmem:[%s11 + $0x40] sm:$0xff]
  %v4076 = vld [vmem:[%s11 + $0x48] sm:$0xff]
  %v4077 = vld [vmem:[%s11 + $0x50] sm:$0xff]
  %v4078 = vld [vmem:[%s11 + $0x58] sm:$0xff]
  %v4079 = vld [vmem:[%s11 + $0x60] sm:$0xff]
  %v4080 = vld [vmem:[%s11 + $0x68] sm:$0xff]
  %v4081 = vld [vmem:[%s11 + $0x70] sm:$0xff]
  %v4082 = vld [vmem:[%s11 + $0x78] sm:$0xff]
  %v4083 = vld [vmem:[%s12] sm:$0x1]
  %v4084 = vld [vmem:[%s13] sm:$0x1]
  %v4101 = vrot.slane %v4020, 7
  %v4102 = vsel %vm2054, %v4101, %v4019
  %v4103 = vrot.slane %v4021, 6
  %v4104 = vsel %vm2056, %v4103, %v4102
  %v4105 = vrot.slane %v4022, 5
  %v4106 = vsel %vm2058, %v4105, %v4104
  %v4107 = vrot.slane %v4023, 4
  %v4108 = vsel %vm2060, %v4107, %v4106
  %v4109 = vrot.slane %v4024, 3
  %v4110 = vsel %vm2062, %v4109, %v4108
  %v4111 = vrot.slane %v4025, 2
  %v4112 = vsel %vm2064, %v4111, %v4110
  %v4113 = vrot.slane %v4026, 1
  %v4114 = vsel %vm2066, %v4113, %v4112
  %v4115 = vrot.slane %v4028, 7
  %v4116 = vsel %vm2054, %v4115, %v4027
  %v4117 = vrot.slane %v4029, 6
  %v4118 = vsel %vm2056, %v4117, %v4116
  %v4119 = vrot.slane %v4030, 5
  %v4120 = vsel %vm2058, %v4119, %v4118
  %v4121 = vrot.slane %v4031, 4
  %v4122 = vsel %vm2060, %v4121, %v4120
  %v4123 = vrot.slane %v4032, 3
  %v4124 = vsel %vm2062, %v4123, %v4122
  %v4125 = vrot.slane %v4033, 2
  %v4126 = vsel %vm2064, %v4125, %v4124
  %v4127 = vrot.slane %v4034, 1
  %v4128 = vsel %vm2066, %v4127, %v4126
  %4131 = vmatprep.subr.mxu0 %v4036
  %4132 = vmatpush1.msra.mxu0 %v4035
  %4133 = vmatprep.subr.mxu0 %v4038
  %4134 = vmatpush1.msra.mxu0 %v4037
  %4135 = vmatprep.subr.mxu0 %v4040
  %4136 = vmatpush1.msra.mxu0 %v4039
  %4137 = vmatprep.subr.mxu0 %v4042
  %4138 = vmatpush1.msra.mxu0 %v4041
  %4139 = vmatprep.subr.mxu0 %v4044
  %4140 = vmatpush1.msra.mxu0 %v4043
  %4141 = vmatprep.subr.mxu0 %v4046
  %4142 = vmatpush1.msra.mxu0 %v4045
  %4143 = vmatprep.subr.mxu0 %v4048
  %4144 = vmatpush1.msra.mxu0 %v4047
  %4145 = vmatprep.subr.mxu0 %v4050
  %4146 = vmatpush1.msra.mxu0 %v4049
  %4147 = vmatprep.subr.mxu0 %v4052
  %4148 = vmatpush1.msra.mxu0 %v4051
  %4149 = vmatprep.subr.mxu0 %v4054
  %4150 = vmatpush1.msra.mxu0 %v4053
  %4151 = vmatprep.subr.mxu0 %v4056
  %4152 = vmatpush1.msra.mxu0 %v4055
  %4153 = vmatprep.subr.mxu0 %v4058
  %4154 = vmatpush1.msra.mxu0 %v4057
  %4155 = vmatprep.subr.mxu0 %v4060
  %4156 = vmatpush1.msra.mxu0 %v4059
  %4157 = vmatprep.subr.mxu0 %v4062
  %4158 = vmatpush1.msra.mxu0 %v4061
  %4159 = vmatprep.subr.mxu0 %v4064
  %4160 = vmatpush1.msra.mxu0 %v4063
  %4161 = vmatprep.subr.mxu0 %v4066
  %4162 = vmatpush1.msra.mxu0 %v4065
  %4163 = vmatprep.subr.mxu0 0.0
  %4164 = vmatpush1.msra.mxu0 0.0
  %4165 = vmatprep.subr.mxu0 0.0
  %4166 = vmatpush1.msra.mxu0 0.0
  %4167 = vmatprep.subr.mxu0 0.0
  %4168 = vmatpush1.msra.mxu0 0.0
  %4169 = vmatprep.subr.mxu0 0.0
  %4170 = vmatpush1.msra.mxu0 0.0
  %4171 = vmatprep.subr.mxu0 0.0
  %4172 = vmatpush1.msra.mxu0 0.0
  %4173 = vmatprep.subr.mxu0 0.0
  %4174 = vmatpush1.msra.mxu0 0.0
  %4175 = vmatprep.subr.mxu0 0.0
  %4176 = vmatpush1.msra.mxu0 0.0
  %4177 = vmatprep.subr.mxu0 0.0
  %4178 = vmatpush1.msra.mxu0 0.0
  %4179 = vmatprep.subr.mxu0 0.0
  %4180 = vmatpush1.msra.mxu0 0.0
  %4181 = vmatprep.subr.mxu0 0.0
  %4182 = vmatpush1.msra.mxu0 0.0
  %4183 = vmatprep.subr.mxu0 0.0
  %4184 = vmatpush1.msra.mxu0 0.0
  %4185 = vmatprep.subr.mxu0 0.0
  %4186 = vmatpush1.msra.mxu0 0.0
  %4187 = vmatprep.subr.mxu0 0.0
  %4188 = vmatpush1.msra.mxu0 0.0
  %4189 = vmatprep.subr.mxu0 0.0
  %4190 = vmatpush1.msra.mxu0 0.0
  %4191 = vmatprep.subr.mxu0 0.0
  %4192 = vmatpush1.msra.mxu0 0.0
  %4193 = vmatprep.subr.mxu0 0.0
  %4194 = vmatpush1.msra.mxu0 0.0
  %4195 = vmatprep.mubr.f32.mxu0 0.0
  %4196 = vmatmul.mubr.f32.gmra.mrb[0].mxu0 %v4114
  %v4197 = vpop.f32.mrb[0].mxu0
  %v4198 = vadd.f32 0.0, %v4197
  %v4199 = vpop.f32.mrb[0].mxu0
  %v4200 = vadd.f32 0.0, %v4199
  %4201 = vmatprep.mubr.f32.mxu0 0.0
  %4202 = vmatmul.mubr.f32.gmra.mrb[0].mxu0 %v4128
  %v4203 = vpop.f32.mrb[0].mxu0
  %v4204 = vadd.f32 0.0, %v4203
  %v4205 = vpop.f32.mrb[0].mxu0
  %v4206 = vadd.f32 0.0, %v4205
  %4207 = vdwg.mxu0
  %v4210 = vcombine.high %v4200, %v4200
  %v4212 = vunpack.c.l.s4 1966171168
  %v4213 = vunpack.c.0.s8 %v4212
  %v4214 = vlaneseq
  %v4215 = vshrl.u32 %v4214, 7
  %v4216 = vsub.s32 %v4213, %v4215
  %v4217 = vrot.slane %v4200, %v4216
  %v4219 = vunpack.c.l.s4 1966171168
  %v4220 = vunpack.c.0.s8 %v4219
  %v4221 = vlaneseq
  %v4222 = vshrl.u32 %v4221, 7
  %v4223 = vsub.s32 %v4220, %v4222
  %v4224 = vrot.slane %v4210, %v4223
  %v4225 = vcombine.high %v4217, %v4217
  %v4226 = vcombine.high %v4224, %v4224
  %v4228 = vunpack.c.l.s4 1966171168
  %v4229 = vunpack.c.0.s8 %v4228
  %v4230 = vlaneseq
  %v4231 = vshrl.u32 %v4230, 7
  %v4232 = vsub.s32 %v4229, %v4231
  %v4233 = vrot.slane %v4217, %v4232
  %v4235 = vunpack.c.l.s4 1966171168
  %v4236 = vunpack.c.0.s8 %v4235
  %v4237 = vlaneseq
  %v4238 = vshrl.u32 %v4237, 7
  %v4239 = vsub.s32 %v4236, %v4238
  %v4240 = vrot.slane %v4224, %v4239
  %v4242 = vunpack.c.l.s4 1966171168
  %v4243 = vunpack.c.0.s8 %v4242
  %v4244 = vlaneseq
  %v4245 = vshrl.u32 %v4244, 7
  %v4246 = vsub.s32 %v4243, %v4245
  %v4247 = vrot.slane %v4225, %v4246
  %v4249 = vunpack.c.l.s4 1966171168
  %v4250 = vunpack.c.0.s8 %v4249
  %v4251 = vlaneseq
  %v4252 = vshrl.u32 %v4251, 7
  %v4253 = vsub.s32 %v4250, %v4252
  %v4254 = vrot.slane %v4226, %v4253
  %v4255 = vcombine.high %v4233, %v4233
  %v4256 = vcombine.high %v4240, %v4240
  %v4257 = vcombine.high %v4247, %v4247
  %v4258 = vcombine.high %v4254, %v4254
  %v4259 = vcombine.high %v4206, %v4206
  %v4261 = vunpack.c.l.s4 1966171168
  %v4262 = vunpack.c.0.s8 %v4261
  %v4263 = vlaneseq
  %v4264 = vshrl.u32 %v4263, 7
  %v4265 = vsub.s32 %v4262, %v4264
  %v4266 = vrot.slane %v4206, %v4265
  %v4268 = vunpack.c.l.s4 1966171168
  %v4269 = vunpack.c.0.s8 %v4268
  %v4270 = vlaneseq
  %v4271 = vshrl.u32 %v4270, 7
  %v4272 = vsub.s32 %v4269, %v4271
  %v4273 = vrot.slane %v4259, %v4272
  %v4274 = vcombine.high %v4266, %v4266
  %v4275 = vcombine.high %v4273, %v4273
  %v4277 = vunpack.c.l.s4 1966171168
  %v4278 = vunpack.c.0.s8 %v4277
  %v4279 = vlaneseq
  %v4280 = vshrl.u32 %v4279, 7
  %v4281 = vsub.s32 %v4278, %v4280
  %v4282 = vrot.slane %v4266, %v4281
  %v4284 = vunpack.c.l.s4 1966171168
  %v4285 = vunpack.c.0.s8 %v4284
  %v4286 = vlaneseq
  %v4287 = vshrl.u32 %v4286, 7
  %v4288 = vsub.s32 %v4285, %v4287
  %v4289 = vrot.slane %v4273, %v4288
  %v4291 = vunpack.c.l.s4 1966171168
  %v4292 = vunpack.c.0.s8 %v4291
  %v4293 = vlaneseq
  %v4294 = vshrl.u32 %v4293, 7
  %v4295 = vsub.s32 %v4292, %v4294
  %v4296 = vrot.slane %v4274, %v4295
  %v4298 = vunpack.c.l.s4 1966171168
  %v4299 = vunpack.c.0.s8 %v4298
  %v4300 = vlaneseq
  %v4301 = vshrl.u32 %v4300, 7
  %v4302 = vsub.s32 %v4299, %v4301
  %v4303 = vrot.slane %v4275, %v4302
  %v4304 = vcombine.high %v4282, %v4282
  %v4305 = vcombine.high %v4289, %v4289
  %v4306 = vcombine.high %v4296, %v4296
  %v4307 = vcombine.high %v4303, %v4303
  %v4308 = vlaneseq
  %v4309 = vshrl.u32 %v4308, 7
  %v4310 = vsub.s32 0, %v4309
  %v4311 = vrot.slane %v4233, %v4310
  %v4312 = vlaneseq
  %v4313 = vshrl.u32 %v4312, 7
  %v4314 = vsub.s32 0, %v4313
  %v4315 = vrot.slane %v4247, %v4314
  %v4316 = vlaneseq
  %v4317 = vshrl.u32 %v4316, 7
  %v4318 = vsub.s32 0, %v4317
  %v4319 = vrot.slane %v4255, %v4318
  %v4320 = vlaneseq
  %v4321 = vshrl.u32 %v4320, 7
  %v4322 = vsub.s32 0, %v4321
  %v4323 = vrot.slane %v4257, %v4322
  %v4324 = vlaneseq
  %v4325 = vshrl.u32 %v4324, 7
  %v4326 = vsub.s32 0, %v4325
  %v4327 = vrot.slane %v4240, %v4326
  %v4328 = vlaneseq
  %v4329 = vshrl.u32 %v4328, 7
  %v4330 = vsub.s32 0, %v4329
  %v4331 = vrot.slane %v4254, %v4330
  %v4332 = vlaneseq
  %v4333 = vshrl.u32 %v4332, 7
  %v4334 = vsub.s32 0, %v4333
  %v4335 = vrot.slane %v4256, %v4334
  %v4336 = vlaneseq
  %v4337 = vshrl.u32 %v4336, 7
  %v4338 = vsub.s32 0, %v4337
  %v4339 = vrot.slane %v4258, %v4338
  %v4340 = vlaneseq
  %v4341 = vshrl.u32 %v4340, 7
  %v4342 = vsub.s32 0, %v4341
  %v4343 = vrot.slane %v4282, %v4342
  %v4344 = vlaneseq
  %v4345 = vshrl.u32 %v4344, 7
  %v4346 = vsub.s32 0, %v4345
  %v4347 = vrot.slane %v4296, %v4346
  %v4348 = vlaneseq
  %v4349 = vshrl.u32 %v4348, 7
  %v4350 = vsub.s32 0, %v4349
  %v4351 = vrot.slane %v4304, %v4350
  %v4352 = vlaneseq
  %v4353 = vshrl.u32 %v4352, 7
  %v4354 = vsub.s32 0, %v4353
  %v4355 = vrot.slane %v4306, %v4354
  %v4356 = vlaneseq
  %v4357 = vshrl.u32 %v4356, 7
  %v4358 = vsub.s32 0, %v4357
  %v4359 = vrot.slane %v4289, %v4358
  %v4360 = vlaneseq
  %v4361 = vshrl.u32 %v4360, 7
  %v4362 = vsub.s32 0, %v4361
  %v4363 = vrot.slane %v4303, %v4362
  %v4364 = vlaneseq
  %v4365 = vshrl.u32 %v4364, 7
  %v4366 = vsub.s32 0, %v4365
  %v4367 = vrot.slane %v4305, %v4366
  %v4368 = vlaneseq
  %v4369 = vshrl.u32 %v4368, 7
  %v4370 = vsub.s32 0, %v4369
  %v4371 = vrot.slane %v4307, %v4370
  %v4388 = vadd.f32 %v4311, %v4198
  %v4389 = vadd.f32 %v4311, %v4204
  %v4390 = vadd.f32 %v4315, %v4198
  %v4391 = vadd.f32 %v4315, %v4204
  %v4392 = vadd.f32 %v4319, %v4198
  %v4393 = vadd.f32 %v4319, %v4204
  %v4394 = vadd.f32 %v4323, %v4198
  %v4395 = vadd.f32 %v4323, %v4204
  %v4396 = vadd.f32 %v4327, %v4198
  %v4397 = vadd.f32 %v4327, %v4204
  %v4398 = vadd.f32 %v4331, %v4198
  %v4399 = vadd.f32 %v4331, %v4204
  %v4400 = vadd.f32 %v4335, %v4198
  %v4401 = vadd.f32 %v4335, %v4204
  %v4402 = vadd.f32 %v4339, %v4198
  %v4403 = vadd.f32 %v4339, %v4204
  %v4404 = vadd.f32 %v4343, %v4198
  %v4405 = vadd.f32 %v4343, %v4204
  %v4406 = vadd.f32 %v4347, %v4198
  %v4407 = vadd.f32 %v4347, %v4204
  %v4408 = vadd.f32 %v4351, %v4198
  %v4409 = vadd.f32 %v4351, %v4204
  %v4410 = vadd.f32 %v4355, %v4198
  %v4411 = vadd.f32 %v4355, %v4204
  %v4412 = vadd.f32 %v4359, %v4198
  %v4413 = vadd.f32 %v4359, %v4204
  %v4414 = vadd.f32 %v4363, %v4198
  %v4415 = vadd.f32 %v4363, %v4204
  %v4416 = vadd.f32 %v4367, %v4198
  %v4417 = vadd.f32 %v4367, %v4204
  %v4418 = vadd.f32 %v4371, %v4198
  %v4419 = vadd.f32 %v4371, %v4204
  %vm4420 = vcmp.gt.f32.partialorder %v4388, 0.0
  %vm4421 = vcmp.gt.f32.partialorder %v4389, 0.0
  %vm4422 = vcmp.gt.f32.partialorder %v4390, 0.0
  %vm4423 = vcmp.gt.f32.partialorder %v4391, 0.0
  %vm4424 = vcmp.gt.f32.partialorder %v4392, 0.0
  %vm4425 = vcmp.gt.f32.partialorder %v4393, 0.0
  %vm4426 = vcmp.gt.f32.partialorder %v4394, 0.0
  %vm4427 = vcmp.gt.f32.partialorder %v4395, 0.0
  %vm4428 = vcmp.gt.f32.partialorder %v4396, 0.0
  %vm4429 = vcmp.gt.f32.partialorder %v4397, 0.0
  %vm4430 = vcmp.gt.f32.partialorder %v4398, 0.0
  %vm4431 = vcmp.gt.f32.partialorder %v4399, 0.0
  %vm4432 = vcmp.gt.f32.partialorder %v4400, 0.0
  %vm4433 = vcmp.gt.f32.partialorder %v4401, 0.0
  %vm4434 = vcmp.gt.f32.partialorder %v4402, 0.0
  %vm4435 = vcmp.gt.f32.partialorder %v4403, 0.0
  %vm4436 = vcmp.gt.f32.partialorder %v4404, 0.0
  %vm4437 = vcmp.gt.f32.partialorder %v4405, 0.0
  %vm4438 = vcmp.gt.f32.partialorder %v4406, 0.0
  %vm4439 = vcmp.gt.f32.partialorder %v4407, 0.0
  %vm4440 = vcmp.gt.f32.partialorder %v4408, 0.0
  %vm4441 = vcmp.gt.f32.partialorder %v4409, 0.0
  %vm4442 = vcmp.gt.f32.partialorder %v4410, 0.0
  %vm4443 = vcmp.gt.f32.partialorder %v4411, 0.0
  %vm4444 = vcmp.gt.f32.partialorder %v4412, 0.0
  %vm4445 = vcmp.gt.f32.partialorder %v4413, 0.0
  %vm4446 = vcmp.gt.f32.partialorder %v4414, 0.0
  %vm4447 = vcmp.gt.f32.partialorder %v4415, 0.0
  %vm4448 = vcmp.gt.f32.partialorder %v4416, 0.0
  %vm4449 = vcmp.gt.f32.partialorder %v4417, 0.0
  %vm4450 = vcmp.gt.f32.partialorder %v4418, 0.0
  %vm4451 = vcmp.gt.f32.partialorder %v4419, 0.0
  %v4452 = vmul.f32 %v4388, 0.2
  %v4453 = vmul.f32 %v4389, 0.2
  %v4454 = vmul.f32 %v4390, 0.2
  %v4455 = vmul.f32 %v4391, 0.2
  %v4456 = vmul.f32 %v4392, 0.2
  %v4457 = vmul.f32 %v4393, 0.2
  %v4458 = vmul.f32 %v4394, 0.2
  %v4459 = vmul.f32 %v4395, 0.2
  %v4460 = vmul.f32 %v4396, 0.2
  %v4461 = vmul.f32 %v4397, 0.2
  %v4462 = vmul.f32 %v4398, 0.2
  %v4463 = vmul.f32 %v4399, 0.2
  %v4464 = vmul.f32 %v4400, 0.2
  %v4465 = vmul.f32 %v4401, 0.2
  %v4466 = vmul.f32 %v4402, 0.2
  %v4467 = vmul.f32 %v4403, 0.2
  %v4468 = vmul.f32 %v4404, 0.2
  %v4469 = vmul.f32 %v4405, 0.2
  %v4470 = vmul.f32 %v4406, 0.2
  %v4471 = vmul.f32 %v4407, 0.2
  %v4472 = vmul.f32 %v4408, 0.2
  %v4473 = vmul.f32 %v4409, 0.2
  %v4474 = vmul.f32 %v4410, 0.2
  %v4475 = vmul.f32 %v4411, 0.2
  %v4476 = vmul.f32 %v4412, 0.2
  %v4477 = vmul.f32 %v4413, 0.2
  %v4478 = vmul.f32 %v4414, 0.2
  %v4479 = vmul.f32 %v4415, 0.2
  %v4480 = vmul.f32 %v4416, 0.2
  %v4481 = vmul.f32 %v4417, 0.2
  %v4482 = vmul.f32 %v4418, 0.2
  %v4483 = vmul.f32 %v4419, 0.2
  %v4484 = vsel %vm4420, %v4388, %v4452
  %v4485 = vsel %vm4421, %v4389, %v4453
  %v4486 = vsel %vm4422, %v4390, %v4454
  %v4487 = vsel %vm4423, %v4391, %v4455
  %v4488 = vsel %vm4424, %v4392, %v4456
  %v4489 = vsel %vm4425, %v4393, %v4457
  %v4490 = vsel %vm4426, %v4394, %v4458
  %v4491 = vsel %vm4427, %v4395, %v4459
  %v4492 = vsel %vm4428, %v4396, %v4460
  %v4493 = vsel %vm4429, %v4397, %v4461
  %v4494 = vsel %vm4430, %v4398, %v4462
  %v4495 = vsel %vm4431, %v4399, %v4463
  %v4496 = vsel %vm4432, %v4400, %v4464
  %v4497 = vsel %vm4433, %v4401, %v4465
  %v4498 = vsel %vm4434, %v4402, %v4466
  %v4499 = vsel %vm4435, %v4403, %v4467
  %v4500 = vsel %vm4436, %v4404, %v4468
  %v4501 = vsel %vm4437, %v4405, %v4469
  %v4502 = vsel %vm4438, %v4406, %v4470
  %v4503 = vsel %vm4439, %v4407, %v4471
  %v4504 = vsel %vm4440, %v4408, %v4472
  %v4505 = vsel %vm4441, %v4409, %v4473
  %v4506 = vsel %vm4442, %v4410, %v4474
  %v4507 = vsel %vm4443, %v4411, %v4475
  %v4508 = vsel %vm4444, %v4412, %v4476
  %v4509 = vsel %vm4445, %v4413, %v4477
  %v4510 = vsel %vm4446, %v4414, %v4478
  %v4511 = vsel %vm4447, %v4415, %v4479
  %v4512 = vsel %vm4448, %v4416, %v4480
  %v4513 = vsel %vm4449, %v4417, %v4481
  %v4514 = vsel %vm4450, %v4418, %v4482
  %v4515 = vsel %vm4451, %v4419, %v4483
  %4516 = vmatprep.subr.mxu0 0.0
  %4517 = vmatpush1.msra.mxu0 %v4067
  %4518 = vmatprep.subr.mxu0 0.0
  %4519 = vmatpush1.msra.mxu0 %v4068
  %4520 = vmatprep.subr.mxu0 0.0
  %4521 = vmatpush1.msra.mxu0 %v4069
  %4522 = vmatprep.subr.mxu0 0.0
  %4523 = vmatpush1.msra.mxu0 %v4070
  %4524 = vmatprep.subr.mxu0 0.0
  %4525 = vmatpush1.msra.mxu0 %v4071
  %4526 = vmatprep.subr.mxu0 0.0
  %4527 = vmatpush1.msra.mxu0 %v4072
  %4528 = vmatprep.subr.mxu0 0.0
  %4529 = vmatpush1.msra.mxu0 %v4073
  %4530 = vmatprep.subr.mxu0 0.0
  %4531 = vmatpush1.msra.mxu0 %v4074
  %4532 = vmatprep.subr.mxu0 0.0
  %4533 = vmatpush1.msra.mxu0 %v4075
  %4534 = vmatprep.subr.mxu0 0.0
  %4535 = vmatpush1.msra.mxu0 %v4076
  %4536 = vmatprep.subr.mxu0 0.0
  %4537 = vmatpush1.msra.mxu0 %v4077
  %4538 = vmatprep.subr.mxu0 0.0
  %4539 = vmatpush1.msra.mxu0 %v4078
  %4540 = vmatprep.subr.mxu0 0.0
  %4541 = vmatpush1.msra.mxu0 %v4079
  %4542 = vmatprep.subr.mxu0 0.0
  %4543 = vmatpush1.msra.mxu0 %v4080
  %4544 = vmatprep.subr.mxu0 0.0
  %4545 = vmatpush1.msra.mxu0 %v4081
  %4546 = vmatprep.subr.mxu0 0.0
  %4547 = vmatpush1.msra.mxu0 %v4082
  %4548 = vmatprep.subr.mxu0 0.0
  %4549 = vmatpush1.msra.mxu0 0.0
  %4550 = vmatprep.subr.mxu0 0.0
  %4551 = vmatpush1.msra.mxu0 0.0
  %4552 = vmatprep.subr.mxu0 0.0
  %4553 = vmatpush1.msra.mxu0 0.0
  %4554 = vmatprep.subr.mxu0 0.0
  %4555 = vmatpush1.msra.mxu0 0.0
  %4556 = vmatprep.subr.mxu0 0.0
  %4557 = vmatpush1.msra.mxu0 0.0
  %4558 = vmatprep.subr.mxu0 0.0
  %4559 = vmatpush1.msra.mxu0 0.0
  %4560 = vmatprep.subr.mxu0 0.0
  %4561 = vmatpush1.msra.mxu0 0.0
  %4562 = vmatprep.subr.mxu0 0.0
  %4563 = vmatpush1.msra.mxu0 0.0
  %4564 = vmatprep.subr.mxu0 0.0
  %4565 = vmatpush1.msra.mxu0 0.0
  %4566 = vmatprep.subr.mxu0 0.0
  %4567 = vmatpush1.msra.mxu0 0.0
  %4568 = vmatprep.subr.mxu0 0.0
  %4569 = vmatpush1.msra.mxu0 0.0
  %4570 = vmatprep.subr.mxu0 0.0
  %4571 = vmatpush1.msra.mxu0 0.0
  %4572 = vmatprep.subr.mxu0 0.0
  %4573 = vmatpush1.msra.mxu0 0.0
  %4574 = vmatprep.subr.mxu0 0.0
  %4575 = vmatpush1.msra.mxu0 0.0
  %4576 = vmatprep.subr.mxu0 0.0
  %4577 = vmatpush1.msra.mxu0 0.0
  %4578 = vmatprep.subr.mxu0 0.0
  %4579 = vmatpush1.msra.mxu0 0.0
  %4580 = vmatprep.mubr.f32.mxu0 0.0
  %4581 = vmatmul.mubr.f32.gmra.mrb[0].mxu0 %v4484
  %v4582 = vpop.f32.mrb[0].mxu0
  %v4583 = vadd.f32 0.0, %v4582
  %v4584 = vpop.f32.mrb[0].mxu0
  %4585 = vmatprep.mubr.f32.mxu0 0.0
  %4586 = vmatmul.mubr.f32.gmra.mrb[0].mxu0 %v4485
  %v4587 = vpop.f32.mrb[0].mxu0
  %v4588 = vadd.f32 0.0, %v4587
  %v4589 = vpop.f32.mrb[0].mxu0
  %4590 = vmatprep.mubr.f32.mxu0 0.0
  %4591 = vmatmul.mubr.f32.gmra.mrb[0].mxu0 %v4486
  %v4592 = vpop.f32.mrb[0].mxu0
  %v4593 = vadd.f32 0.0, %v4592
  %v4594 = vpop.f32.mrb[0].mxu0
  %4595 = vmatprep.mubr.f32.mxu0 0.0
  %4596 = vmatmul.mubr.f32.gmra.mrb[0].mxu0 %v4487
  %v4597 = vpop.f32.mrb[0].mxu0
  %v4598 = vadd.f32 0.0, %v4597
  %v4599 = vpop.f32.mrb[0].mxu0
  %4600 = vmatprep.mubr.f32.mxu0 0.0
  %4601 = vmatmul.mubr.f32.gmra.mrb[0].mxu0 %v4488
  %v4602 = vpop.f32.mrb[0].mxu0
  %v4603 = vadd.f32 0.0, %v4602
  %v4604 = vpop.f32.mrb[0].mxu0
  %4605 = vmatprep.mubr.f32.mxu0 0.0
  %4606 = vmatmul.mubr.f32.gmra.mrb[0].mxu0 %v4489
  %v4607 = vpop.f32.mrb[0].mxu0
  %v4608 = vadd.f32 0.0, %v4607
  %v4609 = vpop.f32.mrb[0].mxu0
  %4610 = vmatprep.mubr.f32.mxu0 0.0
  %4611 = vmatmul.mubr.f32.gmra.mrb[0].mxu0 %v4490
  %v4612 = vpop.f32.mrb[0].mxu0
  %v4613 = vadd.f32 0.0, %v4612
  %v4614 = vpop.f32.mrb[0].mxu0
  %4615 = vmatprep.mubr.f32.mxu0 0.0
  %4616 = vmatmul.mubr.f32.gmra.mrb[0].mxu0 %v4491
  %v4617 = vpop.f32.mrb[0].mxu0
  %v4618 = vadd.f32 0.0, %v4617
  %v4619 = vpop.f32.mrb[0].mxu0
  %4620 = vmatprep.mubr.f32.mxu0 0.0
  %4621 = vmatmul.mubr.f32.gmra.mrb[0].mxu0 %v4492
  %v4622 = vpop.f32.mrb[0].mxu0
  %v4623 = vadd.f32 0.0, %v4622
  %v4624 = vpop.f32.mrb[0].mxu0
  %4625 = vmatprep.mubr.f32.mxu0 0.0
  %4626 = vmatmul.mubr.f32.gmra.mrb[0].mxu0 %v4493
  %v4627 = vpop.f32.mrb[0].mxu0
  %v4628 = vadd.f32 0.0, %v4627
  %v4629 = vpop.f32.mrb[0].mxu0
  %4630 = vmatprep.mubr.f32.mxu0 0.0
  %4631 = vmatmul.mubr.f32.gmra.mrb[0].mxu0 %v4494
  %v4632 = vpop.f32.mrb[0].mxu0
  %v4633 = vadd.f32 0.0, %v4632
  %v4634 = vpop.f32.mrb[0].mxu0
  %4635 = vmatprep.mubr.f32.mxu0 0.0
  %4636 = vmatmul.mubr.f32.gmra.mrb[0].mxu0 %v4495
  %v4637 = vpop.f32.mrb[0].mxu0
  %v4638 = vadd.f32 0.0, %v4637
  %v4639 = vpop.f32.mrb[0].mxu0
  %4640 = vmatprep.mubr.f32.mxu0 0.0
  %4641 = vmatmul.mubr.f32.gmra.mrb[0].mxu0 %v4496
  %v4642 = vpop.f32.mrb[0].mxu0
  %v4643 = vadd.f32 0.0, %v4642
  %v4644 = vpop.f32.mrb[0].mxu0
  %4645 = vmatprep.mubr.f32.mxu0 0.0
  %4646 = vmatmul.mubr.f32.gmra.mrb[0].mxu0 %v4497
  %v4647 = vpop.f32.mrb[0].mxu0
  %v4648 = vadd.f32 0.0, %v4647
  %v4649 = vpop.f32.mrb[0].mxu0
  %4650 = vmatprep.mubr.f32.mxu0 0.0
  %4651 = vmatmul.mubr.f32.gmra.mrb[0].mxu0 %v4498
  %v4652 = vpop.f32.mrb[0].mxu0
  %v4653 = vadd.f32 0.0, %v4652
  %v4654 = vpop.f32.mrb[0].mxu0
  %4655 = vmatprep.mubr.f32.mxu0 0.0
  %4656 = vmatmul.mubr.f32.gmra.mrb[0].mxu0 %v4499
  %v4657 = vpop.f32.mrb[0].mxu0
  %v4658 = vadd.f32 0.0, %v4657
  %v4659 = vpop.f32.mrb[0].mxu0
  %4660 = vmatprep.mubr.f32.mxu0 0.0
  %4661 = vmatmul.mubr.f32.gmra.mrb[0].mxu0 %v4500
  %v4662 = vpop.f32.mrb[0].mxu0
  %v4663 = vadd.f32 0.0, %v4662
  %v4664 = vpop.f32.mrb[0].mxu0
  %4665 = vmatprep.mubr.f32.mxu0 0.0
  %4666 = vmatmul.mubr.f32.gmra.mrb[0].mxu0 %v4501
  %v4667 = vpop.f32.mrb[0].mxu0
  %v4668 = vadd.f32 0.0, %v4667
  %v4669 = vpop.f32.mrb[0].mxu0
  %4670 = vmatprep.mubr.f32.mxu0 0.0
  %4671 = vmatmul.mubr.f32.gmra.mrb[0].mxu0 %v4502
  %v4672 = vpop.f32.mrb[0].mxu0
  %v4673 = vadd.f32 0.0, %v4672
  %v4674 = vpop.f32.mrb[0].mxu0
  %4675 = vmatprep.mubr.f32.mxu0 0.0
  %4676 = vmatmul.mubr.f32.gmra.mrb[0].mxu0 %v4503
  %v4677 = vpop.f32.mrb[0].mxu0
  %v4678 = vadd.f32 0.0, %v4677
  %v4679 = vpop.f32.mrb[0].mxu0
  %4680 = vmatprep.mubr.f32.mxu0 0.0
  %4681 = vmatmul.mubr.f32.gmra.mrb[0].mxu0 %v4504
  %v4682 = vpop.f32.mrb[0].mxu0
  %v4683 = vadd.f32 0.0, %v4682
  %v4684 = vpop.f32.mrb[0].mxu0
  %4685 = vmatprep.mubr.f32.mxu0 0.0
  %4686 = vmatmul.mubr.f32.gmra.mrb[0].mxu0 %v4505
  %v4687 = vpop.f32.mrb[0].mxu0
  %v4688 = vadd.f32 0.0, %v4687
  %v4689 = vpop.f32.mrb[0].mxu0
  %4690 = vmatprep.mubr.f32.mxu0 0.0
  %4691 = vmatmul.mubr.f32.gmra.mrb[0].mxu0 %v4506
  %v4692 = vpop.f32.mrb[0].mxu0
  %v4693 = vadd.f32 0.0, %v4692
  %v4694 = vpop.f32.mrb[0].mxu0
  %4695 = vmatprep.mubr.f32.mxu0 0.0
  %4696 = vmatmul.mubr.f32.gmra.mrb[0].mxu0 %v4507
  %v4697 = vpop.f32.mrb[0].mxu0
  %v4698 = vadd.f32 0.0, %v4697
  %v4699 = vpop.f32.mrb[0].mxu0
  %4700 = vmatprep.mubr.f32.mxu0 0.0
  %4701 = vmatmul.mubr.f32.gmra.mrb[0].mxu0 %v4508
  %v4702 = vpop.f32.mrb[0].mxu0
  %v4703 = vadd.f32 0.0, %v4702
  %v4704 = vpop.f32.mrb[0].mxu0
  %4705 = vmatprep.mubr.f32.mxu0 0.0
  %4706 = vmatmul.mubr.f32.gmra.mrb[0].mxu0 %v4509
  %v4707 = vpop.f32.mrb[0].mxu0
  %v4708 = vadd.f32 0.0, %v4707
  %v4709 = vpop.f32.mrb[0].mxu0
  %4710 = vmatprep.mubr.f32.mxu0 0.0
  %4711 = vmatmul.mubr.f32.gmra.mrb[0].mxu0 %v4510
  %v4712 = vpop.f32.mrb[0].mxu0
  %v4713 = vadd.f32 0.0, %v4712
  %v4714 = vpop.f32.mrb[0].mxu0
  %4715 = vmatprep.mubr.f32.mxu0 0.0
  %4716 = vmatmul.mubr.f32.gmra.mrb[0].mxu0 %v4511
  %v4717 = vpop.f32.mrb[0].mxu0
  %v4718 = vadd.f32 0.0, %v4717
  %v4719 = vpop.f32.mrb[0].mxu0
  %4720 = vmatprep.mubr.f32.mxu0 0.0
  %4721 = vmatmul.mubr.f32.gmra.mrb[0].mxu0 %v4512
  %v4722 = vpop.f32.mrb[0].mxu0
  %v4723 = vadd.f32 0.0, %v4722
  %v4724 = vpop.f32.mrb[0].mxu0
  %4725 = vmatprep.mubr.f32.mxu0 0.0
  %4726 = vmatmul.mubr.f32.gmra.mrb[0].mxu0 %v4513
  %v4727 = vpop.f32.mrb[0].mxu0
  %v4728 = vadd.f32 0.0, %v4727
  %v4729 = vpop.f32.mrb[0].mxu0
  %4730 = vmatprep.mubr.f32.mxu0 0.0
  %4731 = vmatmul.mubr.f32.gmra.mrb[0].mxu0 %v4514
  %v4732 = vpop.f32.mrb[0].mxu0
  %v4733 = vadd.f32 0.0, %v4732
  %v4734 = vpop.f32.mrb[0].mxu0
  %4735 = vmatprep.mubr.f32.mxu0 0.0
  %4736 = vmatmul.mubr.f32.gmra.mrb[0].mxu0 %v4515
  %v4737 = vpop.f32.mrb[0].mxu0
  %v4738 = vadd.f32 0.0, %v4737
  %v4739 = vpop.f32.mrb[0].mxu0
  %4740 = vdwg.mxu0
  %v4741 = vadd.f32 %v4583, %v265
  %v4742 = vadd.f32 %v4588, %v266
  %v4743 = vadd.f32 %v4593, %v267
  %v4744 = vadd.f32 %v4598, %v268
  %v4745 = vadd.f32 %v4603, %v269
  %v4746 = vadd.f32 %v4608, %v270
  %v4747 = vadd.f32 %v4613, %v271
  %v4748 = vadd.f32 %v4618, %v272
  %v4749 = vadd.f32 %v4623, %v273
  %v4750 = vadd.f32 %v4628, %v274
  %v4751 = vadd.f32 %v4633, %v275
  %v4752 = vadd.f32 %v4638, %v276
  %v4753 = vadd.f32 %v4643, %v277
  %v4754 = vadd.f32 %v4648, %v278
  %v4755 = vadd.f32 %v4653, %v279
  %v4756 = vadd.f32 %v4658, %v280
  %v4757 = vadd.f32 %v4663, %v281
  %v4758 = vadd.f32 %v4668, %v282
  %v4759 = vadd.f32 %v4673, %v283
  %v4760 = vadd.f32 %v4678, %v284
  %v4761 = vadd.f32 %v4683, %v285
  %v4762 = vadd.f32 %v4688, %v286
  %v4763 = vadd.f32 %v4693, %v287
  %v4764 = vadd.f32 %v4698, %v288
  %v4765 = vadd.f32 %v4703, %v289
  %v4766 = vadd.f32 %v4708, %v290
  %v4767 = vadd.f32 %v4713, %v291
  %v4768 = vadd.f32 %v4718, %v292
  %v4769 = vadd.f32 %v4723, %v293
  %v4770 = vadd.f32 %v4728, %v294
  %v4771 = vadd.f32 %v4733, %v295
  %v4772 = vadd.f32 %v4738, %v296
  %vm4773 = vcmask 7168
  %v4774 = vsel %vm4773, %v4741, -inf
  %v4775 = vsel %vm4773, %v4742, -inf
  %v4776 = vmax.f32 %v4774, %v4775
  %v4777 = vrot.slane %v4776, 4
  %v4778 = vmax.f32 %v4776, %v4777
  %v4779 = vrot.slane %v4778, 2
  %v4780 = vmax.f32 %v4778, %v4779
  %v4781 = vrot.slane %v4780, 1
  %v4782 = vmax.f32 %v4780, %v4781
  %v4783 = vsel %vm4773, %v4743, -inf
  %v4784 = vsel %vm4773, %v4744, -inf
  %v4785 = vmax.f32 %v4783, %v4784
  %v4786 = vrot.slane %v4785, 4
  %v4787 = vmax.f32 %v4785, %v4786
  %v4788 = vrot.slane %v4787, 2
  %v4789 = vmax.f32 %v4787, %v4788
  %v4790 = vrot.slane %v4789, 1
  %v4791 = vmax.f32 %v4789, %v4790
  %v4792 = vsel %vm4773, %v4745, -inf
  %v4793 = vsel %vm4773, %v4746, -inf
  %v4794 = vmax.f32 %v4792, %v4793
  %v4795 = vrot.slane %v4794, 4
  %v4796 = vmax.f32 %v4794, %v4795
  %v4797 = vrot.slane %v4796, 2
  %v4798 = vmax.f32 %v4796, %v4797
  %v4799 = vrot.slane %v4798, 1
  %v4800 = vmax.f32 %v4798, %v4799
  %v4801 = vsel %vm4773, %v4747, -inf
  %v4802 = vsel %vm4773, %v4748, -inf
  %v4803 = vmax.f32 %v4801, %v4802
  %v4804 = vrot.slane %v4803, 4
  %v4805 = vmax.f32 %v4803, %v4804
  %v4806 = vrot.slane %v4805, 2
  %v4807 = vmax.f32 %v4805, %v4806
  %v4808 = vrot.slane %v4807, 1
  %v4809 = vmax.f32 %v4807, %v4808
  %v4810 = vsel %vm4773, %v4749, -inf
  %v4811 = vsel %vm4773, %v4750, -inf
  %v4812 = vmax.f32 %v4810, %v4811
  %v4813 = vrot.slane %v4812, 4
  %v4814 = vmax.f32 %v4812, %v4813
  %v4815 = vrot.slane %v4814, 2
  %v4816 = vmax.f32 %v4814, %v4815
  %v4817 = vrot.slane %v4816, 1
  %v4818 = vmax.f32 %v4816, %v4817
  %v4819 = vsel %vm4773, %v4751, -inf
  %v4820 = vsel %vm4773, %v4752, -inf
  %v4821 = vmax.f32 %v4819, %v4820
  %v4822 = vrot.slane %v4821, 4
  %v4823 = vmax.f32 %v4821, %v4822
  %v4824 = vrot.slane %v4823, 2
  %v4825 = vmax.f32 %v4823, %v4824
  %v4826 = vrot.slane %v4825, 1
  %v4827 = vmax.f32 %v4825, %v4826
  %v4828 = vsel %vm4773, %v4753, -inf
  %v4829 = vsel %vm4773, %v4754, -inf
  %v4830 = vmax.f32 %v4828, %v4829
  %v4831 = vrot.slane %v4830, 4
  %v4832 = vmax.f32 %v4830, %v4831
  %v4833 = vrot.slane %v4832, 2
  %v4834 = vmax.f32 %v4832, %v4833
  %v4835 = vrot.slane %v4834, 1
  %v4836 = vmax.f32 %v4834, %v4835
  %v4837 = vsel %vm4773, %v4755, -inf
  %v4838 = vsel %vm4773, %v4756, -inf
  %v4839 = vmax.f32 %v4837, %v4838
  %v4840 = vrot.slane %v4839, 4
  %v4841 = vmax.f32 %v4839, %v4840
  %v4842 = vrot.slane %v4841, 2
  %v4843 = vmax.f32 %v4841, %v4842
  %v4844 = vrot.slane %v4843, 1
  %v4845 = vmax.f32 %v4843, %v4844
  %v4846 = vsel %vm4773, %v4757, -inf
  %v4847 = vsel %vm4773, %v4758, -inf
  %v4848 = vmax.f32 %v4846, %v4847
  %v4849 = vrot.slane %v4848, 4
  %v4850 = vmax.f32 %v4848, %v4849
  %v4851 = vrot.slane %v4850, 2
  %v4852 = vmax.f32 %v4850, %v4851
  %v4853 = vrot.slane %v4852, 1
  %v4854 = vmax.f32 %v4852, %v4853
  %v4855 = vsel %vm4773, %v4759, -inf
  %v4856 = vsel %vm4773, %v4760, -inf
  %v4857 = vmax.f32 %v4855, %v4856
  %v4858 = vrot.slane %v4857, 4
  %v4859 = vmax.f32 %v4857, %v4858
  %v4860 = vrot.slane %v4859, 2
  %v4861 = vmax.f32 %v4859, %v4860
  %v4862 = vrot.slane %v4861, 1
  %v4863 = vmax.f32 %v4861, %v4862
  %v4864 = vsel %vm4773, %v4761, -inf
  %v4865 = vsel %vm4773, %v4762, -inf
  %v4866 = vmax.f32 %v4864, %v4865
  %v4867 = vrot.slane %v4866, 4
  %v4868 = vmax.f32 %v4866, %v4867
  %v4869 = vrot.slane %v4868, 2
  %v4870 = vmax.f32 %v4868, %v4869
  %v4871 = vrot.slane %v4870, 1
  %v4872 = vmax.f32 %v4870, %v4871
  %v4873 = vsel %vm4773, %v4763, -inf
  %v4874 = vsel %vm4773, %v4764, -inf
  %v4875 = vmax.f32 %v4873, %v4874
  %v4876 = vrot.slane %v4875, 4
  %v4877 = vmax.f32 %v4875, %v4876
  %v4878 = vrot.slane %v4877, 2
  %v4879 = vmax.f32 %v4877, %v4878
  %v4880 = vrot.slane %v4879, 1
  %v4881 = vmax.f32 %v4879, %v4880
  %v4882 = vsel %vm4773, %v4765, -inf
  %v4883 = vsel %vm4773, %v4766, -inf
  %v4884 = vmax.f32 %v4882, %v4883
  %v4885 = vrot.slane %v4884, 4
  %v4886 = vmax.f32 %v4884, %v4885
  %v4887 = vrot.slane %v4886, 2
  %v4888 = vmax.f32 %v4886, %v4887
  %v4889 = vrot.slane %v4888, 1
  %v4890 = vmax.f32 %v4888, %v4889
  %v4891 = vsel %vm4773, %v4767, -inf
  %v4892 = vsel %vm4773, %v4768, -inf
  %v4893 = vmax.f32 %v4891, %v4892
  %v4894 = vrot.slane %v4893, 4
  %v4895 = vmax.f32 %v4893, %v4894
  %v4896 = vrot.slane %v4895, 2
  %v4897 = vmax.f32 %v4895, %v4896
  %v4898 = vrot.slane %v4897, 1
  %v4899 = vmax.f32 %v4897, %v4898
  %v4900 = vsel %vm4773, %v4769, -inf
  %v4901 = vsel %vm4773, %v4770, -inf
  %v4902 = vmax.f32 %v4900, %v4901
  %v4903 = vrot.slane %v4902, 4
  %v4904 = vmax.f32 %v4902, %v4903
  %v4905 = vrot.slane %v4904, 2
  %v4906 = vmax.f32 %v4904, %v4905
  %v4907 = vrot.slane %v4906, 1
  %v4908 = vmax.f32 %v4906, %v4907
  %v4909 = vsel %vm4773, %v4771, -inf
  %v4910 = vsel %vm4773, %v4772, -inf
  %v4911 = vmax.f32 %v4909, %v4910
  %v4912 = vrot.slane %v4911, 4
  %v4913 = vmax.f32 %v4911, %v4912
  %v4914 = vrot.slane %v4913, 2
  %v4915 = vmax.f32 %v4913, %v4914
  %v4916 = vrot.slane %v4915, 1
  %v4917 = vmax.f32 %v4915, %v4916
  %v4918 = vsub.f32 %v4741, %v4782
  %v4919 = vsub.f32 %v4742, %v4782
  %v4920 = vsub.f32 %v4743, %v4791
  %v4921 = vsub.f32 %v4744, %v4791
  %v4922 = vsub.f32 %v4745, %v4800
  %v4923 = vsub.f32 %v4746, %v4800
  %v4924 = vsub.f32 %v4747, %v4809
  %v4925 = vsub.f32 %v4748, %v4809
  %v4926 = vsub.f32 %v4749, %v4818
  %v4927 = vsub.f32 %v4750, %v4818
  %v4928 = vsub.f32 %v4751, %v4827
  %v4929 = vsub.f32 %v4752, %v4827
  %v4930 = vsub.f32 %v4753, %v4836
  %v4931 = vsub.f32 %v4754, %v4836
  %v4932 = vsub.f32 %v4755, %v4845
  %v4933 = vsub.f32 %v4756, %v4845
  %v4934 = vsub.f32 %v4757, %v4854
  %v4935 = vsub.f32 %v4758, %v4854
  %v4936 = vsub.f32 %v4759, %v4863
  %v4937 = vsub.f32 %v4760, %v4863
  %v4938 = vsub.f32 %v4761, %v4872
  %v4939 = vsub.f32 %v4762, %v4872
  %v4940 = vsub.f32 %v4763, %v4881
  %v4941 = vsub.f32 %v4764, %v4881
  %v4942 = vsub.f32 %v4765, %v4890
  %v4943 = vsub.f32 %v4766, %v4890
  %v4944 = vsub.f32 %v4767, %v4899
  %v4945 = vsub.f32 %v4768, %v4899
  %v4946 = vsub.f32 %v4769, %v4908
  %v4947 = vsub.f32 %v4770, %v4908
  %v4948 = vsub.f32 %v4771, %v4917
  %v4949 = vsub.f32 %v4772, %v4917
  %v4950 = vmul.f32 %v4918, 1.442695
  %v4951 = vpow.pop %v4950
  %v4952 = vmul.f32 %v4919, 1.442695
  %v4953 = vpow.pop %v4952
  %v4954 = vmul.f32 %v4920, 1.442695
  %v4955 = vpow.pop %v4954
  %v4956 = vmul.f32 %v4921, 1.442695
  %v4957 = vpow.pop %v4956
  %v4958 = vmul.f32 %v4922, 1.442695
  %v4959 = vpow.pop %v4958
  %v4960 = vmul.f32 %v4923, 1.442695
  %v4961 = vpow.pop %v4960
  %v4962 = vmul.f32 %v4924, 1.442695
  %v4963 = vpow.pop %v4962
  %v4964 = vmul.f32 %v4925, 1.442695
  %v4965 = vpow.pop %v4964
  %v4966 = vmul.f32 %v4926, 1.442695
  %v4967 = vpow.pop %v4966
  %v4968 = vmul.f32 %v4927, 1.442695
  %v4969 = vpow.pop %v4968
  %v4970 = vmul.f32 %v4928, 1.442695
  %v4971 = vpow.pop %v4970
  %v4972 = vmul.f32 %v4929, 1.442695
  %v4973 = vpow.pop %v4972
  %v4974 = vmul.f32 %v4930, 1.442695
  %v4975 = vpow.pop %v4974
  %v4976 = vmul.f32 %v4931, 1.442695
  %v4977 = vpow.pop %v4976
  %v4978 = vmul.f32 %v4932, 1.442695
  %v4979 = vpow.pop %v4978
  %v4980 = vmul.f32 %v4933, 1.442695
  %v4981 = vpow.pop %v4980
  %v4982 = vmul.f32 %v4934, 1.442695
  %v4983 = vpow.pop %v4982
  %v4984 = vmul.f32 %v4935, 1.442695
  %v4985 = vpow.pop %v4984
  %v4986 = vmul.f32 %v4936, 1.442695
  %v4987 = vpow.pop %v4986
  %v4988 = vmul.f32 %v4937, 1.442695
  %v4989 = vpow.pop %v4988
  %v4990 = vmul.f32 %v4938, 1.442695
  %v4991 = vpow.pop %v4990
  %v4992 = vmul.f32 %v4939, 1.442695
  %v4993 = vpow.pop %v4992
  %v4994 = vmul.f32 %v4940, 1.442695
  %v4995 = vpow.pop %v4994
  %v4996 = vmul.f32 %v4941, 1.442695
  %v4997 = vpow.pop %v4996
  %v4998 = vmul.f32 %v4942, 1.442695
  %v4999 = vpow.pop %v4998
  %v5000 = vmul.f32 %v4943, 1.442695
  %v5001 = vpow.pop %v5000
  %v5002 = vmul.f32 %v4944, 1.442695
  %v5003 = vpow.pop %v5002
  %v5004 = vmul.f32 %v4945, 1.442695
  %v5005 = vpow.pop %v5004
  %v5006 = vmul.f32 %v4946, 1.442695
  %v5007 = vpow.pop %v5006
  %v5008 = vmul.f32 %v4947, 1.442695
  %v5009 = vpow.pop %v5008
  %v5010 = vmul.f32 %v4948, 1.442695
  %v5011 = vpow.pop %v5010
  %v5012 = vmul.f32 %v4949, 1.442695
  %v5013 = vpow.pop %v5012
  %v5014 = vsel %vm4773, %v4951, 0.0
  %v5015 = vsel %vm4773, %v4953, 0.0
  %v5016 = vadd.f32 %v5014, %v5015
  %v5017 = vrot.slane %v5016, 4
  %v5018 = vadd.f32 %v5016, %v5017
  %v5019 = vrot.slane %v5018, 2
  %v5020 = vadd.f32 %v5018, %v5019
  %v5021 = vrot.slane %v5020, 1
  %v5022 = vadd.f32 %v5020, %v5021
  %v5023 = vsel %vm4773, %v4955, 0.0
  %v5024 = vsel %vm4773, %v4957, 0.0
  %v5025 = vadd.f32 %v5023, %v5024
  %v5026 = vrot.slane %v5025, 4
  %v5027 = vadd.f32 %v5025, %v5026
  %v5028 = vrot.slane %v5027, 2
  %v5029 = vadd.f32 %v5027, %v5028
  %v5030 = vrot.slane %v5029, 1
  %v5031 = vadd.f32 %v5029, %v5030
  %v5032 = vsel %vm4773, %v4959, 0.0
  %v5033 = vsel %vm4773, %v4961, 0.0
  %v5034 = vadd.f32 %v5032, %v5033
  %v5035 = vrot.slane %v5034, 4
  %v5036 = vadd.f32 %v5034, %v5035
  %v5037 = vrot.slane %v5036, 2
  %v5038 = vadd.f32 %v5036, %v5037
  %v5039 = vrot.slane %v5038, 1
  %v5040 = vadd.f32 %v5038, %v5039
  %v5041 = vsel %vm4773, %v4963, 0.0
  %v5042 = vsel %vm4773, %v4965, 0.0
  %v5043 = vadd.f32 %v5041, %v5042
  %v5044 = vrot.slane %v5043, 4
  %v5045 = vadd.f32 %v5043, %v5044
  %v5046 = vrot.slane %v5045, 2
  %v5047 = vadd.f32 %v5045, %v5046
  %v5048 = vrot.slane %v5047, 1
  %v5049 = vadd.f32 %v5047, %v5048
  %v5050 = vsel %vm4773, %v4967, 0.0
  %v5051 = vsel %vm4773, %v4969, 0.0
  %v5052 = vadd.f32 %v5050, %v5051
  %v5053 = vrot.slane %v5052, 4
  %v5054 = vadd.f32 %v5052, %v5053
  %v5055 = vrot.slane %v5054, 2
  %v5056 = vadd.f32 %v5054, %v5055
  %v5057 = vrot.slane %v5056, 1
  %v5058 = vadd.f32 %v5056, %v5057
  %v5059 = vsel %vm4773, %v4971, 0.0
  %v5060 = vsel %vm4773, %v4973, 0.0
  %v5061 = vadd.f32 %v5059, %v5060
  %v5062 = vrot.slane %v5061, 4
  %v5063 = vadd.f32 %v5061, %v5062
  %v5064 = vrot.slane %v5063, 2
  %v5065 = vadd.f32 %v5063, %v5064
  %v5066 = vrot.slane %v5065, 1
  %v5067 = vadd.f32 %v5065, %v5066
  %v5068 = vsel %vm4773, %v4975, 0.0
  %v5069 = vsel %vm4773, %v4977, 0.0
  %v5070 = vadd.f32 %v5068, %v5069
  %v5071 = vrot.slane %v5070, 4
  %v5072 = vadd.f32 %v5070, %v5071
  %v5073 = vrot.slane %v5072, 2
  %v5074 = vadd.f32 %v5072, %v5073
  %v5075 = vrot.slane %v5074, 1
  %v5076 = vadd.f32 %v5074, %v5075
  %v5077 = vsel %vm4773, %v4979, 0.0
  %v5078 = vsel %vm4773, %v4981, 0.0
  %v5079 = vadd.f32 %v5077, %v5078
  %v5080 = vrot.slane %v5079, 4
  %v5081 = vadd.f32 %v5079, %v5080
  %v5082 = vrot.slane %v5081, 2
  %v5083 = vadd.f32 %v5081, %v5082
  %v5084 = vrot.slane %v5083, 1
  %v5085 = vadd.f32 %v5083, %v5084
  %v5086 = vsel %vm4773, %v4983, 0.0
  %v5087 = vsel %vm4773, %v4985, 0.0
  %v5088 = vadd.f32 %v5086, %v5087
  %v5089 = vrot.slane %v5088, 4
  %v5090 = vadd.f32 %v5088, %v5089
  %v5091 = vrot.slane %v5090, 2
  %v5092 = vadd.f32 %v5090, %v5091
  %v5093 = vrot.slane %v5092, 1
  %v5094 = vadd.f32 %v5092, %v5093
  %v5095 = vsel %vm4773, %v4987, 0.0
  %v5096 = vsel %vm4773, %v4989, 0.0
  %v5097 = vadd.f32 %v5095, %v5096
  %v5098 = vrot.slane %v5097, 4
  %v5099 = vadd.f32 %v5097, %v5098
  %v5100 = vrot.slane %v5099, 2
  %v5101 = vadd.f32 %v5099, %v5100
  %v5102 = vrot.slane %v5101, 1
  %v5103 = vadd.f32 %v5101, %v5102
  %v5104 = vsel %vm4773, %v4991, 0.0
  %v5105 = vsel %vm4773, %v4993, 0.0
  %v5106 = vadd.f32 %v5104, %v5105
  %v5107 = vrot.slane %v5106, 4
  %v5108 = vadd.f32 %v5106, %v5107
  %v5109 = vrot.slane %v5108, 2
  %v5110 = vadd.f32 %v5108, %v5109
  %v5111 = vrot.slane %v5110, 1
  %v5112 = vadd.f32 %v5110, %v5111
  %v5113 = vsel %vm4773, %v4995, 0.0
  %v5114 = vsel %vm4773, %v4997, 0.0
  %v5115 = vadd.f32 %v5113, %v5114
  %v5116 = vrot.slane %v5115, 4
  %v5117 = vadd.f32 %v5115, %v5116
  %v5118 = vrot.slane %v5117, 2
  %v5119 = vadd.f32 %v5117, %v5118
  %v5120 = vrot.slane %v5119, 1
  %v5121 = vadd.f32 %v5119, %v5120
  %v5122 = vsel %vm4773, %v4999, 0.0
  %v5123 = vsel %vm4773, %v5001, 0.0
  %v5124 = vadd.f32 %v5122, %v5123
  %v5125 = vrot.slane %v5124, 4
  %v5126 = vadd.f32 %v5124, %v5125
  %v5127 = vrot.slane %v5126, 2
  %v5128 = vadd.f32 %v5126, %v5127
  %v5129 = vrot.slane %v5128, 1
  %v5130 = vadd.f32 %v5128, %v5129
  %v5131 = vsel %vm4773, %v5003, 0.0
  %v5132 = vsel %vm4773, %v5005, 0.0
  %v5133 = vadd.f32 %v5131, %v5132
  %v5134 = vrot.slane %v5133, 4
  %v5135 = vadd.f32 %v5133, %v5134
  %v5136 = vrot.slane %v5135, 2
  %v5137 = vadd.f32 %v5135, %v5136
  %v5138 = vrot.slane %v5137, 1
  %v5139 = vadd.f32 %v5137, %v5138
  %v5140 = vsel %vm4773, %v5007, 0.0
  %v5141 = vsel %vm4773, %v5009, 0.0
  %v5142 = vadd.f32 %v5140, %v5141
  %v5143 = vrot.slane %v5142, 4
  %v5144 = vadd.f32 %v5142, %v5143
  %v5145 = vrot.slane %v5144, 2
  %v5146 = vadd.f32 %v5144, %v5145
  %v5147 = vrot.slane %v5146, 1
  %v5148 = vadd.f32 %v5146, %v5147
  %v5149 = vsel %vm4773, %v5011, 0.0
  %v5150 = vsel %vm4773, %v5013, 0.0
  %v5151 = vadd.f32 %v5149, %v5150
  %v5152 = vrot.slane %v5151, 4
  %v5153 = vadd.f32 %v5151, %v5152
  %v5154 = vrot.slane %v5153, 2
  %v5155 = vadd.f32 %v5153, %v5154
  %v5156 = vrot.slane %v5155, 1
  %v5157 = vadd.f32 %v5155, %v5156
  %v5159 = vsel %vm4773, %v4951, 0
  %v5162 = vsel %vm4773, %v4953, 0
  %v5165 = vsel %vm4773, %v4955, 0
  %v5168 = vsel %vm4773, %v4957, 0
  %v5171 = vsel %vm4773, %v4959, 0
  %v5174 = vsel %vm4773, %v4961, 0
  %v5177 = vsel %vm4773, %v4963, 0
  %v5180 = vsel %vm4773, %v4965, 0
  %v5183 = vsel %vm4773, %v4967, 0
  %v5186 = vsel %vm4773, %v4969, 0
  %v5189 = vsel %vm4773, %v4971, 0
  %v5192 = vsel %vm4773, %v4973, 0
  %v5195 = vsel %vm4773, %v4975, 0
  %v5198 = vsel %vm4773, %v4977, 0
  %v5201 = vsel %vm4773, %v4979, 0
  %v5204 = vsel %vm4773, %v4981, 0
  %v5207 = vsel %vm4773, %v4983, 0
  %v5210 = vsel %vm4773, %v4985, 0
  %v5213 = vsel %vm4773, %v4987, 0
  %v5216 = vsel %vm4773, %v4989, 0
  %v5219 = vsel %vm4773, %v4991, 0
  %v5222 = vsel %vm4773, %v4993, 0
  %v5225 = vsel %vm4773, %v4995, 0
  %v5228 = vsel %vm4773, %v4997, 0
  %v5231 = vsel %vm4773, %v4999, 0
  %v5234 = vsel %vm4773, %v5001, 0
  %v5237 = vsel %vm4773, %v5003, 0
  %v5240 = vsel %vm4773, %v5005, 0
  %v5243 = vsel %vm4773, %v5007, 0
  %v5246 = vsel %vm4773, %v5009, 0
  %v5249 = vsel %vm4773, %v5011, 0
  %v5252 = vsel %vm4773, %v5013, 0
  %vm5254 = vcmask 1040384
  %v5256 = vsel %vm5254, %v4083, 0
  %5258 = vmatprep.subr.mxu0 0.0
  %5259 = vmatpush1.msra.mxu0 %v5256
  %5260 = vmatprep.subr.mxu0 0.0
  %5261 = vmatpush1.msra.mxu0 0.0
  %5262 = vmatprep.subr.mxu0 0.0
  %5263 = vmatpush1.msra.mxu0 0.0
  %5264 = vmatprep.subr.mxu0 0.0
  %5265 = vmatpush1.msra.mxu0 0.0
  %5266 = vmatprep.subr.mxu0 0.0
  %5267 = vmatpush1.msra.mxu0 0.0
  %5268 = vmatprep.subr.mxu0 0.0
  %5269 = vmatpush1.msra.mxu0 0.0
  %5270 = vmatprep.subr.mxu0 0.0
  %5271 = vmatpush1.msra.mxu0 0.0
  %5272 = vmatprep.subr.mxu0 0.0
  %5273 = vmatpush1.msra.mxu0 0.0
  %5274 = vmatprep.subr.mxu0 0.0
  %5275 = vmatpush1.msra.mxu0 0.0
  %5276 = vmatprep.subr.mxu0 0.0
  %5277 = vmatpush1.msra.mxu0 0.0
  %5278 = vmatprep.subr.mxu0 0.0
  %5279 = vmatpush1.msra.mxu0 0.0
  %5280 = vmatprep.subr.mxu0 0.0
  %5281 = vmatpush1.msra.mxu0 0.0
  %5282 = vmatprep.subr.mxu0 0.0
  %5283 = vmatpush1.msra.mxu0 0.0
  %5284 = vmatprep.subr.mxu0 0.0
  %5285 = vmatpush1.msra.mxu0 0.0
  %5286 = vmatprep.subr.mxu0 0.0
  %5287 = vmatpush1.msra.mxu0 0.0
  %5288 = vmatprep.subr.mxu0 0.0
  %5289 = vmatpush1.msra.mxu0 0.0
  %5290 = vmatprep.subr.mxu0 0.0
  %5291 = vmatpush1.msra.mxu0 0.0
  %5292 = vmatprep.subr.mxu0 0.0
  %5293 = vmatpush1.msra.mxu0 0.0
  %5294 = vmatprep.subr.mxu0 0.0
  %5295 = vmatpush1.msra.mxu0 0.0
  %5296 = vmatprep.subr.mxu0 0.0
  %5297 = vmatpush1.msra.mxu0 0.0
  %5298 = vmatprep.subr.mxu0 0.0
  %5299 = vmatpush1.msra.mxu0 0.0
  %5300 = vmatprep.subr.mxu0 0.0
  %5301 = vmatpush1.msra.mxu0 0.0
  %5302 = vmatprep.subr.mxu0 0.0
  %5303 = vmatpush1.msra.mxu0 0.0
  %5304 = vmatprep.subr.mxu0 0.0
  %5305 = vmatpush1.msra.mxu0 0.0
  %5306 = vmatprep.subr.mxu0 0.0
  %5307 = vmatpush1.msra.mxu0 0.0
  %5308 = vmatprep.subr.mxu0 0.0
  %5309 = vmatpush1.msra.mxu0 0.0
  %5310 = vmatprep.subr.mxu0 0.0
  %5311 = vmatpush1.msra.mxu0 0.0
  %5312 = vmatprep.subr.mxu0 0.0
  %5313 = vmatpush1.msra.mxu0 0.0
  %5314 = vmatprep.subr.mxu0 0.0
  %5315 = vmatpush1.msra.mxu0 0.0
  %5316 = vmatprep.subr.mxu0 0.0
  %5317 = vmatpush1.msra.mxu0 0.0
  %5318 = vmatprep.subr.mxu0 0.0
  %5319 = vmatpush1.msra.mxu0 0.0
  %5320 = vmatprep.subr.mxu0 0.0
  %5321 = vmatpush1.msra.mxu0 0.0
  %5322 = vmatprep.mubr.f32.mxu0 0.0
  %5323 = vmatmul.mubr.f32.gmra.mrb[0].mxu0 %v5159
  %v5324 = vpop.f32.mrb[0].mxu0
  %v5325 = vadd.f32 0.0, %v5324
  %v5326 = vpop.f32.mrb[0].mxu0
  %5327 = vmatprep.mubr.f32.mxu0 0.0
  %5328 = vmatmul.mubr.f32.gmra.mrb[0].mxu0 %v5162
  %v5329 = vpop.f32.mrb[0].mxu0
  %v5330 = vadd.f32 0.0, %v5329
  %v5331 = vpop.f32.mrb[0].mxu0
  %5332 = vmatprep.mubr.f32.mxu0 0.0
  %5333 = vmatmul.mubr.f32.gmra.mrb[0].mxu0 %v5165
  %v5334 = vpop.f32.mrb[0].mxu0
  %v5335 = vadd.f32 0.0, %v5334
  %v5336 = vpop.f32.mrb[0].mxu0
  %5337 = vmatprep.mubr.f32.mxu0 0.0
  %5338 = vmatmul.mubr.f32.gmra.mrb[0].mxu0 %v5168
  %v5339 = vpop.f32.mrb[0].mxu0
  %v5340 = vadd.f32 0.0, %v5339
  %v5341 = vpop.f32.mrb[0].mxu0
  %5342 = vmatprep.mubr.f32.mxu0 0.0
  %5343 = vmatmul.mubr.f32.gmra.mrb[0].mxu0 %v5171
  %v5344 = vpop.f32.mrb[0].mxu0
  %v5345 = vadd.f32 0.0, %v5344
  %v5346 = vpop.f32.mrb[0].mxu0
  %5347 = vmatprep.mubr.f32.mxu0 0.0
  %5348 = vmatmul.mubr.f32.gmra.mrb[0].mxu0 %v5174
  %v5349 = vpop.f32.mrb[0].mxu0
  %v5350 = vadd.f32 0.0, %v5349
  %v5351 = vpop.f32.mrb[0].mxu0
  %5352 = vmatprep.mubr.f32.mxu0 0.0
  %5353 = vmatmul.mubr.f32.gmra.mrb[0].mxu0 %v5177
  %v5354 = vpop.f32.mrb[0].mxu0
  %v5355 = vadd.f32 0.0, %v5354
  %v5356 = vpop.f32.mrb[0].mxu0
  %5357 = vmatprep.mubr.f32.mxu0 0.0
  %5358 = vmatmul.mubr.f32.gmra.mrb[0].mxu0 %v5180
  %v5359 = vpop.f32.mrb[0].mxu0
  %v5360 = vadd.f32 0.0, %v5359
  %v5361 = vpop.f32.mrb[0].mxu0
  %5362 = vmatprep.mubr.f32.mxu0 0.0
  %5363 = vmatmul.mubr.f32.gmra.mrb[0].mxu0 %v5183
  %v5364 = vpop.f32.mrb[0].mxu0
  %v5365 = vadd.f32 0.0, %v5364
  %v5366 = vpop.f32.mrb[0].mxu0
  %5367 = vmatprep.mubr.f32.mxu0 0.0
  %5368 = vmatmul.mubr.f32.gmra.mrb[0].mxu0 %v5186
  %v5369 = vpop.f32.mrb[0].mxu0
  %v5370 = vadd.f32 0.0, %v5369
  %v5371 = vpop.f32.mrb[0].mxu0
  %5372 = vmatprep.mubr.f32.mxu0 0.0
  %5373 = vmatmul.mubr.f32.gmra.mrb[0].mxu0 %v5189
  %v5374 = vpop.f32.mrb[0].mxu0
  %v5375 = vadd.f32 0.0, %v5374
  %v5376 = vpop.f32.mrb[0].mxu0
  %5377 = vmatprep.mubr.f32.mxu0 0.0
  %5378 = vmatmul.mubr.f32.gmra.mrb[0].mxu0 %v5192
  %v5379 = vpop.f32.mrb[0].mxu0
  %v5380 = vadd.f32 0.0, %v5379
  %v5381 = vpop.f32.mrb[0].mxu0
  %5382 = vmatprep.mubr.f32.mxu0 0.0
  %5383 = vmatmul.mubr.f32.gmra.mrb[0].mxu0 %v5195
  %v5384 = vpop.f32.mrb[0].mxu0
  %v5385 = vadd.f32 0.0, %v5384
  %v5386 = vpop.f32.mrb[0].mxu0
  %5387 = vmatprep.mubr.f32.mxu0 0.0
  %5388 = vmatmul.mubr.f32.gmra.mrb[0].mxu0 %v5198
  %v5389 = vpop.f32.mrb[0].mxu0
  %v5390 = vadd.f32 0.0, %v5389
  %v5391 = vpop.f32.mrb[0].mxu0
  %5392 = vmatprep.mubr.f32.mxu0 0.0
  %5393 = vmatmul.mubr.f32.gmra.mrb[0].mxu0 %v5201
  %v5394 = vpop.f32.mrb[0].mxu0
  %v5395 = vadd.f32 0.0, %v5394
  %v5396 = vpop.f32.mrb[0].mxu0
  %5397 = vmatprep.mubr.f32.mxu0 0.0
  %5398 = vmatmul.mubr.f32.gmra.mrb[0].mxu0 %v5204
  %v5399 = vpop.f32.mrb[0].mxu0
  %v5400 = vadd.f32 0.0, %v5399
  %v5401 = vpop.f32.mrb[0].mxu0
  %5402 = vmatprep.mubr.f32.mxu0 0.0
  %5403 = vmatmul.mubr.f32.gmra.mrb[0].mxu0 %v5207
  %v5404 = vpop.f32.mrb[0].mxu0
  %v5405 = vadd.f32 0.0, %v5404
  %v5406 = vpop.f32.mrb[0].mxu0
  %5407 = vmatprep.mubr.f32.mxu0 0.0
  %5408 = vmatmul.mubr.f32.gmra.mrb[0].mxu0 %v5210
  %v5409 = vpop.f32.mrb[0].mxu0
  %v5410 = vadd.f32 0.0, %v5409
  %v5411 = vpop.f32.mrb[0].mxu0
  %5412 = vmatprep.mubr.f32.mxu0 0.0
  %5413 = vmatmul.mubr.f32.gmra.mrb[0].mxu0 %v5213
  %v5414 = vpop.f32.mrb[0].mxu0
  %v5415 = vadd.f32 0.0, %v5414
  %v5416 = vpop.f32.mrb[0].mxu0
  %5417 = vmatprep.mubr.f32.mxu0 0.0
  %5418 = vmatmul.mubr.f32.gmra.mrb[0].mxu0 %v5216
  %v5419 = vpop.f32.mrb[0].mxu0
  %v5420 = vadd.f32 0.0, %v5419
  %v5421 = vpop.f32.mrb[0].mxu0
  %5422 = vmatprep.mubr.f32.mxu0 0.0
  %5423 = vmatmul.mubr.f32.gmra.mrb[0].mxu0 %v5219
  %v5424 = vpop.f32.mrb[0].mxu0
  %v5425 = vadd.f32 0.0, %v5424
  %v5426 = vpop.f32.mrb[0].mxu0
  %5427 = vmatprep.mubr.f32.mxu0 0.0
  %5428 = vmatmul.mubr.f32.gmra.mrb[0].mxu0 %v5222
  %v5429 = vpop.f32.mrb[0].mxu0
  %v5430 = vadd.f32 0.0, %v5429
  %v5431 = vpop.f32.mrb[0].mxu0
  %5432 = vmatprep.mubr.f32.mxu0 0.0
  %5433 = vmatmul.mubr.f32.gmra.mrb[0].mxu0 %v5225
  %v5434 = vpop.f32.mrb[0].mxu0
  %v5435 = vadd.f32 0.0, %v5434
  %v5436 = vpop.f32.mrb[0].mxu0
  %5437 = vmatprep.mubr.f32.mxu0 0.0
  %5438 = vmatmul.mubr.f32.gmra.mrb[0].mxu0 %v5228
  %v5439 = vpop.f32.mrb[0].mxu0
  %v5440 = vadd.f32 0.0, %v5439
  %v5441 = vpop.f32.mrb[0].mxu0
  %5442 = vmatprep.mubr.f32.mxu0 0.0
  %5443 = vmatmul.mubr.f32.gmra.mrb[0].mxu0 %v5231
  %v5444 = vpop.f32.mrb[0].mxu0
  %v5445 = vadd.f32 0.0, %v5444
  %v5446 = vpop.f32.mrb[0].mxu0
  %5447 = vmatprep.mubr.f32.mxu0 0.0
  %5448 = vmatmul.mubr.f32.gmra.mrb[0].mxu0 %v5234
  %v5449 = vpop.f32.mrb[0].mxu0
  %v5450 = vadd.f32 0.0, %v5449
  %v5451 = vpop.f32.mrb[0].mxu0
  %5452 = vmatprep.mubr.f32.mxu0 0.0
  %5453 = vmatmul.mubr.f32.gmra.mrb[0].mxu0 %v5237
  %v5454 = vpop.f32.mrb[0].mxu0
  %v5455 = vadd.f32 0.0, %v5454
  %v5456 = vpop.f32.mrb[0].mxu0
  %5457 = vmatprep.mubr.f32.mxu0 0.0
  %5458 = vmatmul.mubr.f32.gmra.mrb[0].mxu0 %v5240
  %v5459 = vpop.f32.mrb[0].mxu0
  %v5460 = vadd.f32 0.0, %v5459
  %v5461 = vpop.f32.mrb[0].mxu0
  %5462 = vmatprep.mubr.f32.mxu0 0.0
  %5463 = vmatmul.mubr.f32.gmra.mrb[0].mxu0 %v5243
  %v5464 = vpop.f32.mrb[0].mxu0
  %v5465 = vadd.f32 0.0, %v5464
  %v5466 = vpop.f32.mrb[0].mxu0
  %5467 = vmatprep.mubr.f32.mxu0 0.0
  %5468 = vmatmul.mubr.f32.gmra.mrb[0].mxu0 %v5246
  %v5469 = vpop.f32.mrb[0].mxu0
  %v5470 = vadd.f32 0.0, %v5469
  %v5471 = vpop.f32.mrb[0].mxu0
  %5472 = vmatprep.mubr.f32.mxu0 0.0
  %5473 = vmatmul.mubr.f32.gmra.mrb[0].mxu0 %v5249
  %v5474 = vpop.f32.mrb[0].mxu0
  %v5475 = vadd.f32 0.0, %v5474
  %v5476 = vpop.f32.mrb[0].mxu0
  %5477 = vmatprep.mubr.f32.mxu0 0.0
  %5478 = vmatmul.mubr.f32.gmra.mrb[0].mxu0 %v5252
  %v5479 = vpop.f32.mrb[0].mxu0
  %v5480 = vadd.f32 0.0, %v5479
  %v5481 = vpop.f32.mrb[0].mxu0
  %5482 = vdwg.mxu0
  %v5483 = vmul.f32 %v5325, %v4198
  %v5484 = vmul.f32 %v5330, %v4204
  %v5485 = vmul.f32 %v5335, %v4198
  %v5486 = vmul.f32 %v5340, %v4204
  %v5487 = vmul.f32 %v5345, %v4198
  %v5488 = vmul.f32 %v5350, %v4204
  %v5489 = vmul.f32 %v5355, %v4198
  %v5490 = vmul.f32 %v5360, %v4204
  %v5491 = vmul.f32 %v5365, %v4198
  %v5492 = vmul.f32 %v5370, %v4204
  %v5493 = vmul.f32 %v5375, %v4198
  %v5494 = vmul.f32 %v5380, %v4204
  %v5495 = vmul.f32 %v5385, %v4198
  %v5496 = vmul.f32 %v5390, %v4204
  %v5497 = vmul.f32 %v5395, %v4198
  %v5498 = vmul.f32 %v5400, %v4204
  %v5499 = vmul.f32 %v5405, %v4198
  %v5500 = vmul.f32 %v5410, %v4204
  %v5501 = vmul.f32 %v5415, %v4198
  %v5502 = vmul.f32 %v5420, %v4204
  %v5503 = vmul.f32 %v5425, %v4198
  %v5504 = vmul.f32 %v5430, %v4204
  %v5505 = vmul.f32 %v5435, %v4198
  %v5506 = vmul.f32 %v5440, %v4204
  %v5507 = vmul.f32 %v5445, %v4198
  %v5508 = vmul.f32 %v5450, %v4204
  %v5509 = vmul.f32 %v5455, %v4198
  %v5510 = vmul.f32 %v5460, %v4204
  %v5511 = vmul.f32 %v5465, %v4198
  %v5512 = vmul.f32 %v5470, %v4204
  %v5513 = vmul.f32 %v5475, %v4198
  %v5514 = vmul.f32 %v5480, %v4204
  %v5515 = vadd.f32 %v5483, %v5484
  %v5516 = vrot.slane %v5515, 4
  %v5517 = vadd.f32 %v5515, %v5516
  %v5518 = vrot.slane %v5517, 2
  %v5519 = vadd.f32 %v5517, %v5518
  %v5520 = vrot.slane %v5519, 1
  %v5521 = vadd.f32 %v5519, %v5520
  %v5522 = vadd.f32 %v5485, %v5486
  %v5523 = vrot.slane %v5522, 4
  %v5524 = vadd.f32 %v5522, %v5523
  %v5525 = vrot.slane %v5524, 2
  %v5526 = vadd.f32 %v5524, %v5525
  %v5527 = vrot.slane %v5526, 1
  %v5528 = vadd.f32 %v5526, %v5527
  %v5529 = vadd.f32 %v5487, %v5488
  %v5530 = vrot.slane %v5529, 4
  %v5531 = vadd.f32 %v5529, %v5530
  %v5532 = vrot.slane %v5531, 2
  %v5533 = vadd.f32 %v5531, %v5532
  %v5534 = vrot.slane %v5533, 1
  %v5535 = vadd.f32 %v5533, %v5534
  %v5536 = vadd.f32 %v5489, %v5490
  %v5537 = vrot.slane %v5536, 4
  %v5538 = vadd.f32 %v5536, %v5537
  %v5539 = vrot.slane %v5538, 2
  %v5540 = vadd.f32 %v5538, %v5539
  %v5541 = vrot.slane %v5540, 1
  %v5542 = vadd.f32 %v5540, %v5541
  %v5543 = vadd.f32 %v5491, %v5492
  %v5544 = vrot.slane %v5543, 4
  %v5545 = vadd.f32 %v5543, %v5544
  %v5546 = vrot.slane %v5545, 2
  %v5547 = vadd.f32 %v5545, %v5546
  %v5548 = vrot.slane %v5547, 1
  %v5549 = vadd.f32 %v5547, %v5548
  %v5550 = vadd.f32 %v5493, %v5494
  %v5551 = vrot.slane %v5550, 4
  %v5552 = vadd.f32 %v5550, %v5551
  %v5553 = vrot.slane %v5552, 2
  %v5554 = vadd.f32 %v5552, %v5553
  %v5555 = vrot.slane %v5554, 1
  %v5556 = vadd.f32 %v5554, %v5555
  %v5557 = vadd.f32 %v5495, %v5496
  %v5558 = vrot.slane %v5557, 4
  %v5559 = vadd.f32 %v5557, %v5558
  %v5560 = vrot.slane %v5559, 2
  %v5561 = vadd.f32 %v5559, %v5560
  %v5562 = vrot.slane %v5561, 1
  %v5563 = vadd.f32 %v5561, %v5562
  %v5564 = vadd.f32 %v5497, %v5498
  %v5565 = vrot.slane %v5564, 4
  %v5566 = vadd.f32 %v5564, %v5565
  %v5567 = vrot.slane %v5566, 2
  %v5568 = vadd.f32 %v5566, %v5567
  %v5569 = vrot.slane %v5568, 1
  %v5570 = vadd.f32 %v5568, %v5569
  %v5571 = vadd.f32 %v5499, %v5500
  %v5572 = vrot.slane %v5571, 4
  %v5573 = vadd.f32 %v5571, %v5572
  %v5574 = vrot.slane %v5573, 2
  %v5575 = vadd.f32 %v5573, %v5574
  %v5576 = vrot.slane %v5575, 1
  %v5577 = vadd.f32 %v5575, %v5576
  %v5578 = vadd.f32 %v5501, %v5502
  %v5579 = vrot.slane %v5578, 4
  %v5580 = vadd.f32 %v5578, %v5579
  %v5581 = vrot.slane %v5580, 2
  %v5582 = vadd.f32 %v5580, %v5581
  %v5583 = vrot.slane %v5582, 1
  %v5584 = vadd.f32 %v5582, %v5583
  %v5585 = vadd.f32 %v5503, %v5504
  %v5586 = vrot.slane %v5585, 4
  %v5587 = vadd.f32 %v5585, %v5586
  %v5588 = vrot.slane %v5587, 2
  %v5589 = vadd.f32 %v5587, %v5588
  %v5590 = vrot.slane %v5589, 1
  %v5591 = vadd.f32 %v5589, %v5590
  %v5592 = vadd.f32 %v5505, %v5506
  %v5593 = vrot.slane %v5592, 4
  %v5594 = vadd.f32 %v5592, %v5593
  %v5595 = vrot.slane %v5594, 2
  %v5596 = vadd.f32 %v5594, %v5595
  %v5597 = vrot.slane %v5596, 1
  %v5598 = vadd.f32 %v5596, %v5597
  %v5599 = vadd.f32 %v5507, %v5508
  %v5600 = vrot.slane %v5599, 4
  %v5601 = vadd.f32 %v5599, %v5600
  %v5602 = vrot.slane %v5601, 2
  %v5603 = vadd.f32 %v5601, %v5602
  %v5604 = vrot.slane %v5603, 1
  %v5605 = vadd.f32 %v5603, %v5604
  %v5606 = vadd.f32 %v5509, %v5510
  %v5607 = vrot.slane %v5606, 4
  %v5608 = vadd.f32 %v5606, %v5607
  %v5609 = vrot.slane %v5608, 2
  %v5610 = vadd.f32 %v5608, %v5609
  %v5611 = vrot.slane %v5610, 1
  %v5612 = vadd.f32 %v5610, %v5611
  %v5613 = vadd.f32 %v5511, %v5512
  %v5614 = vrot.slane %v5613, 4
  %v5615 = vadd.f32 %v5613, %v5614
  %v5616 = vrot.slane %v5615, 2
  %v5617 = vadd.f32 %v5615, %v5616
  %v5618 = vrot.slane %v5617, 1
  %v5619 = vadd.f32 %v5617, %v5618
  %v5620 = vadd.f32 %v5513, %v5514
  %v5621 = vrot.slane %v5620, 4
  %v5622 = vadd.f32 %v5620, %v5621
  %v5623 = vrot.slane %v5622, 2
  %v5624 = vadd.f32 %v5622, %v5623
  %v5625 = vrot.slane %v5624, 1
  %v5626 = vadd.f32 %v5624, %v5625
  %v5627 = vrcp.pop %v5022
  %v5628 = vmul.f32 1.0, %v5627
  %v5629 = vrcp.pop %v5031
  %v5630 = vmul.f32 1.0, %v5629
  %v5631 = vrcp.pop %v5040
  %v5632 = vmul.f32 1.0, %v5631
  %v5633 = vrcp.pop %v5049
  %v5634 = vmul.f32 1.0, %v5633
  %v5635 = vrcp.pop %v5058
  %v5636 = vmul.f32 1.0, %v5635
  %v5637 = vrcp.pop %v5067
  %v5638 = vmul.f32 1.0, %v5637
  %v5639 = vrcp.pop %v5076
  %v5640 = vmul.f32 1.0, %v5639
  %v5641 = vrcp.pop %v5085
  %v5642 = vmul.f32 1.0, %v5641
  %v5643 = vrcp.pop %v5094
  %v5644 = vmul.f32 1.0, %v5643
  %v5645 = vrcp.pop %v5103
  %v5646 = vmul.f32 1.0, %v5645
  %v5647 = vrcp.pop %v5112
  %v5648 = vmul.f32 1.0, %v5647
  %v5649 = vrcp.pop %v5121
  %v5650 = vmul.f32 1.0, %v5649
  %v5651 = vrcp.pop %v5130
  %v5652 = vmul.f32 1.0, %v5651
  %v5653 = vrcp.pop %v5139
  %v5654 = vmul.f32 1.0, %v5653
  %v5655 = vrcp.pop %v5148
  %v5656 = vmul.f32 1.0, %v5655
  %v5657 = vrcp.pop %v5157
  %v5658 = vmul.f32 1.0, %v5657
  %v5675 = vsel %vm2054, %v5630, %v5628
  %v5676 = vsel %vm2056, %v5632, %v5675
  %v5677 = vsel %vm2058, %v5634, %v5676
  %v5678 = vsel %vm2060, %v5636, %v5677
  %v5679 = vsel %vm2062, %v5638, %v5678
  %v5680 = vsel %vm2064, %v5640, %v5679
  %v5681 = vsel %vm2066, %v5642, %v5680
  %v5682 = vsel %vm2054, %v5646, %v5644
  %v5683 = vsel %vm2056, %v5648, %v5682
  %v5684 = vsel %vm2058, %v5650, %v5683
  %v5685 = vsel %vm2060, %v5652, %v5684
  %v5686 = vsel %vm2062, %v5654, %v5685
  %v5687 = vsel %vm2064, %v5656, %v5686
  %v5688 = vsel %vm2066, %v5658, %v5687
  %v5689 = vsel %vm4773, %v5681, 0
  %v5691 = vsel %vm4773, %v5688, 0
  %5693 = vmatprep.subr.mxu0 0.0
  %5694 = vmatpush1.msra.mxu0 %v5256
  %5695 = vmatprep.subr.mxu0 0.0
  %5696 = vmatpush1.msra.mxu0 0.0
  %5697 = vmatprep.subr.mxu0 0.0
  %5698 = vmatpush1.msra.mxu0 0.0
  %5699 = vmatprep.subr.mxu0 0.0
  %5700 = vmatpush1.msra.mxu0 0.0
  %5701 = vmatprep.subr.mxu0 0.0
  %5702 = vmatpush1.msra.mxu0 0.0
  %5703 = vmatprep.subr.mxu0 0.0
  %5704 = vmatpush1.msra.mxu0 0.0
  %5705 = vmatprep.subr.mxu0 0.0
  %5706 = vmatpush1.msra.mxu0 0.0
  %5707 = vmatprep.subr.mxu0 0.0
  %5708 = vmatpush1.msra.mxu0 0.0
  %5709 = vmatprep.subr.mxu0 0.0
  %5710 = vmatpush1.msra.mxu0 0.0
  %5711 = vmatprep.subr.mxu0 0.0
  %5712 = vmatpush1.msra.mxu0 0.0
  %5713 = vmatprep.subr.mxu0 0.0
  %5714 = vmatpush1.msra.mxu0 0.0
  %5715 = vmatprep.subr.mxu0 0.0
  %5716 = vmatpush1.msra.mxu0 0.0
  %5717 = vmatprep.subr.mxu0 0.0
  %5718 = vmatpush1.msra.mxu0 0.0
  %5719 = vmatprep.subr.mxu0 0.0
  %5720 = vmatpush1.msra.mxu0 0.0
  %5721 = vmatprep.subr.mxu0 0.0
  %5722 = vmatpush1.msra.mxu0 0.0
  %5723 = vmatprep.subr.mxu0 0.0
  %5724 = vmatpush1.msra.mxu0 0.0
  %5725 = vmatprep.subr.mxu0 0.0
  %5726 = vmatpush1.msra.mxu0 0.0
  %5727 = vmatprep.subr.mxu0 0.0
  %5728 = vmatpush1.msra.mxu0 0.0
  %5729 = vmatprep.subr.mxu0 0.0
  %5730 = vmatpush1.msra.mxu0 0.0
  %5731 = vmatprep.subr.mxu0 0.0
  %5732 = vmatpush1.msra.mxu0 0.0
  %5733 = vmatprep.subr.mxu0 0.0
  %5734 = vmatpush1.msra.mxu0 0.0
  %5735 = vmatprep.subr.mxu0 0.0
  %5736 = vmatpush1.msra.mxu0 0.0
  %5737 = vmatprep.subr.mxu0 0.0
  %5738 = vmatpush1.msra.mxu0 0.0
  %5739 = vmatprep.subr.mxu0 0.0
  %5740 = vmatpush1.msra.mxu0 0.0
  %5741 = vmatprep.subr.mxu0 0.0
  %5742 = vmatpush1.msra.mxu0 0.0
  %5743 = vmatprep.subr.mxu0 0.0
  %5744 = vmatpush1.msra.mxu0 0.0
  %5745 = vmatprep.subr.mxu0 0.0
  %5746 = vmatpush1.msra.mxu0 0.0
  %5747 = vmatprep.subr.mxu0 0.0
  %5748 = vmatpush1.msra.mxu0 0.0
  %5749 = vmatprep.subr.mxu0 0.0
  %5750 = vmatpush1.msra.mxu0 0.0
  %5751 = vmatprep.subr.mxu0 0.0
  %5752 = vmatpush1.msra.mxu0 0.0
  %5753 = vmatprep.subr.mxu0 0.0
  %5754 = vmatpush1.msra.mxu0 0.0
  %5755 = vmatprep.subr.mxu0 0.0
  %5756 = vmatpush1.msra.mxu0 0.0
  %5757 = vmatprep.mubr.f32.mxu0 0.0
  %5758 = vmatmul.mubr.f32.gmra.mrb[0].mxu0 %v5689
  %v5759 = vpop.f32.mrb[0].mxu0
  %v5760 = vadd.f32 0.0, %v5759
  %v5761 = vpop.f32.mrb[0].mxu0
  %5762 = vmatprep.mubr.f32.mxu0 0.0
  %5763 = vmatmul.mubr.f32.gmra.mrb[0].mxu0 %v5691
  %v5764 = vpop.f32.mrb[0].mxu0
  %v5765 = vadd.f32 0.0, %v5764
  %v5766 = vpop.f32.mrb[0].mxu0
  %5767 = vdwg.mxu0
  %v5770 = vrot.slane %v5760, 1
  %v5771 = vrot.slane %v5760, 2
  %v5772 = vrot.slane %v5760, 3
  %v5773 = vrot.slane %v5760, 4
  %v5774 = vrot.slane %v5760, 5
  %v5775 = vrot.slane %v5760, 6
  %v5776 = vrot.slane %v5760, 7
  %v5777 = vrot.slane %v5765, 1
  %v5778 = vrot.slane %v5765, 2
  %v5779 = vrot.slane %v5765, 3
  %v5780 = vrot.slane %v5765, 4
  %v5781 = vrot.slane %v5765, 5
  %v5782 = vrot.slane %v5765, 6
  %v5783 = vrot.slane %v5765, 7
  %v5800 = vmul.f32 %v5521, %v5760
  %v5801 = vmul.f32 %v5528, %v5770
  %v5802 = vmul.f32 %v5535, %v5771
  %v5803 = vmul.f32 %v5542, %v5772
  %v5804 = vmul.f32 %v5549, %v5773
  %v5805 = vmul.f32 %v5556, %v5774
  %v5806 = vmul.f32 %v5563, %v5775
  %v5807 = vmul.f32 %v5570, %v5776
  %v5808 = vmul.f32 %v5577, %v5765
  %v5809 = vmul.f32 %v5584, %v5777
  %v5810 = vmul.f32 %v5591, %v5778
  %v5811 = vmul.f32 %v5598, %v5779
  %v5812 = vmul.f32 %v5605, %v5780
  %v5813 = vmul.f32 %v5612, %v5781
  %v5814 = vmul.f32 %v5619, %v5782
  %v5815 = vmul.f32 %v5626, %v5783
  %v5817 = vlaneseq
  %v5818 = vshrl.u32 %v5817, 7
  %v5819 = vsub.s32 0, %v5818
  %v5820 = vrot.slane %v4084, %v5819
  %v5822 = vadd.f32 %v5800, %v5820
  %v5823 = vadd.f32 %v5801, %v5820
  %v5824 = vadd.f32 %v5802, %v5820
  %v5825 = vadd.f32 %v5803, %v5820
  %v5826 = vadd.f32 %v5804, %v5820
  %v5827 = vadd.f32 %v5805, %v5820
  %v5828 = vadd.f32 %v5806, %v5820
  %v5829 = vadd.f32 %v5807, %v5820
  %v5830 = vadd.f32 %v5808, %v5820
  %v5831 = vadd.f32 %v5809, %v5820
  %v5832 = vadd.f32 %v5810, %v5820
  %v5833 = vadd.f32 %v5811, %v5820
  %v5834 = vadd.f32 %v5812, %v5820
  %v5835 = vadd.f32 %v5813, %v5820
  %v5836 = vadd.f32 %v5814, %v5820
  %v5837 = vadd.f32 %v5815, %v5820
  %v5838 = vmax.f32 %v5822, 0.0
  %v5839 = vmax.f32 %v5823, 0.0
  %v5840 = vmax.f32 %v5824, 0.0
  %v5841 = vmax.f32 %v5825, 0.0
  %v5842 = vmax.f32 %v5826, 0.0
  %v5843 = vmax.f32 %v5827, 0.0
  %v5844 = vmax.f32 %v5828, 0.0
  %v5845 = vmax.f32 %v5829, 0.0
  %v5846 = vmax.f32 %v5830, 0.0
  %v5847 = vmax.f32 %v5831, 0.0
  %v5848 = vmax.f32 %v5832, 0.0
  %v5849 = vmax.f32 %v5833, 0.0
  %v5850 = vmax.f32 %v5834, 0.0
  %v5851 = vmax.f32 %v5835, 0.0
  %v5852 = vmax.f32 %v5836, 0.0
  %v5853 = vmax.f32 %v5837, 0.0
  %v5854 = vld [vmem:[%s14] sm:$0xff]
  %v5855 = vld [vmem:[%s14 + $0x8] sm:$0xff]
  %v5856 = vld [vmem:[%s14 + $0x10] sm:$0xff]
  %v5857 = vld [vmem:[%s14 + $0x18] sm:$0xff]
  %v5858 = vld [vmem:[%s14 + $0x20] sm:$0xff]
  %v5859 = vld [vmem:[%s14 + $0x28] sm:$0xff]
  %v5860 = vld [vmem:[%s14 + $0x30] sm:$0xff]
  %v5861 = vld [vmem:[%s14 + $0x38] sm:$0xff]
  %v5862 = vld [vmem:[%s14 + $0x40] sm:$0xff]
  %v5863 = vld [vmem:[%s14 + $0x48] sm:$0xff]
  %v5864 = vld [vmem:[%s14 + $0x50] sm:$0xff]
  %v5865 = vld [vmem:[%s14 + $0x58] sm:$0xff]
  %v5866 = vld [vmem:[%s14 + $0x60] sm:$0xff]
  %v5867 = vld [vmem:[%s14 + $0x68] sm:$0xff]
  %v5868 = vld [vmem:[%s14 + $0x70] sm:$0xff]
  %v5869 = vld [vmem:[%s14 + $0x78] sm:$0xff]
  %v5870 = vld [vmem:[#allocation2] sm:$0x1]
  %v5872 = vlaneseq
  %v5873 = vshrl.u32 %v5872, 7
  %v5874 = vsub.s32 0, %v5873
  %v5875 = vrot.slane %v5870, %v5874
  %v5893 = vrot.slane %v5839, 7
  %v5894 = vsel %vm2054, %v5893, %v5838
  %v5895 = vrot.slane %v5840, 6
  %v5896 = vsel %vm2056, %v5895, %v5894
  %v5897 = vrot.slane %v5841, 5
  %v5898 = vsel %vm2058, %v5897, %v5896
  %v5899 = vrot.slane %v5842, 4
  %v5900 = vsel %vm2060, %v5899, %v5898
  %v5901 = vrot.slane %v5843, 3
  %v5902 = vsel %vm2062, %v5901, %v5900
  %v5903 = vrot.slane %v5844, 2
  %v5904 = vsel %vm2064, %v5903, %v5902
  %v5905 = vrot.slane %v5845, 1
  %v5906 = vsel %vm2066, %v5905, %v5904
  %v5907 = vrot.slane %v5847, 7
  %v5908 = vsel %vm2054, %v5907, %v5846
  %v5909 = vrot.slane %v5848, 6
  %v5910 = vsel %vm2056, %v5909, %v5908
  %v5911 = vrot.slane %v5849, 5
  %v5912 = vsel %vm2058, %v5911, %v5910
  %v5913 = vrot.slane %v5850, 4
  %v5914 = vsel %vm2060, %v5913, %v5912
  %v5915 = vrot.slane %v5851, 3
  %v5916 = vsel %vm2062, %v5915, %v5914
  %v5917 = vrot.slane %v5852, 2
  %v5918 = vsel %vm2064, %v5917, %v5916
  %v5919 = vrot.slane %v5853, 1
  %v5920 = vsel %vm2066, %v5919, %v5918
  %5923 = vmatprep.subr.mxu0 0.0
  %5924 = vmatpush1.msra.mxu0 %v5854
  %5925 = vmatprep.subr.mxu0 0.0
  %5926 = vmatpush1.msra.mxu0 %v5855
  %5927 = vmatprep.subr.mxu0 0.0
  %5928 = vmatpush1.msra.mxu0 %v5856
  %5929 = vmatprep.subr.mxu0 0.0
  %5930 = vmatpush1.msra.mxu0 %v5857
  %5931 = vmatprep.subr.mxu0 0.0
  %5932 = vmatpush1.msra.mxu0 %v5858
  %5933 = vmatprep.subr.mxu0 0.0
  %5934 = vmatpush1.msra.mxu0 %v5859
  %5935 = vmatprep.subr.mxu0 0.0
  %5936 = vmatpush1.msra.mxu0 %v5860
  %5937 = vmatprep.subr.mxu0 0.0
  %5938 = vmatpush1.msra.mxu0 %v5861
  %5939 = vmatprep.subr.mxu0 0.0
  %5940 = vmatpush1.msra.mxu0 %v5862
  %5941 = vmatprep.subr.mxu0 0.0
  %5942 = vmatpush1.msra.mxu0 %v5863
  %5943 = vmatprep.subr.mxu0 0.0
  %5944 = vmatpush1.msra.mxu0 %v5864
  %5945 = vmatprep.subr.mxu0 0.0
  %5946 = vmatpush1.msra.mxu0 %v5865
  %5947 = vmatprep.subr.mxu0 0.0
  %5948 = vmatpush1.msra.mxu0 %v5866
  %5949 = vmatprep.subr.mxu0 0.0
  %5950 = vmatpush1.msra.mxu0 %v5867
  %5951 = vmatprep.subr.mxu0 0.0
  %5952 = vmatpush1.msra.mxu0 %v5868
  %5953 = vmatprep.subr.mxu0 0.0
  %5954 = vmatpush1.msra.mxu0 %v5869
  %5955 = vmatprep.subr.mxu0 0.0
  %5956 = vmatpush1.msra.mxu0 0.0
  %5957 = vmatprep.subr.mxu0 0.0
  %5958 = vmatpush1.msra.mxu0 0.0
  %5959 = vmatprep.subr.mxu0 0.0
  %5960 = vmatpush1.msra.mxu0 0.0
  %5961 = vmatprep.subr.mxu0 0.0
  %5962 = vmatpush1.msra.mxu0 0.0
  %5963 = vmatprep.subr.mxu0 0.0
  %5964 = vmatpush1.msra.mxu0 0.0
  %5965 = vmatprep.subr.mxu0 0.0
  %5966 = vmatpush1.msra.mxu0 0.0
  %5967 = vmatprep.subr.mxu0 0.0
  %5968 = vmatpush1.msra.mxu0 0.0
  %5969 = vmatprep.subr.mxu0 0.0
  %5970 = vmatpush1.msra.mxu0 0.0
  %5971 = vmatprep.subr.mxu0 0.0
  %5972 = vmatpush1.msra.mxu0 0.0
  %5973 = vmatprep.subr.mxu0 0.0
  %5974 = vmatpush1.msra.mxu0 0.0
  %5975 = vmatprep.subr.mxu0 0.0
  %5976 = vmatpush1.msra.mxu0 0.0
  %5977 = vmatprep.subr.mxu0 0.0
  %5978 = vmatpush1.msra.mxu0 0.0
  %5979 = vmatprep.subr.mxu0 0.0
  %5980 = vmatpush1.msra.mxu0 0.0
  %5981 = vmatprep.subr.mxu0 0.0
  %5982 = vmatpush1.msra.mxu0 0.0
  %5983 = vmatprep.subr.mxu0 0.0
  %5984 = vmatpush1.msra.mxu0 0.0
  %5985 = vmatprep.subr.mxu0 0.0
  %5986 = vmatpush1.msra.mxu0 0.0
  %5987 = vmatprep.mubr.f32.mxu0 0.0
  %5988 = vmatmul.mubr.f32.gmra.mrb[0].mxu0 %v5906
  %v5989 = vpop.f32.mrb[0].mxu0
  %v5990 = vadd.f32 %v5875, %v5989
  %v5991 = vpop.f32.mrb[0].mxu0
  %5992 = vmatprep.mubr.f32.mxu0 0.0
  %5993 = vmatmul.mubr.f32.gmra.mrb[0].mxu0 %v5920
  %v5994 = vpop.f32.mrb[0].mxu0
  %v5995 = vadd.f32 %v5875, %v5994
  %v5996 = vpop.f32.mrb[0].mxu0
  %5997 = vdwg.mxu0
  %5998 = vst.msk [vmem:[%s16] sm:$0xff] %vm4773, %v5990
  %5999 = vst.msk [vmem:[%s16 + $0x8] sm:$0xff] %vm4773, %v5995
  // Predicated region
  $region66: #{_gat_forward_impl.1} parent=0 // pred_check
    _
  $region67: #{_gat_forward_impl.1} parent=0 // pred_check_branch
    %6001 = sbr.rel (0) target = $region69
  $region68: #{_gat_forward_impl.1} parent=0 // pred_region
    _
  $region69: #{_gat_forward_impl.1} parent=0 // pred_fallthru
    _
  // Predicated region
  $region70: #{_gat_forward_impl.1} parent=0 // pred_check
    _
  $region71: #{_gat_forward_impl.1} parent=0 // pred_check_branch
    %6003 = sbr.rel (0) target = $region73
  $region72: #{_gat_forward_impl.1} parent=0 // pred_region
    _
  $region73: #{_gat_forward_impl.1} parent=0 // pred_fallthru
    _

</llo_original>
